<compile_context>
chip_gen: v5e
topology: v5e:2x2
jax: 0.10.0
libtpu: 0.0.40
codegen_flags: <defaults>
</compile_context>

<pallas_src>
import jax
import jax.numpy as jnp
from jax import lax
from jax.experimental import pallas as pl
from jax.experimental.pallas import tpu as pltpu

KS = 7    # depthwise kernel size
PAD = 3   # depthwise padding


def _sepconv_kernel(sb_ref, xp_ref, xc_ref, xn_ref, w1_ref, dw_ref, w2_ref,
                    o_ref, pad_ref):
    """One (batch, row-band) tile per grid step.

    sb_ref : (2,)                    SMEM  StarReLU (scale, bias)
    xp_ref : (1, TH*W, C)            VMEM  previous row band (clamped at t==0)
    xc_ref : (1, TH*W, C)            VMEM  current row band
    xn_ref : (1, TH*W, C)            VMEM  next row band (clamped at t==NB-1)
    w1_ref : (C, Cmid)               VMEM  pwconv1 weight, transposed, bf16
    dw_ref : (KS*KS, Cmid)           VMEM  depthwise weight, f32
    w2_ref : (Cmid, C)               VMEM  pwconv2 weight, transposed, bf16
    o_ref  : (1, TH*W, C)            VMEM  output row band
    pad_ref: (TH+2*PAD, W+2*PAD, Cmid) VMEM scratch (width-padded activations)
    """
    THp, Wp, Cmid = pad_ref.shape
    TH = THp - 2 * PAD
    W = Wp - 2 * PAD

    t = pl.program_id(1)
    nb = pl.num_programs(1)

    # ---- assemble the x band with a PAD-row halo on each side --------------
    x_top = xp_ref[0, pl.ds((TH - PAD) * W, PAD * W), :]   # last PAD rows of prev band
    x_mid = xc_ref[0]                                      # TH rows of current band
    x_bot = xn_ref[0, pl.ds(0, PAD * W), :]                # first PAD rows of next band
    x_band = jnp.concatenate([x_top, x_mid, x_bot], axis=0)    # (THp*W, C) bf16

    # ---- pwconv1 (1x1) == matmul over channels: bf16 MXU, f32 accumulate ----
    h = jnp.dot(x_band, w1_ref[...], preferred_element_type=jnp.float32)

    # ---- StarReLU: s * relu(h)^2 + b ----------------------------------------
    h = sb_ref[0] * jnp.square(jnp.maximum(h, 0.0)) + sb_ref[1]

    # ---- stage into the width-padded scratch --------------------------------
    # Only the thin PAD-wide column strips are zeroed; the interior is fully
    # rewritten each step, so nothing persists across grid iterations (safe
    # with "parallel" grid axes / per-core scratch).
    zcol = jnp.zeros((THp, PAD, Cmid), jnp.float32)
    pad_ref[:, pl.ds(0, PAD), :] = zcol
    pad_ref[:, pl.ds(PAD + W, PAD), :] = zcol
    pad_ref[:, pl.ds(PAD, W), :] = h.reshape(THp, W, Cmid)

    # Halo rows that fall outside the image must be zero (the values written
    # above came from the clamped neighbour band).
    zrow = jnp.zeros((PAD, Wp, Cmid), jnp.float32)

    @pl.when(t == 0)
    def _():
        pad_ref[pl.ds(0, PAD), :, :] = zrow

    @pl.when(t == nb - 1)
    def _():
        pad_ref[pl.ds(TH + PAD, PAD), :, :] = zrow

    # ---- depthwise 7x7, fully unrolled --------------------------------------
    # Each padded row slab is loaded from VMEM once; the 7 width shifts are
    # in-register slices of that slab (49 VMEM re-reads -> 7 reads).
    acc = jnp.zeros((TH, W, Cmid), jnp.float32)
    for ki in range(KS):
        slab = pad_ref[pl.ds(ki, TH), :, :]                 # (TH, Wp, Cmid)
        for kj in range(KS):
            window = slab[:, kj:kj + W, :]                  # (TH, W, Cmid)
            acc = acc + window * dw_ref[ki * KS + kj, :]

    # ---- pwconv2 (1x1) == matmul over channels ------------------------------
    out = jnp.dot(acc.reshape(TH * W, Cmid).astype(jnp.bfloat16), w2_ref[...],
                  preferred_element_type=jnp.float32)       # (TH*W, C)
    o_ref[0] = out.astype(o_ref.dtype)


def _pick_band_rows(H, W, target_rows=8):
    """Largest TH <= target_rows dividing H with TH >= PAD and TH*W sublane
    aligned (so band slices stay cheap); falls back to the whole image."""
    for th in range(min(H, target_rows), PAD - 1, -1):
        if H % th == 0 and (th * W) % 8 == 0:
            return th
    return H


def sepconv_pallas(x_nchw, w_pw1, w_dw, w_pw2, scale, bias, *, band_rows=None):
    """x_nchw: (B, C, H, W); weights in PyTorch OIHW layout (bias-free convs)."""
    B, C, H, W = x_nchw.shape
    Cmid = w_pw1.shape[0]
    out_dtype = x_nchw.dtype

    TH = _pick_band_rows(H, W) if band_rows is None else band_rows
    assert H % TH == 0 and TH >= PAD, (H, TH)   # H < PAD unsupported
    NB = H // TH

    # Re-layout for the kernel: NHWC with spatial rows flattened; matmul
    # operands (x, w1, w2) in bf16 (halves their HBM->VMEM traffic too).
    x_rows = (jnp.transpose(x_nchw, (0, 2, 3, 1))
              .reshape(B, H * W, C).astype(jnp.bfloat16))
    w1 = jnp.transpose(w_pw1[:, :, 0, 0], (1, 0)).astype(jnp.bfloat16)        # (C, Cmid)
    dw = (jnp.transpose(w_dw[:, 0, :, :], (1, 2, 0))
          .reshape(KS * KS, Cmid).astype(jnp.float32))                        # (49, Cmid)
    w2 = jnp.transpose(w_pw2[:, :, 0, 0], (1, 0)).astype(jnp.bfloat16)        # (Cmid, C)
    sb = jnp.array([scale, bias], dtype=jnp.float32)

    band_spec = lambda imap: pl.BlockSpec((1, TH * W, C), imap)

    out_rows = pl.pallas_call(
        _sepconv_kernel,
        out_shape=jax.ShapeDtypeStruct((B, H * W, C), out_dtype),
        grid_spec=pltpu.PrefetchScalarGridSpec(
            num_scalar_prefetch=0,
            grid=(B, NB),
            in_specs=[
                pl.BlockSpec(memory_space=pltpu.MemorySpace.SMEM),            # scale/bias
                band_spec(lambda b, t: (b, jnp.maximum(t - 1, 0), 0)),        # prev band
                band_spec(lambda b, t: (b, t, 0)),                            # current band
                band_spec(lambda b, t: (b, jnp.minimum(t + 1, NB - 1), 0)),   # next band
                pl.BlockSpec((C, Cmid), lambda b, t: (0, 0)),                 # w1
                pl.BlockSpec((KS * KS, Cmid), lambda b, t: (0, 0)),           # dw
                pl.BlockSpec((Cmid, C), lambda b, t: (0, 0)),                 # w2
            ],
            out_specs=band_spec(lambda b, t: (b, t, 0)),
            scratch_shapes=[
                pltpu.VMEM((TH + 2 * PAD, W + 2 * PAD, Cmid), jnp.float32),
            ],
        ),
        compiler_params=pltpu.CompilerParams(
            # Both axes independent -> shard across v7x's two TensorCores.
            dimension_semantics=("parallel", "parallel"),
            vmem_limit_bytes=32 * 1024 * 1024,
        ),
    )(sb, x_rows, x_rows, x_rows, w1, dw, w2)

    out_nhwc = out_rows.reshape(B, H, W, C)
    return jnp.transpose(out_nhwc, (0, 3, 1, 2))            # back to NCHW


def sepconv_reference(x_nchw, w_pw1, w_dw, w_pw2, scale, bias):
    """Pure-JAX (f32) reference mirroring the PyTorch module (NCHW)."""
    Cmid = w_pw1.shape[0]
    dn = ("NCHW", "OIHW", "NCHW")
    h = lax.conv_general_dilated(x_nchw, w_pw1, (1, 1), "VALID",
                                 dimension_numbers=dn)
    h = scale * jnp.maximum(h, 0.0) ** 2 + bias
    h = lax.conv_general_dilated(h, w_dw, (1, 1), [(PAD, PAD), (PAD, PAD)],
                                 dimension_numbers=dn,
                                 feature_group_count=Cmid)
    out = lax.conv_general_dilated(h, w_pw2, (1, 1), "VALID",
                                   dimension_numbers=dn)
    return out


if __name__ == "__main__":
    B, C, H, W = 2, 4, 16, 16
    expansion_ratio = 2
    Cmid = int(expansion_ratio * C)

    key = jax.random.PRNGKey(0)
    k_x, k_w1, k_dw, k_w2 = jax.random.split(key, 4)

    x = jax.random.normal(k_x, (B, C, H, W), dtype=jnp.float32)
    # PyTorch Conv2d weight layouts (OIHW); bias=False everywhere.
    w_pw1 = 0.1 * jax.random.normal(k_w1, (Cmid, C, 1, 1), dtype=jnp.float32)
    w_dw = 0.1 * jax.random.normal(k_dw, (Cmid, 1, KS, KS), dtype=jnp.float32)
    w_pw2 = 0.1 * jax.random.normal(k_w2, (C, Cmid, 1, 1), dtype=jnp.float32)
    star_scale, star_bias = 1.0, 0.0   # StarReLU init values

    out = sepconv_pallas(x, w_pw1, w_dw, w_pw2, star_scale, star_bias)
    out = jax.block_until_ready(out)

    ref = sepconv_reference(x, w_pw1, w_dw, w_pw2, star_scale, star_bias)
    ref = jax.block_until_ready(ref)

    assert out.shape == (B, C, H, W), out.shape
    max_err = float(jnp.max(jnp.abs(out - ref)))
    # Tolerance reflects bf16 MXU inputs (f32 accumulation + f32 depthwise).
    assert jnp.allclose(out, ref, atol=2e-2, rtol=2e-2), max_err

    print("KERNEL_OK")
</pallas_src>

<mosaic_0001>
module attributes {stable_mosaic.version = 11 : i64} {
  func.func @_sepconv_kernel(%arg0: i32, %arg1: i32, %arg2: memref<2xf32, #tpu.memory_space<smem>>, %arg3: memref<1x128x4xbf16, #tpu.memory_space<vmem>>, %arg4: memref<1x128x4xbf16, #tpu.memory_space<vmem>>, %arg5: memref<1x128x4xbf16, #tpu.memory_space<vmem>>, %arg6: memref<4x8xbf16, #tpu.memory_space<vmem>>, %arg7: memref<49x8xf32, #tpu.memory_space<vmem>>, %arg8: memref<8x4xbf16, #tpu.memory_space<vmem>>, %arg9: memref<1x128x4xf32, #tpu.memory_space<vmem>>, %arg10: memref<14x22x8xf32, #tpu.memory_space<vmem>>) attributes {dimension_semantics = [#tpu.dimension_semantics<parallel>, #tpu.dimension_semantics<parallel>], iteration_bounds = array<i64: 2, 2>, scalar_prefetch = 0 : i64, scratch_operands = 1 : i64, tpu.core_type = #tpu.core_type<tc>, window_params = [{transform_indices = @transform_0, window_bounds = array<i64: 2>}, {transform_indices = @transform_1, window_bounds = array<i64: 1, 128, 4>}, {transform_indices = @transform_2, window_bounds = array<i64: 1, 128, 4>}, {transform_indices = @transform_3, window_bounds = array<i64: 1, 128, 4>}, {pipeline_mode = #tpu.pipeline_mode<synchronous>, transform_indices = @transform_4, window_bounds = array<i64: 4, 8>}, {pipeline_mode = #tpu.pipeline_mode<synchronous>, transform_indices = @transform_5, window_bounds = array<i64: 49, 8>}, {pipeline_mode = #tpu.pipeline_mode<synchronous>, transform_indices = @transform_6, window_bounds = array<i64: 8, 4>}, {transform_indices = @transform_7, window_bounds = array<i64: 1, 128, 4>}]} {
    %c0 = arith.constant 0 : index
    %c80 = arith.constant 80 : index
    %c0_0 = arith.constant 0 : index
    %0 = vector.load %arg3[%c0, %c80, %c0_0] : memref<1x128x4xbf16, #tpu.memory_space<vmem>>, vector<1x48x4xbf16>
    %1 = vector.shape_cast %0 : vector<1x48x4xbf16> to vector<48x4xbf16>
    %c0_1 = arith.constant 0 : index
    %c0_2 = arith.constant 0 : index
    %c0_3 = arith.constant 0 : index
    %2 = vector.load %arg4[%c0_1, %c0_2, %c0_3] : memref<1x128x4xbf16, #tpu.memory_space<vmem>>, vector<1x128x4xbf16>
    %3 = vector.shape_cast %2 : vector<1x128x4xbf16> to vector<128x4xbf16>
    %c0_4 = arith.constant 0 : index
    %c0_5 = arith.constant 0 : index
    %c0_6 = arith.constant 0 : index
    %4 = vector.load %arg5[%c0_4, %c0_5, %c0_6] : memref<1x128x4xbf16, #tpu.memory_space<vmem>>, vector<1x48x4xbf16>
    %5 = vector.shape_cast %4 : vector<1x48x4xbf16> to vector<48x4xbf16>
    %6 = tpu.concatenate %1, %3, %5 in 0 : vector<48x4xbf16>, vector<128x4xbf16>, vector<48x4xbf16> -> vector<224x4xbf16>
    %c0_7 = arith.constant 0 : index
    %c0_8 = arith.constant 0 : index
    %7 = vector.load %arg6[%c0_7, %c0_8] : memref<4x8xbf16, #tpu.memory_space<vmem>>, vector<4x8xbf16>
    %cst = arith.constant dense<0.000000e+00> : vector<224x8xf32>
    %8 = tpu.matmul %6, %7, %cst {dimension_numbers = #tpu.dot_dimension_numbers<[1], [0], [0], [1], [0, 0, 1, 1], [], []>} : vector<224x4xbf16>, vector<4x8xbf16>, vector<224x8xf32> -> vector<224x8xf32>
    %c0_9 = arith.constant 0 : index
    %9 = memref.load %arg2[%c0_9] : memref<2xf32, #tpu.memory_space<smem>>
    %cst_10 = arith.constant 0.000000e+00 : f32
    %10 = vector.broadcast %cst_10 : f32 to vector<224x8xf32>
    %11 = arith.maximumf %8, %10 : vector<224x8xf32>
    %12 = arith.mulf %11, %11 : vector<224x8xf32>
    %13 = vector.broadcast %9 : f32 to vector<224x8xf32>
    %14 = arith.mulf %13, %12 : vector<224x8xf32>
    %c1 = arith.constant 1 : index
    %15 = memref.load %arg2[%c1] : memref<2xf32, #tpu.memory_space<smem>>
    %16 = vector.broadcast %15 : f32 to vector<224x8xf32>
    %17 = arith.addf %14, %16 : vector<224x8xf32>
    %cst_11 = arith.constant 0.000000e+00 : f32
    %18 = vector.broadcast %cst_11 : f32 to vector<14x3x8xf32>
    %c0_12 = arith.constant 0 : index
    %c0_13 = arith.constant 0 : index
    %c0_14 = arith.constant 0 : index
    %19 = vector.load %arg10[%c0_12, %c0_13, %c0_14] : memref<14x22x8xf32, #tpu.memory_space<vmem>>, vector<14x3x8xf32>
    tpu.vector_store %arg10[%c0_12, %c0_13, %c0_14], %18 {strides = array<i32>} : memref<14x22x8xf32, #tpu.memory_space<vmem>>, vector<14x3x8xf32>,
    %c0_15 = arith.constant 0 : index
    %c19 = arith.constant 19 : index
    %c0_16 = arith.constant 0 : index
    %20 = vector.load %arg10[%c0_15, %c19, %c0_16] : memref<14x22x8xf32, #tpu.memory_space<vmem>>, vector<14x3x8xf32>
    tpu.vector_store %arg10[%c0_15, %c19, %c0_16], %18 {strides = array<i32>} : memref<14x22x8xf32, #tpu.memory_space<vmem>>, vector<14x3x8xf32>,
    %21 = vector.shape_cast %17 : vector<224x8xf32> to vector<14x16x8xf32>
    %c0_17 = arith.constant 0 : index
    %c3 = arith.constant 3 : index
    %c0_18 = arith.constant 0 : index
    %22 = vector.load %arg10[%c0_17, %c3, %c0_18] : memref<14x22x8xf32, #tpu.memory_space<vmem>>, vector<14x16x8xf32>
    tpu.vector_store %arg10[%c0_17, %c3, %c0_18], %21 {strides = array<i32>} : memref<14x22x8xf32, #tpu.memory_space<vmem>>, vector<14x16x8xf32>,
    %cst_19 = arith.constant 0.000000e+00 : f32
    %23 = vector.broadcast %cst_19 : f32 to vector<3x22x8xf32>
    %c0_i32 = arith.constant 0 : i32
    %24 = arith.cmpi eq, %arg1, %c0_i32 : i32
    %25 = arith.extui %24 : i1 to i32
    %c0_i32_20 = arith.constant 0 : i32
    %26 = arith.cmpi ne, %25, %c0_i32_20 : i32
    scf.if %26 {
      %c0_103 = arith.constant 0 : index
      %c0_104 = arith.constant 0 : index
      %c0_105 = arith.constant 0 : index
      %388 = vector.load %arg10[%c0_103, %c0_104, %c0_105] : memref<14x22x8xf32, #tpu.memory_space<vmem>>, vector<3x22x8xf32>
      tpu.vector_store %arg10[%c0_103, %c0_104, %c0_105], %23 {strides = array<i32>} : memref<14x22x8xf32, #tpu.memory_space<vmem>>, vector<3x22x8xf32>,
    } else {
    }
    %c1_i32 = arith.constant 1 : i32
    %27 = arith.cmpi eq, %arg1, %c1_i32 : i32
    %28 = arith.extui %27 : i1 to i32
    %c0_i32_21 = arith.constant 0 : i32
    %29 = arith.cmpi ne, %28, %c0_i32_21 : i32
    scf.if %29 {
      %c11_103 = arith.constant 11 : index
      %c0_104 = arith.constant 0 : index
      %c0_105 = arith.constant 0 : index
      %388 = vector.load %arg10[%c11_103, %c0_104, %c0_105] : memref<14x22x8xf32, #tpu.memory_space<vmem>>, vector<3x22x8xf32>
      tpu.vector_store %arg10[%c11_103, %c0_104, %c0_105], %23 {strides = array<i32>} : memref<14x22x8xf32, #tpu.memory_space<vmem>>, vector<3x22x8xf32>,
    } else {
    }
    %cst_22 = arith.constant 0.000000e+00 : f32
    %30 = vector.broadcast %cst_22 : f32 to vector<8x16x8xf32>
    %c0_23 = arith.constant 0 : index
    %c0_24 = arith.constant 0 : index
    %c0_25 = arith.constant 0 : index
    %31 = vector.load %arg10[%c0_23, %c0_24, %c0_25] : memref<14x22x8xf32, #tpu.memory_space<vmem>>, vector<8x22x8xf32>
    %32 = vector.extract_strided_slice %31 {offsets = [0, 0, 0], sizes = [8, 16, 8], strides = [1, 1, 1]} : vector<8x22x8xf32> to vector<8x16x8xf32>
    %c0_26 = arith.constant 0 : index
    %c0_27 = arith.constant 0 : index
    %33 = vector.load %arg7[%c0_26, %c0_27] : memref<49x8xf32, #tpu.memory_space<vmem>>, vector<1x8xf32>
    %34 = vector.shape_cast %33 : vector<1x8xf32> to vector<8xf32>
    %35 = vector.shape_cast %34 : vector<8xf32> to vector<1x1x8xf32>
    %36 = vector.broadcast %35 : vector<1x1x8xf32> to vector<8x16x8xf32>
    %37 = arith.mulf %32, %36 : vector<8x16x8xf32>
    %38 = arith.addf %30, %37 : vector<8x16x8xf32>
    %39 = vector.extract_strided_slice %31 {offsets = [0, 1, 0], sizes = [8, 16, 8], strides = [1, 1, 1]} : vector<8x22x8xf32> to vector<8x16x8xf32>
    %c1_28 = arith.constant 1 : index
    %c0_29 = arith.constant 0 : index
    %40 = vector.load %arg7[%c1_28, %c0_29] : memref<49x8xf32, #tpu.memory_space<vmem>>, vector<1x8xf32>
    %41 = vector.shape_cast %40 : vector<1x8xf32> to vector<8xf32>
    %42 = vector.shape_cast %41 : vector<8xf32> to vector<1x1x8xf32>
    %43 = vector.broadcast %42 : vector<1x1x8xf32> to vector<8x16x8xf32>
    %44 = arith.mulf %39, %43 : vector<8x16x8xf32>
    %45 = arith.addf %38, %44 : vector<8x16x8xf32>
    %46 = vector.extract_strided_slice %31 {offsets = [0, 2, 0], sizes = [8, 16, 8], strides = [1, 1, 1]} : vector<8x22x8xf32> to vector<8x16x8xf32>
    %c2 = arith.constant 2 : index
    %c0_30 = arith.constant 0 : index
    %47 = vector.load %arg7[%c2, %c0_30] : memref<49x8xf32, #tpu.memory_space<vmem>>, vector<1x8xf32>
    %48 = vector.shape_cast %47 : vector<1x8xf32> to vector<8xf32>
    %49 = vector.shape_cast %48 : vector<8xf32> to vector<1x1x8xf32>
    %50 = vector.broadcast %49 : vector<1x1x8xf32> to vector<8x16x8xf32>
    %51 = arith.mulf %46, %50 : vector<8x16x8xf32>
    %52 = arith.addf %45, %51 : vector<8x16x8xf32>
    %53 = vector.extract_strided_slice %31 {offsets = [0, 3, 0], sizes = [8, 16, 8], strides = [1, 1, 1]} : vector<8x22x8xf32> to vector<8x16x8xf32>
    %c3_31 = arith.constant 3 : index
    %c0_32 = arith.constant 0 : index
    %54 = vector.load %arg7[%c3_31, %c0_32] : memref<49x8xf32, #tpu.memory_space<vmem>>, vector<1x8xf32>
    %55 = vector.shape_cast %54 : vector<1x8xf32> to vector<8xf32>
    %56 = vector.shape_cast %55 : vector<8xf32> to vector<1x1x8xf32>
    %57 = vector.broadcast %56 : vector<1x1x8xf32> to vector<8x16x8xf32>
    %58 = arith.mulf %53, %57 : vector<8x16x8xf32>
    %59 = arith.addf %52, %58 : vector<8x16x8xf32>
    %60 = vector.extract_strided_slice %31 {offsets = [0, 4, 0], sizes = [8, 16, 8], strides = [1, 1, 1]} : vector<8x22x8xf32> to vector<8x16x8xf32>
    %c4 = arith.constant 4 : index
    %c0_33 = arith.constant 0 : index
    %61 = vector.load %arg7[%c4, %c0_33] : memref<49x8xf32, #tpu.memory_space<vmem>>, vector<1x8xf32>
    %62 = vector.shape_cast %61 : vector<1x8xf32> to vector<8xf32>
    %63 = vector.shape_cast %62 : vector<8xf32> to vector<1x1x8xf32>
    %64 = vector.broadcast %63 : vector<1x1x8xf32> to vector<8x16x8xf32>
    %65 = arith.mulf %60, %64 : vector<8x16x8xf32>
    %66 = arith.addf %59, %65 : vector<8x16x8xf32>
    %67 = vector.extract_strided_slice %31 {offsets = [0, 5, 0], sizes = [8, 16, 8], strides = [1, 1, 1]} : vector<8x22x8xf32> to vector<8x16x8xf32>
    %c5 = arith.constant 5 : index
    %c0_34 = arith.constant 0 : index
    %68 = vector.load %arg7[%c5, %c0_34] : memref<49x8xf32, #tpu.memory_space<vmem>>, vector<1x8xf32>
    %69 = vector.shape_cast %68 : vector<1x8xf32> to vector<8xf32>
    %70 = vector.shape_cast %69 : vector<8xf32> to vector<1x1x8xf32>
    %71 = vector.broadcast %70 : vector<1x1x8xf32> to vector<8x16x8xf32>
    %72 = arith.mulf %67, %71 : vector<8x16x8xf32>
    %73 = arith.addf %66, %72 : vector<8x16x8xf32>
    %74 = vector.extract_strided_slice %31 {offsets = [0, 6, 0], sizes = [8, 16, 8], strides = [1, 1, 1]} : vector<8x22x8xf32> to vector<8x16x8xf32>
    %c6 = arith.constant 6 : index
    %c0_35 = arith.constant 0 : index
    %75 = vector.load %arg7[%c6, %c0_35] : memref<49x8xf32, #tpu.memory_space<vmem>>, vector<1x8xf32>
    %76 = vector.shape_cast %75 : vector<1x8xf32> to vector<8xf32>
    %77 = vector.shape_cast %76 : vector<8xf32> to vector<1x1x8xf32>
    %78 = vector.broadcast %77 : vector<1x1x8xf32> to vector<8x16x8xf32>
    %79 = arith.mulf %74, %78 : vector<8x16x8xf32>
    %80 = arith.addf %73, %79 : vector<8x16x8xf32>
    %c1_36 = arith.constant 1 : index
    %c0_37 = arith.constant 0 : index
    %c0_38 = arith.constant 0 : index
    %81 = vector.load %arg10[%c1_36, %c0_37, %c0_38] : memref<14x22x8xf32, #tpu.memory_space<vmem>>, vector<8x22x8xf32>
    %82 = vector.extract_strided_slice %81 {offsets = [0, 0, 0], sizes = [8, 16, 8], strides = [1, 1, 1]} : vector<8x22x8xf32> to vector<8x16x8xf32>
    %c7 = arith.constant 7 : index
    %c0_39 = arith.constant 0 : index
    %83 = vector.load %arg7[%c7, %c0_39] : memref<49x8xf32, #tpu.memory_space<vmem>>, vector<1x8xf32>
    %84 = vector.shape_cast %83 : vector<1x8xf32> to vector<8xf32>
    %85 = vector.shape_cast %84 : vector<8xf32> to vector<1x1x8xf32>
    %86 = vector.broadcast %85 : vector<1x1x8xf32> to vector<8x16x8xf32>
    %87 = arith.mulf %82, %86 : vector<8x16x8xf32>
    %88 = arith.addf %80, %87 : vector<8x16x8xf32>
    %89 = vector.extract_strided_slice %81 {offsets = [0, 1, 0], sizes = [8, 16, 8], strides = [1, 1, 1]} : vector<8x22x8xf32> to vector<8x16x8xf32>
    %c8 = arith.constant 8 : index
    %c0_40 = arith.constant 0 : index
    %90 = vector.load %arg7[%c8, %c0_40] : memref<49x8xf32, #tpu.memory_space<vmem>>, vector<1x8xf32>
    %91 = vector.shape_cast %90 : vector<1x8xf32> to vector<8xf32>
    %92 = vector.shape_cast %91 : vector<8xf32> to vector<1x1x8xf32>
    %93 = vector.broadcast %92 : vector<1x1x8xf32> to vector<8x16x8xf32>
    %94 = arith.mulf %89, %93 : vector<8x16x8xf32>
    %95 = arith.addf %88, %94 : vector<8x16x8xf32>
    %96 = vector.extract_strided_slice %81 {offsets = [0, 2, 0], sizes = [8, 16, 8], strides = [1, 1, 1]} : vector<8x22x8xf32> to vector<8x16x8xf32>
    %c9 = arith.constant 9 : index
    %c0_41 = arith.constant 0 : index
    %97 = vector.load %arg7[%c9, %c0_41] : memref<49x8xf32, #tpu.memory_space<vmem>>, vector<1x8xf32>
    %98 = vector.shape_cast %97 : vector<1x8xf32> to vector<8xf32>
    %99 = vector.shape_cast %98 : vector<8xf32> to vector<1x1x8xf32>
    %100 = vector.broadcast %99 : vector<1x1x8xf32> to vector<8x16x8xf32>
    %101 = arith.mulf %96, %100 : vector<8x16x8xf32>
    %102 = arith.addf %95, %101 : vector<8x16x8xf32>
    %103 = vector.extract_strided_slice %81 {offsets = [0, 3, 0], sizes = [8, 16, 8], strides = [1, 1, 1]} : vector<8x22x8xf32> to vector<8x16x8xf32>
    %c10 = arith.constant 10 : index
    %c0_42 = arith.constant 0 : index
    %104 = vector.load %arg7[%c10, %c0_42] : memref<49x8xf32, #tpu.memory_space<vmem>>, vector<1x8xf32>
    %105 = vector.shape_cast %104 : vector<1x8xf32> to vector<8xf32>
    %106 = vector.shape_cast %105 : vector<8xf32> to vector<1x1x8xf32>
    %107 = vector.broadcast %106 : vector<1x1x8xf32> to vector<8x16x8xf32>
    %108 = arith.mulf %103, %107 : vector<8x16x8xf32>
    %109 = arith.addf %102, %108 : vector<8x16x8xf32>
    %110 = vector.extract_strided_slice %81 {offsets = [0, 4, 0], sizes = [8, 16, 8], strides = [1, 1, 1]} : vector<8x22x8xf32> to vector<8x16x8xf32>
    %c11 = arith.constant 11 : index
    %c0_43 = arith.constant 0 : index
    %111 = vector.load %arg7[%c11, %c0_43] : memref<49x8xf32, #tpu.memory_space<vmem>>, vector<1x8xf32>
    %112 = vector.shape_cast %111 : vector<1x8xf32> to vector<8xf32>
    %113 = vector.shape_cast %112 : vector<8xf32> to vector<1x1x8xf32>
    %114 = vector.broadcast %113 : vector<1x1x8xf32> to vector<8x16x8xf32>
    %115 = arith.mulf %110, %114 : vector<8x16x8xf32>
    %116 = arith.addf %109, %115 : vector<8x16x8xf32>
    %117 = vector.extract_strided_slice %81 {offsets = [0, 5, 0], sizes = [8, 16, 8], strides = [1, 1, 1]} : vector<8x22x8xf32> to vector<8x16x8xf32>
    %c12 = arith.constant 12 : index
    %c0_44 = arith.constant 0 : index
    %118 = vector.load %arg7[%c12, %c0_44] : memref<49x8xf32, #tpu.memory_space<vmem>>, vector<1x8xf32>
    %119 = vector.shape_cast %118 : vector<1x8xf32> to vector<8xf32>
    %120 = vector.shape_cast %119 : vector<8xf32> to vector<1x1x8xf32>
    %121 = vector.broadcast %120 : vector<1x1x8xf32> to vector<8x16x8xf32>
    %122 = arith.mulf %117, %121 : vector<8x16x8xf32>
    %123 = arith.addf %116, %122 : vector<8x16x8xf32>
    %124 = vector.extract_strided_slice %81 {offsets = [0, 6, 0], sizes = [8, 16, 8], strides = [1, 1, 1]} : vector<8x22x8xf32> to vector<8x16x8xf32>
    %c13 = arith.constant 13 : index
    %c0_45 = arith.constant 0 : index
    %125 = vector.load %arg7[%c13, %c0_45] : memref<49x8xf32, #tpu.memory_space<vmem>>, vector<1x8xf32>
    %126 = vector.shape_cast %125 : vector<1x8xf32> to vector<8xf32>
    %127 = vector.shape_cast %126 : vector<8xf32> to vector<1x1x8xf32>
    %128 = vector.broadcast %127 : vector<1x1x8xf32> to vector<8x16x8xf32>
    %129 = arith.mulf %124, %128 : vector<8x16x8xf32>
    %130 = arith.addf %123, %129 : vector<8x16x8xf32>
    %c2_46 = arith.constant 2 : index
    %c0_47 = arith.constant 0 : index
    %c0_48 = arith.constant 0 : index
    %131 = vector.load %arg10[%c2_46, %c0_47, %c0_48] : memref<14x22x8xf32, #tpu.memory_space<vmem>>, vector<8x22x8xf32>
    %132 = vector.extract_strided_slice %131 {offsets = [0, 0, 0], sizes = [8, 16, 8], strides = [1, 1, 1]} : vector<8x22x8xf32> to vector<8x16x8xf32>
    %c14 = arith.constant 14 : index
    %c0_49 = arith.constant 0 : index
    %133 = vector.load %arg7[%c14, %c0_49] : memref<49x8xf32, #tpu.memory_space<vmem>>, vector<1x8xf32>
    %134 = vector.shape_cast %133 : vector<1x8xf32> to vector<8xf32>
    %135 = vector.shape_cast %134 : vector<8xf32> to vector<1x1x8xf32>
    %136 = vector.broadcast %135 : vector<1x1x8xf32> to vector<8x16x8xf32>
    %137 = arith.mulf %132, %136 : vector<8x16x8xf32>
    %138 = arith.addf %130, %137 : vector<8x16x8xf32>
    %139 = vector.extract_strided_slice %131 {offsets = [0, 1, 0], sizes = [8, 16, 8], strides = [1, 1, 1]} : vector<8x22x8xf32> to vector<8x16x8xf32>
    %c15 = arith.constant 15 : index
    %c0_50 = arith.constant 0 : index
    %140 = vector.load %arg7[%c15, %c0_50] : memref<49x8xf32, #tpu.memory_space<vmem>>, vector<1x8xf32>
    %141 = vector.shape_cast %140 : vector<1x8xf32> to vector<8xf32>
    %142 = vector.shape_cast %141 : vector<8xf32> to vector<1x1x8xf32>
    %143 = vector.broadcast %142 : vector<1x1x8xf32> to vector<8x16x8xf32>
    %144 = arith.mulf %139, %143 : vector<8x16x8xf32>
    %145 = arith.addf %138, %144 : vector<8x16x8xf32>
    %146 = vector.extract_strided_slice %131 {offsets = [0, 2, 0], sizes = [8, 16, 8], strides = [1, 1, 1]} : vector<8x22x8xf32> to vector<8x16x8xf32>
    %c16 = arith.constant 16 : index
    %c0_51 = arith.constant 0 : index
    %147 = vector.load %arg7[%c16, %c0_51] : memref<49x8xf32, #tpu.memory_space<vmem>>, vector<1x8xf32>
    %148 = vector.shape_cast %147 : vector<1x8xf32> to vector<8xf32>
    %149 = vector.shape_cast %148 : vector<8xf32> to vector<1x1x8xf32>
    %150 = vector.broadcast %149 : vector<1x1x8xf32> to vector<8x16x8xf32>
    %151 = arith.mulf %146, %150 : vector<8x16x8xf32>
    %152 = arith.addf %145, %151 : vector<8x16x8xf32>
    %153 = vector.extract_strided_slice %131 {offsets = [0, 3, 0], sizes = [8, 16, 8], strides = [1, 1, 1]} : vector<8x22x8xf32> to vector<8x16x8xf32>
    %c17 = arith.constant 17 : index
    %c0_52 = arith.constant 0 : index
    %154 = vector.load %arg7[%c17, %c0_52] : memref<49x8xf32, #tpu.memory_space<vmem>>, vector<1x8xf32>
    %155 = vector.shape_cast %154 : vector<1x8xf32> to vector<8xf32>
    %156 = vector.shape_cast %155 : vector<8xf32> to vector<1x1x8xf32>
    %157 = vector.broadcast %156 : vector<1x1x8xf32> to vector<8x16x8xf32>
    %158 = arith.mulf %153, %157 : vector<8x16x8xf32>
    %159 = arith.addf %152, %158 : vector<8x16x8xf32>
    %160 = vector.extract_strided_slice %131 {offsets = [0, 4, 0], sizes = [8, 16, 8], strides = [1, 1, 1]} : vector<8x22x8xf32> to vector<8x16x8xf32>
    %c18 = arith.constant 18 : index
    %c0_53 = arith.constant 0 : index
    %161 = vector.load %arg7[%c18, %c0_53] : memref<49x8xf32, #tpu.memory_space<vmem>>, vector<1x8xf32>
    %162 = vector.shape_cast %161 : vector<1x8xf32> to vector<8xf32>
    %163 = vector.shape_cast %162 : vector<8xf32> to vector<1x1x8xf32>
    %164 = vector.broadcast %163 : vector<1x1x8xf32> to vector<8x16x8xf32>
    %165 = arith.mulf %160, %164 : vector<8x16x8xf32>
    %166 = arith.addf %159, %165 : vector<8x16x8xf32>
    %167 = vector.extract_strided_slice %131 {offsets = [0, 5, 0], sizes = [8, 16, 8], strides = [1, 1, 1]} : vector<8x22x8xf32> to vector<8x16x8xf32>
    %c19_54 = arith.constant 19 : index
    %c0_55 = arith.constant 0 : index
    %168 = vector.load %arg7[%c19_54, %c0_55] : memref<49x8xf32, #tpu.memory_space<vmem>>, vector<1x8xf32>
    %169 = vector.shape_cast %168 : vector<1x8xf32> to vector<8xf32>
    %170 = vector.shape_cast %169 : vector<8xf32> to vector<1x1x8xf32>
    %171 = vector.broadcast %170 : vector<1x1x8xf32> to vector<8x16x8xf32>
    %172 = arith.mulf %167, %171 : vector<8x16x8xf32>
    %173 = arith.addf %166, %172 : vector<8x16x8xf32>
    %174 = vector.extract_strided_slice %131 {offsets = [0, 6, 0], sizes = [8, 16, 8], strides = [1, 1, 1]} : vector<8x22x8xf32> to vector<8x16x8xf32>
    %c20 = arith.constant 20 : index
    %c0_56 = arith.constant 0 : index
    %175 = vector.load %arg7[%c20, %c0_56] : memref<49x8xf32, #tpu.memory_space<vmem>>, vector<1x8xf32>
    %176 = vector.shape_cast %175 : vector<1x8xf32> to vector<8xf32>
    %177 = vector.shape_cast %176 : vector<8xf32> to vector<1x1x8xf32>
    %178 = vector.broadcast %177 : vector<1x1x8xf32> to vector<8x16x8xf32>
    %179 = arith.mulf %174, %178 : vector<8x16x8xf32>
    %180 = arith.addf %173, %179 : vector<8x16x8xf32>
    %c3_57 = arith.constant 3 : index
    %c0_58 = arith.constant 0 : index
    %c0_59 = arith.constant 0 : index
    %181 = vector.load %arg10[%c3_57, %c0_58, %c0_59] : memref<14x22x8xf32, #tpu.memory_space<vmem>>, vector<8x22x8xf32>
    %182 = vector.extract_strided_slice %181 {offsets = [0, 0, 0], sizes = [8, 16, 8], strides = [1, 1, 1]} : vector<8x22x8xf32> to vector<8x16x8xf32>
    %c21 = arith.constant 21 : index
    %c0_60 = arith.constant 0 : index
    %183 = vector.load %arg7[%c21, %c0_60] : memref<49x8xf32, #tpu.memory_space<vmem>>, vector<1x8xf32>
    %184 = vector.shape_cast %183 : vector<1x8xf32> to vector<8xf32>
    %185 = vector.shape_cast %184 : vector<8xf32> to vector<1x1x8xf32>
    %186 = vector.broadcast %185 : vector<1x1x8xf32> to vector<8x16x8xf32>
    %187 = arith.mulf %182, %186 : vector<8x16x8xf32>
    %188 = arith.addf %180, %187 : vector<8x16x8xf32>
    %189 = vector.extract_strided_slice %181 {offsets = [0, 1, 0], sizes = [8, 16, 8], strides = [1, 1, 1]} : vector<8x22x8xf32> to vector<8x16x8xf32>
    %c22 = arith.constant 22 : index
    %c0_61 = arith.constant 0 : index
    %190 = vector.load %arg7[%c22, %c0_61] : memref<49x8xf32, #tpu.memory_space<vmem>>, vector<1x8xf32>
    %191 = vector.shape_cast %190 : vector<1x8xf32> to vector<8xf32>
    %192 = vector.shape_cast %191 : vector<8xf32> to vector<1x1x8xf32>
    %193 = vector.broadcast %192 : vector<1x1x8xf32> to vector<8x16x8xf32>
    %194 = arith.mulf %189, %193 : vector<8x16x8xf32>
    %195 = arith.addf %188, %194 : vector<8x16x8xf32>
    %196 = vector.extract_strided_slice %181 {offsets = [0, 2, 0], sizes = [8, 16, 8], strides = [1, 1, 1]} : vector<8x22x8xf32> to vector<8x16x8xf32>
    %c23 = arith.constant 23 : index
    %c0_62 = arith.constant 0 : index
    %197 = vector.load %arg7[%c23, %c0_62] : memref<49x8xf32, #tpu.memory_space<vmem>>, vector<1x8xf32>
    %198 = vector.shape_cast %197 : vector<1x8xf32> to vector<8xf32>
    %199 = vector.shape_cast %198 : vector<8xf32> to vector<1x1x8xf32>
    %200 = vector.broadcast %199 : vector<1x1x8xf32> to vector<8x16x8xf32>
    %201 = arith.mulf %196, %200 : vector<8x16x8xf32>
    %202 = arith.addf %195, %201 : vector<8x16x8xf32>
    %203 = vector.extract_strided_slice %181 {offsets = [0, 3, 0], sizes = [8, 16, 8], strides = [1, 1, 1]} : vector<8x22x8xf32> to vector<8x16x8xf32>
    %c24 = arith.constant 24 : index
    %c0_63 = arith.constant 0 : index
    %204 = vector.load %arg7[%c24, %c0_63] : memref<49x8xf32, #tpu.memory_space<vmem>>, vector<1x8xf32>
    %205 = vector.shape_cast %204 : vector<1x8xf32> to vector<8xf32>
    %206 = vector.shape_cast %205 : vector<8xf32> to vector<1x1x8xf32>
    %207 = vector.broadcast %206 : vector<1x1x8xf32> to vector<8x16x8xf32>
    %208 = arith.mulf %203, %207 : vector<8x16x8xf32>
    %209 = arith.addf %202, %208 : vector<8x16x8xf32>
    %210 = vector.extract_strided_slice %181 {offsets = [0, 4, 0], sizes = [8, 16, 8], strides = [1, 1, 1]} : vector<8x22x8xf32> to vector<8x16x8xf32>
    %c25 = arith.constant 25 : index
    %c0_64 = arith.constant 0 : index
    %211 = vector.load %arg7[%c25, %c0_64] : memref<49x8xf32, #tpu.memory_space<vmem>>, vector<1x8xf32>
    %212 = vector.shape_cast %211 : vector<1x8xf32> to vector<8xf32>
    %213 = vector.shape_cast %212 : vector<8xf32> to vector<1x1x8xf32>
    %214 = vector.broadcast %213 : vector<1x1x8xf32> to vector<8x16x8xf32>
    %215 = arith.mulf %210, %214 : vector<8x16x8xf32>
    %216 = arith.addf %209, %215 : vector<8x16x8xf32>
    %217 = vector.extract_strided_slice %181 {offsets = [0, 5, 0], sizes = [8, 16, 8], strides = [1, 1, 1]} : vector<8x22x8xf32> to vector<8x16x8xf32>
    %c26 = arith.constant 26 : index
    %c0_65 = arith.constant 0 : index
    %218 = vector.load %arg7[%c26, %c0_65] : memref<49x8xf32, #tpu.memory_space<vmem>>, vector<1x8xf32>
    %219 = vector.shape_cast %218 : vector<1x8xf32> to vector<8xf32>
    %220 = vector.shape_cast %219 : vector<8xf32> to vector<1x1x8xf32>
    %221 = vector.broadcast %220 : vector<1x1x8xf32> to vector<8x16x8xf32>
    %222 = arith.mulf %217, %221 : vector<8x16x8xf32>
    %223 = arith.addf %216, %222 : vector<8x16x8xf32>
    %224 = vector.extract_strided_slice %181 {offsets = [0, 6, 0], sizes = [8, 16, 8], strides = [1, 1, 1]} : vector<8x22x8xf32> to vector<8x16x8xf32>
    %c27 = arith.constant 27 : index
    %c0_66 = arith.constant 0 : index
    %225 = vector.load %arg7[%c27, %c0_66] : memref<49x8xf32, #tpu.memory_space<vmem>>, vector<1x8xf32>
    %226 = vector.shape_cast %225 : vector<1x8xf32> to vector<8xf32>
    %227 = vector.shape_cast %226 : vector<8xf32> to vector<1x1x8xf32>
    %228 = vector.broadcast %227 : vector<1x1x8xf32> to vector<8x16x8xf32>
    %229 = arith.mulf %224, %228 : vector<8x16x8xf32>
    %230 = arith.addf %223, %229 : vector<8x16x8xf32>
    %c4_67 = arith.constant 4 : index
    %c0_68 = arith.constant 0 : index
    %c0_69 = arith.constant 0 : index
    %231 = vector.load %arg10[%c4_67, %c0_68, %c0_69] : memref<14x22x8xf32, #tpu.memory_space<vmem>>, vector<8x22x8xf32>
    %232 = vector.extract_strided_slice %231 {offsets = [0, 0, 0], sizes = [8, 16, 8], strides = [1, 1, 1]} : vector<8x22x8xf32> to vector<8x16x8xf32>
    %c28 = arith.constant 28 : index
    %c0_70 = arith.constant 0 : index
    %233 = vector.load %arg7[%c28, %c0_70] : memref<49x8xf32, #tpu.memory_space<vmem>>, vector<1x8xf32>
    %234 = vector.shape_cast %233 : vector<1x8xf32> to vector<8xf32>
    %235 = vector.shape_cast %234 : vector<8xf32> to vector<1x1x8xf32>
    %236 = vector.broadcast %235 : vector<1x1x8xf32> to vector<8x16x8xf32>
    %237 = arith.mulf %232, %236 : vector<8x16x8xf32>
    %238 = arith.addf %230, %237 : vector<8x16x8xf32>
    %239 = vector.extract_strided_slice %231 {offsets = [0, 1, 0], sizes = [8, 16, 8], strides = [1, 1, 1]} : vector<8x22x8xf32> to vector<8x16x8xf32>
    %c29 = arith.constant 29 : index
    %c0_71 = arith.constant 0 : index
    %240 = vector.load %arg7[%c29, %c0_71] : memref<49x8xf32, #tpu.memory_space<vmem>>, vector<1x8xf32>
    %241 = vector.shape_cast %240 : vector<1x8xf32> to vector<8xf32>
    %242 = vector.shape_cast %241 : vector<8xf32> to vector<1x1x8xf32>
    %243 = vector.broadcast %242 : vector<1x1x8xf32> to vector<8x16x8xf32>
    %244 = arith.mulf %239, %243 : vector<8x16x8xf32>
    %245 = arith.addf %238, %244 : vector<8x16x8xf32>
    %246 = vector.extract_strided_slice %231 {offsets = [0, 2, 0], sizes = [8, 16, 8], strides = [1, 1, 1]} : vector<8x22x8xf32> to vector<8x16x8xf32>
    %c30 = arith.constant 30 : index
    %c0_72 = arith.constant 0 : index
    %247 = vector.load %arg7[%c30, %c0_72] : memref<49x8xf32, #tpu.memory_space<vmem>>, vector<1x8xf32>
    %248 = vector.shape_cast %247 : vector<1x8xf32> to vector<8xf32>
    %249 = vector.shape_cast %248 : vector<8xf32> to vector<1x1x8xf32>
    %250 = vector.broadcast %249 : vector<1x1x8xf32> to vector<8x16x8xf32>
    %251 = arith.mulf %246, %250 : vector<8x16x8xf32>
    %252 = arith.addf %245, %251 : vector<8x16x8xf32>
    %253 = vector.extract_strided_slice %231 {offsets = [0, 3, 0], sizes = [8, 16, 8], strides = [1, 1, 1]} : vector<8x22x8xf32> to vector<8x16x8xf32>
    %c31 = arith.constant 31 : index
    %c0_73 = arith.constant 0 : index
    %254 = vector.load %arg7[%c31, %c0_73] : memref<49x8xf32, #tpu.memory_space<vmem>>, vector<1x8xf32>
    %255 = vector.shape_cast %254 : vector<1x8xf32> to vector<8xf32>
    %256 = vector.shape_cast %255 : vector<8xf32> to vector<1x1x8xf32>
    %257 = vector.broadcast %256 : vector<1x1x8xf32> to vector<8x16x8xf32>
    %258 = arith.mulf %253, %257 : vector<8x16x8xf32>
    %259 = arith.addf %252, %258 : vector<8x16x8xf32>
    %260 = vector.extract_strided_slice %231 {offsets = [0, 4, 0], sizes = [8, 16, 8], strides = [1, 1, 1]} : vector<8x22x8xf32> to vector<8x16x8xf32>
    %c32 = arith.constant 32 : index
    %c0_74 = arith.constant 0 : index
    %261 = vector.load %arg7[%c32, %c0_74] : memref<49x8xf32, #tpu.memory_space<vmem>>, vector<1x8xf32>
    %262 = vector.shape_cast %261 : vector<1x8xf32> to vector<8xf32>
    %263 = vector.shape_cast %262 : vector<8xf32> to vector<1x1x8xf32>
    %264 = vector.broadcast %263 : vector<1x1x8xf32> to vector<8x16x8xf32>
    %265 = arith.mulf %260, %264 : vector<8x16x8xf32>
    %266 = arith.addf %259, %265 : vector<8x16x8xf32>
    %267 = vector.extract_strided_slice %231 {offsets = [0, 5, 0], sizes = [8, 16, 8], strides = [1, 1, 1]} : vector<8x22x8xf32> to vector<8x16x8xf32>
    %c33 = arith.constant 33 : index
    %c0_75 = arith.constant 0 : index
    %268 = vector.load %arg7[%c33, %c0_75] : memref<49x8xf32, #tpu.memory_space<vmem>>, vector<1x8xf32>
    %269 = vector.shape_cast %268 : vector<1x8xf32> to vector<8xf32>
    %270 = vector.shape_cast %269 : vector<8xf32> to vector<1x1x8xf32>
    %271 = vector.broadcast %270 : vector<1x1x8xf32> to vector<8x16x8xf32>
    %272 = arith.mulf %267, %271 : vector<8x16x8xf32>
    %273 = arith.addf %266, %272 : vector<8x16x8xf32>
    %274 = vector.extract_strided_slice %231 {offsets = [0, 6, 0], sizes = [8, 16, 8], strides = [1, 1, 1]} : vector<8x22x8xf32> to vector<8x16x8xf32>
    %c34 = arith.constant 34 : index
    %c0_76 = arith.constant 0 : index
    %275 = vector.load %arg7[%c34, %c0_76] : memref<49x8xf32, #tpu.memory_space<vmem>>, vector<1x8xf32>
    %276 = vector.shape_cast %275 : vector<1x8xf32> to vector<8xf32>
    %277 = vector.shape_cast %276 : vector<8xf32> to vector<1x1x8xf32>
    %278 = vector.broadcast %277 : vector<1x1x8xf32> to vector<8x16x8xf32>
    %279 = arith.mulf %274, %278 : vector<8x16x8xf32>
    %280 = arith.addf %273, %279 : vector<8x16x8xf32>
    %c5_77 = arith.constant 5 : index
    %c0_78 = arith.constant 0 : index
    %c0_79 = arith.constant 0 : index
    %281 = vector.load %arg10[%c5_77, %c0_78, %c0_79] : memref<14x22x8xf32, #tpu.memory_space<vmem>>, vector<8x22x8xf32>
    %282 = vector.extract_strided_slice %281 {offsets = [0, 0, 0], sizes = [8, 16, 8], strides = [1, 1, 1]} : vector<8x22x8xf32> to vector<8x16x8xf32>
    %c35 = arith.constant 35 : index
    %c0_80 = arith.constant 0 : index
    %283 = vector.load %arg7[%c35, %c0_80] : memref<49x8xf32, #tpu.memory_space<vmem>>, vector<1x8xf32>
    %284 = vector.shape_cast %283 : vector<1x8xf32> to vector<8xf32>
    %285 = vector.shape_cast %284 : vector<8xf32> to vector<1x1x8xf32>
    %286 = vector.broadcast %285 : vector<1x1x8xf32> to vector<8x16x8xf32>
    %287 = arith.mulf %282, %286 : vector<8x16x8xf32>
    %288 = arith.addf %280, %287 : vector<8x16x8xf32>
    %289 = vector.extract_strided_slice %281 {offsets = [0, 1, 0], sizes = [8, 16, 8], strides = [1, 1, 1]} : vector<8x22x8xf32> to vector<8x16x8xf32>
    %c36 = arith.constant 36 : index
    %c0_81 = arith.constant 0 : index
    %290 = vector.load %arg7[%c36, %c0_81] : memref<49x8xf32, #tpu.memory_space<vmem>>, vector<1x8xf32>
    %291 = vector.shape_cast %290 : vector<1x8xf32> to vector<8xf32>
    %292 = vector.shape_cast %291 : vector<8xf32> to vector<1x1x8xf32>
    %293 = vector.broadcast %292 : vector<1x1x8xf32> to vector<8x16x8xf32>
    %294 = arith.mulf %289, %293 : vector<8x16x8xf32>
    %295 = arith.addf %288, %294 : vector<8x16x8xf32>
    %296 = vector.extract_strided_slice %281 {offsets = [0, 2, 0], sizes = [8, 16, 8], strides = [1, 1, 1]} : vector<8x22x8xf32> to vector<8x16x8xf32>
    %c37 = arith.constant 37 : index
    %c0_82 = arith.constant 0 : index
    %297 = vector.load %arg7[%c37, %c0_82] : memref<49x8xf32, #tpu.memory_space<vmem>>, vector<1x8xf32>
    %298 = vector.shape_cast %297 : vector<1x8xf32> to vector<8xf32>
    %299 = vector.shape_cast %298 : vector<8xf32> to vector<1x1x8xf32>
    %300 = vector.broadcast %299 : vector<1x1x8xf32> to vector<8x16x8xf32>
    %301 = arith.mulf %296, %300 : vector<8x16x8xf32>
    %302 = arith.addf %295, %301 : vector<8x16x8xf32>
    %303 = vector.extract_strided_slice %281 {offsets = [0, 3, 0], sizes = [8, 16, 8], strides = [1, 1, 1]} : vector<8x22x8xf32> to vector<8x16x8xf32>
    %c38 = arith.constant 38 : index
    %c0_83 = arith.constant 0 : index
    %304 = vector.load %arg7[%c38, %c0_83] : memref<49x8xf32, #tpu.memory_space<vmem>>, vector<1x8xf32>
    %305 = vector.shape_cast %304 : vector<1x8xf32> to vector<8xf32>
    %306 = vector.shape_cast %305 : vector<8xf32> to vector<1x1x8xf32>
    %307 = vector.broadcast %306 : vector<1x1x8xf32> to vector<8x16x8xf32>
    %308 = arith.mulf %303, %307 : vector<8x16x8xf32>
    %309 = arith.addf %302, %308 : vector<8x16x8xf32>
    %310 = vector.extract_strided_slice %281 {offsets = [0, 4, 0], sizes = [8, 16, 8], strides = [1, 1, 1]} : vector<8x22x8xf32> to vector<8x16x8xf32>
    %c39 = arith.constant 39 : index
    %c0_84 = arith.constant 0 : index
    %311 = vector.load %arg7[%c39, %c0_84] : memref<49x8xf32, #tpu.memory_space<vmem>>, vector<1x8xf32>
    %312 = vector.shape_cast %311 : vector<1x8xf32> to vector<8xf32>
    %313 = vector.shape_cast %312 : vector<8xf32> to vector<1x1x8xf32>
    %314 = vector.broadcast %313 : vector<1x1x8xf32> to vector<8x16x8xf32>
    %315 = arith.mulf %310, %314 : vector<8x16x8xf32>
    %316 = arith.addf %309, %315 : vector<8x16x8xf32>
    %317 = vector.extract_strided_slice %281 {offsets = [0, 5, 0], sizes = [8, 16, 8], strides = [1, 1, 1]} : vector<8x22x8xf32> to vector<8x16x8xf32>
    %c40 = arith.constant 40 : index
    %c0_85 = arith.constant 0 : index
    %318 = vector.load %arg7[%c40, %c0_85] : memref<49x8xf32, #tpu.memory_space<vmem>>, vector<1x8xf32>
    %319 = vector.shape_cast %318 : vector<1x8xf32> to vector<8xf32>
    %320 = vector.shape_cast %319 : vector<8xf32> to vector<1x1x8xf32>
    %321 = vector.broadcast %320 : vector<1x1x8xf32> to vector<8x16x8xf32>
    %322 = arith.mulf %317, %321 : vector<8x16x8xf32>
    %323 = arith.addf %316, %322 : vector<8x16x8xf32>
    %324 = vector.extract_strided_slice %281 {offsets = [0, 6, 0], sizes = [8, 16, 8], strides = [1, 1, 1]} : vector<8x22x8xf32> to vector<8x16x8xf32>
    %c41 = arith.constant 41 : index
    %c0_86 = arith.constant 0 : index
    %325 = vector.load %arg7[%c41, %c0_86] : memref<49x8xf32, #tpu.memory_space<vmem>>, vector<1x8xf32>
    %326 = vector.shape_cast %325 : vector<1x8xf32> to vector<8xf32>
    %327 = vector.shape_cast %326 : vector<8xf32> to vector<1x1x8xf32>
    %328 = vector.broadcast %327 : vector<1x1x8xf32> to vector<8x16x8xf32>
    %329 = arith.mulf %324, %328 : vector<8x16x8xf32>
    %330 = arith.addf %323, %329 : vector<8x16x8xf32>
    %c6_87 = arith.constant 6 : index
    %c0_88 = arith.constant 0 : index
    %c0_89 = arith.constant 0 : index
    %331 = vector.load %arg10[%c6_87, %c0_88, %c0_89] : memref<14x22x8xf32, #tpu.memory_space<vmem>>, vector<8x22x8xf32>
    %332 = vector.extract_strided_slice %331 {offsets = [0, 0, 0], sizes = [8, 16, 8], strides = [1, 1, 1]} : vector<8x22x8xf32> to vector<8x16x8xf32>
    %c42 = arith.constant 42 : index
    %c0_90 = arith.constant 0 : index
    %333 = vector.load %arg7[%c42, %c0_90] : memref<49x8xf32, #tpu.memory_space<vmem>>, vector<1x8xf32>
    %334 = vector.shape_cast %333 : vector<1x8xf32> to vector<8xf32>
    %335 = vector.shape_cast %334 : vector<8xf32> to vector<1x1x8xf32>
    %336 = vector.broadcast %335 : vector<1x1x8xf32> to vector<8x16x8xf32>
    %337 = arith.mulf %332, %336 : vector<8x16x8xf32>
    %338 = arith.addf %330, %337 : vector<8x16x8xf32>
    %339 = vector.extract_strided_slice %331 {offsets = [0, 1, 0], sizes = [8, 16, 8], strides = [1, 1, 1]} : vector<8x22x8xf32> to vector<8x16x8xf32>
    %c43 = arith.constant 43 : index
    %c0_91 = arith.constant 0 : index
    %340 = vector.load %arg7[%c43, %c0_91] : memref<49x8xf32, #tpu.memory_space<vmem>>, vector<1x8xf32>
    %341 = vector.shape_cast %340 : vector<1x8xf32> to vector<8xf32>
    %342 = vector.shape_cast %341 : vector<8xf32> to vector<1x1x8xf32>
    %343 = vector.broadcast %342 : vector<1x1x8xf32> to vector<8x16x8xf32>
    %344 = arith.mulf %339, %343 : vector<8x16x8xf32>
    %345 = arith.addf %338, %344 : vector<8x16x8xf32>
    %346 = vector.extract_strided_slice %331 {offsets = [0, 2, 0], sizes = [8, 16, 8], strides = [1, 1, 1]} : vector<8x22x8xf32> to vector<8x16x8xf32>
    %c44 = arith.constant 44 : index
    %c0_92 = arith.constant 0 : index
    %347 = vector.load %arg7[%c44, %c0_92] : memref<49x8xf32, #tpu.memory_space<vmem>>, vector<1x8xf32>
    %348 = vector.shape_cast %347 : vector<1x8xf32> to vector<8xf32>
    %349 = vector.shape_cast %348 : vector<8xf32> to vector<1x1x8xf32>
    %350 = vector.broadcast %349 : vector<1x1x8xf32> to vector<8x16x8xf32>
    %351 = arith.mulf %346, %350 : vector<8x16x8xf32>
    %352 = arith.addf %345, %351 : vector<8x16x8xf32>
    %353 = vector.extract_strided_slice %331 {offsets = [0, 3, 0], sizes = [8, 16, 8], strides = [1, 1, 1]} : vector<8x22x8xf32> to vector<8x16x8xf32>
    %c45 = arith.constant 45 : index
    %c0_93 = arith.constant 0 : index
    %354 = vector.load %arg7[%c45, %c0_93] : memref<49x8xf32, #tpu.memory_space<vmem>>, vector<1x8xf32>
    %355 = vector.shape_cast %354 : vector<1x8xf32> to vector<8xf32>
    %356 = vector.shape_cast %355 : vector<8xf32> to vector<1x1x8xf32>
    %357 = vector.broadcast %356 : vector<1x1x8xf32> to vector<8x16x8xf32>
    %358 = arith.mulf %353, %357 : vector<8x16x8xf32>
    %359 = arith.addf %352, %358 : vector<8x16x8xf32>
    %360 = vector.extract_strided_slice %331 {offsets = [0, 4, 0], sizes = [8, 16, 8], strides = [1, 1, 1]} : vector<8x22x8xf32> to vector<8x16x8xf32>
    %c46 = arith.constant 46 : index
    %c0_94 = arith.constant 0 : index
    %361 = vector.load %arg7[%c46, %c0_94] : memref<49x8xf32, #tpu.memory_space<vmem>>, vector<1x8xf32>
    %362 = vector.shape_cast %361 : vector<1x8xf32> to vector<8xf32>
    %363 = vector.shape_cast %362 : vector<8xf32> to vector<1x1x8xf32>
    %364 = vector.broadcast %363 : vector<1x1x8xf32> to vector<8x16x8xf32>
    %365 = arith.mulf %360, %364 : vector<8x16x8xf32>
    %366 = arith.addf %359, %365 : vector<8x16x8xf32>
    %367 = vector.extract_strided_slice %331 {offsets = [0, 5, 0], sizes = [8, 16, 8], strides = [1, 1, 1]} : vector<8x22x8xf32> to vector<8x16x8xf32>
    %c47 = arith.constant 47 : index
    %c0_95 = arith.constant 0 : index
    %368 = vector.load %arg7[%c47, %c0_95] : memref<49x8xf32, #tpu.memory_space<vmem>>, vector<1x8xf32>
    %369 = vector.shape_cast %368 : vector<1x8xf32> to vector<8xf32>
    %370 = vector.shape_cast %369 : vector<8xf32> to vector<1x1x8xf32>
    %371 = vector.broadcast %370 : vector<1x1x8xf32> to vector<8x16x8xf32>
    %372 = arith.mulf %367, %371 : vector<8x16x8xf32>
    %373 = arith.addf %366, %372 : vector<8x16x8xf32>
    %374 = vector.extract_strided_slice %331 {offsets = [0, 6, 0], sizes = [8, 16, 8], strides = [1, 1, 1]} : vector<8x22x8xf32> to vector<8x16x8xf32>
    %c48 = arith.constant 48 : index
    %c0_96 = arith.constant 0 : index
    %375 = vector.load %arg7[%c48, %c0_96] : memref<49x8xf32, #tpu.memory_space<vmem>>, vector<1x8xf32>
    %376 = vector.shape_cast %375 : vector<1x8xf32> to vector<8xf32>
    %377 = vector.shape_cast %376 : vector<8xf32> to vector<1x1x8xf32>
    %378 = vector.broadcast %377 : vector<1x1x8xf32> to vector<8x16x8xf32>
    %379 = arith.mulf %374, %378 : vector<8x16x8xf32>
    %380 = arith.addf %373, %379 : vector<8x16x8xf32>
    %381 = vector.shape_cast %380 : vector<8x16x8xf32> to vector<128x8xf32>
    %382 = arith.truncf %381 : vector<128x8xf32> to vector<128x8xbf16>
    %c0_97 = arith.constant 0 : index
    %c0_98 = arith.constant 0 : index
    %383 = vector.load %arg8[%c0_97, %c0_98] : memref<8x4xbf16, #tpu.memory_space<vmem>>, vector<8x4xbf16>
    %cst_99 = arith.constant dense<0.000000e+00> : vector<128x4xf32>
    %384 = tpu.matmul %382, %383, %cst_99 {dimension_numbers = #tpu.dot_dimension_numbers<[1], [0], [0], [1], [0, 0, 1, 1], [], []>} : vector<128x8xbf16>, vector<8x4xbf16>, vector<128x4xf32> -> vector<128x4xf32>
    %c0_100 = arith.constant 0 : index
    %c0_101 = arith.constant 0 : index
    %c0_102 = arith.constant 0 : index
    %385 = vector.load %arg9[%c0_100, %c0_101, %c0_102] : memref<1x128x4xf32, #tpu.memory_space<vmem>>, vector<1x128x4xf32>
    %386 = vector.shape_cast %385 : vector<1x128x4xf32> to vector<128x4xf32>
    %387 = vector.shape_cast %384 : vector<128x4xf32> to vector<1x128x4xf32>
    tpu.vector_store %arg9[%c0_100, %c0_101, %c0_102], %387 {strides = array<i32>} : memref<1x128x4xf32, #tpu.memory_space<vmem>>, vector<1x128x4xf32>,
    return
  }
  func.func @transform_0(%arg0: i32, %arg1: i32) -> i32 {
    %c0_i32 = arith.constant 0 : i32
    %c0_i32_0 = arith.constant 0 : i32
    return %c0_i32 : i32
  }
  func.func @transform_1(%arg0: i32, %arg1: i32) -> (i32, i32, i32) {
    %c1_i32 = arith.constant 1 : i32
    %0 = arith.subi %arg1, %c1_i32 : i32
    %c0_i32 = arith.constant 0 : i32
    %1 = arith.maxsi %0, %c0_i32 : i32
    %c0_i32_0 = arith.constant 0 : i32
    %c0_i32_1 = arith.constant 0 : i32
    return %arg0, %1, %c0_i32_0 : i32, i32, i32
  }
  func.func @transform_2(%arg0: i32, %arg1: i32) -> (i32, i32, i32) {
    %c0_i32 = arith.constant 0 : i32
    %c0_i32_0 = arith.constant 0 : i32
    return %arg0, %arg1, %c0_i32 : i32, i32, i32
  }
  func.func @transform_3(%arg0: i32, %arg1: i32) -> (i32, i32, i32) {
    %c1_i32 = arith.constant 1 : i32
    %0 = arith.addi %arg1, %c1_i32 : i32
    %c1_i32_0 = arith.constant 1 : i32
    %1 = arith.minsi %0, %c1_i32_0 : i32
    %c0_i32 = arith.constant 0 : i32
    %c0_i32_1 = arith.constant 0 : i32
    return %arg0, %1, %c0_i32 : i32, i32, i32
  }
  func.func @transform_4(%arg0: i32, %arg1: i32) -> (i32, i32) {
    %c0_i32 = arith.constant 0 : i32
    %c0_i32_0 = arith.constant 0 : i32
    %c0_i32_1 = arith.constant 0 : i32
    return %c0_i32, %c0_i32_0 : i32, i32
  }
  func.func @transform_5(%arg0: i32, %arg1: i32) -> (i32, i32) {
    %c0_i32 = arith.constant 0 : i32
    %c0_i32_0 = arith.constant 0 : i32
    %c0_i32_1 = arith.constant 0 : i32
    return %c0_i32, %c0_i32_0 : i32, i32
  }
  func.func @transform_6(%arg0: i32, %arg1: i32) -> (i32, i32) {
    %c0_i32 = arith.constant 0 : i32
    %c0_i32_0 = arith.constant 0 : i32
    %c0_i32_1 = arith.constant 0 : i32
    return %c0_i32, %c0_i32_0 : i32, i32
  }
  func.func @transform_7(%arg0: i32, %arg1: i32) -> (i32, i32, i32) {
    %c0_i32 = arith.constant 0 : i32
    %c0_i32_0 = arith.constant 0 : i32
    return %arg0, %arg1, %c0_i32 : i32, i32, i32
  }
}

</mosaic_0001>

<llo_original>
// kernel: tpu_custom_call.1
$region0: #{tpu_custom_call.1}
  #allocation0 [shape = 'u32[]', space=smem, size = 0x4, offset = 0x4, fixed_abs, tag = 'smem constant byte address 0x4 - core index']
  #allocation1 [shape = 'u32[72,128]{1,0:T(1,128)}', space=vmem, size = 0x9000, scoped, tag = 'internal scratch']
  #allocation2 [shape = 'f32[14,22,8]{2,1,0:T(8,128)}', space=vmem, size = 0x2a000, scoped, tag = 'scratch operand']
  %s0 = inlined_call_operand.vmem [shape: f32[2], index: 0, kind: input, shape index: {}]
  %s1 = inlined_call_operand.vmem [shape: bf16[2,256,4], index: 1, kind: input, shape index: {}]
  %s2 = inlined_call_operand.vmem [shape: bf16[2,256,4], index: 2, kind: input, shape index: {}]
  %s3 = inlined_call_operand.vmem [shape: bf16[2,256,4], index: 3, kind: input, shape index: {}]
  %s4 = inlined_call_operand.vmem [shape: bf16[4,8], index: 4, kind: input, shape index: {}]
  %s5 = inlined_call_operand.vmem [shape: f32[49,8], index: 5, kind: input, shape index: {}]
  %s6 = inlined_call_operand.vmem [shape: bf16[8,4], index: 6, kind: input, shape index: {}]
  %s7 = inlined_call_operand.vmem [shape: f32[2,256,4], index: 7, kind: output, shape index: {}]
  %s8 = sld [smem:[#allocation0]]
  $region73: #{tpu_custom_call.1} parent=0
    _
  %s10 = ssub.s32 1, %s8
  %s11 = scalar_select 0, %s10, %s8
  $region1: #{tpu_custom_call.1} parent=0
    #allocation3 [shape = 'u8[512]{0}', space=smem, size = 0x200, scoped, tag = 'input window, operand 0, single buffered']
    #allocation4 [shape = 's32[2]{0}', space=sflag, size = 0x8, scoped, tag = 'scoped memory for tpu_custom_call.1']
    %12 = vsyncpa [#allocation4], 0
    loop: start=0, step=1, limit=6
    $region2: #{tpu_custom_call.1} parent=1 // loop_pre_header
      _
    $region3: #{tpu_custom_call.1} parent=1 // loop_header
      %s14 = sphi 0, %s18
      %p15 = scmp.ge.s32.totalorder %s14, 6
      %s21 = sphi 0, %s33
      %s22 = sphi 0, %s29
      %s23 = sphi 0, %s21
      %s24 = sphi 0, %s22
      %s25 = sphi 0, %s23
      %s26 = sphi 0, %s24
      %s34 = sphi 0, %s34
      %s36 = sphi 0, %s34
      %s37 = sphi 0, %s36
      %s51 = sphi 0, %s37
      %s65 = sphi 0, %s67
      %s68 = sphi 0, %s65
      %s69 = sphi 0, %s68
      %s85 = sphi 0, %s69
      %s93 = sphi 0, %s95
      %s96 = sphi 0, %s93
      %s97 = sphi 0, %s96
      %s113 = sphi 0, %s97
      %s127 = sphi 0, %s129
      %s130 = sphi 0, %s127
      %s131 = sphi 0, %s130
      %s147 = sphi 0, %s131
      %s151 = sphi 0, %s151
      %s153 = sphi 0, %s151
      %s154 = sphi 0, %s153
      %s168 = sphi 0, %s154
      %s172 = sphi 0, %s172
      %s174 = sphi 0, %s172
      %s175 = sphi 0, %s174
      %s189 = sphi 0, %s175
      %s193 = sphi 0, %s193
      %s195 = sphi 0, %s193
      %s196 = sphi 0, %s195
      %s210 = sphi 0, %s196
      %s218 = sphi 0, %s220
      %s221 = sphi 0, %s218
      %s222 = sphi 0, %s221
      %s238 = sphi 0, %s222
    $region4: #{tpu_custom_call.1} parent=1 // loop_header_branch
      %17 = sbr.rel (%p15) target = $region8
    $region5: #{tpu_custom_call.1} parent=1 // loop_body
      %s19 = ssub.s32 %s14, 1
      %s20 = ssub.s32 %s14, 2
      %s27 = sadd.s32 1, %s22
      %p28 = scmp.ge.s32.totalorder %s27, 2
      %s29 = scalar_select %p28, 0, %s27
      %s30 = sadd.s32 1, %s21
      %s31 = scalar_select %p28, %s30, %s21
      %p32 = scmp.ge.s32.totalorder %s31, 2
      %s33 = scalar_select %p32, 0, %s31
      %s35 = sadd.s32 %s34, 1
      %p38 = scmp.eq.s32.totalorder %s14, 3
      %p39 = scmp.ne.s32.totalorder %s34, %s36
      %p40 = scmp.eq.s32.totalorder %s14, 0
      %p41 = por %p39, %p40
      %p42 = scmp.ne.s32.totalorder %s34, %s36
      %p43 = scmp.eq.s32.totalorder %s19, 3
      %p44 = por %p42, %p43
      %p45 = scmp.ne.s32.totalorder %s36, %s37
      %p46 = scmp.eq.s32.totalorder %s19, 0
      %p47 = por %p45, %p46
      %p48 = scmp.ne.s32.totalorder %s36, %s37
      %p49 = scmp.eq.s32.totalorder %s20, 3
      %p50 = por %p48, %p49
      %p52 = scmp.ne.s32.totalorder %s37, %s51
      %p53 = scmp.eq.s32.totalorder %s20, 0
      %p54 = por %p52, %p53
      %s55 = ssub.s32 %s22, 1
      %p56 = scmp.gt.s32.totalorder %s55, 0
      %s57 = scalar_select %p56, %s55, 0
      %s58 = ssub.s32 %s29, 1
      %p59 = scmp.gt.s32.totalorder %s58, 0
      %s60 = scalar_select %p59, %s58, 0
      %s61 = ssub.s32 %s21, %s33
      %s62 = ssub.s32 %s57, %s60
      %s63 = sor.u32 %s61, %s62
      %p64 = scmp.eq.s32.totalorder %s63, 0
      %s66 = sadd.s32 %s65, 1
      %s67 = scalar_select %p64, %s65, %s66
      %p70 = pneg %p64
      %p71 = scmp.eq.s32.totalorder %s14, 3
      %p72 = por %p70, %p71
      %p73 = scmp.ne.s32.totalorder %s65, %s68
      %p74 = scmp.eq.s32.totalorder %s14, 0
      %p75 = por %p73, %p74
      %p76 = scmp.ne.s32.totalorder %s65, %s68
      %p77 = scmp.eq.s32.totalorder %s19, 3
      %p78 = por %p76, %p77
      %p79 = scmp.ne.s32.totalorder %s68, %s69
      %p80 = scmp.eq.s32.totalorder %s19, 0
      %p81 = por %p79, %p80
      %p82 = scmp.ne.s32.totalorder %s68, %s69
      %p83 = scmp.eq.s32.totalorder %s20, 3
      %p84 = por %p82, %p83
      %p86 = scmp.ne.s32.totalorder %s69, %s85
      %p87 = scmp.eq.s32.totalorder %s20, 0
      %p88 = por %p86, %p87
      %s89 = ssub.s32 %s21, %s33
      %s90 = ssub.s32 %s22, %s29
      %s91 = sor.u32 %s89, %s90
      %p92 = scmp.eq.s32.totalorder %s91, 0
      %s94 = sadd.s32 %s93, 1
      %s95 = scalar_select %p92, %s93, %s94
      %p98 = pneg %p92
      %p99 = scmp.eq.s32.totalorder %s14, 3
      %p100 = por %p98, %p99
      %p101 = scmp.ne.s32.totalorder %s93, %s96
      %p102 = scmp.eq.s32.totalorder %s14, 0
      %p103 = por %p101, %p102
      %p104 = scmp.ne.s32.totalorder %s93, %s96
      %p105 = scmp.eq.s32.totalorder %s19, 3
      %p106 = por %p104, %p105
      %p107 = scmp.ne.s32.totalorder %s96, %s97
      %p108 = scmp.eq.s32.totalorder %s19, 0
      %p109 = por %p107, %p108
      %p110 = scmp.ne.s32.totalorder %s96, %s97
      %p111 = scmp.eq.s32.totalorder %s20, 3
      %p112 = por %p110, %p111
      %p114 = scmp.ne.s32.totalorder %s97, %s113
      %p115 = scmp.eq.s32.totalorder %s20, 0
      %p116 = por %p114, %p115
      %s117 = sadd.s32 %s22, 1
      %p118 = scmp.lt.s32.totalorder %s117, 1
      %s119 = scalar_select %p118, %s117, 1
      %s120 = sadd.s32 %s29, 1
      %p121 = scmp.lt.s32.totalorder %s120, 1
      %s122 = scalar_select %p121, %s120, 1
      %s123 = ssub.s32 %s21, %s33
      %s124 = ssub.s32 %s119, %s122
      %s125 = sor.u32 %s123, %s124
      %p126 = scmp.eq.s32.totalorder %s125, 0
      %s128 = sadd.s32 %s127, 1
      %s129 = scalar_select %p126, %s127, %s128
      %p132 = pneg %p126
      %p133 = scmp.eq.s32.totalorder %s14, 3
      %p134 = por %p132, %p133
      %p135 = scmp.ne.s32.totalorder %s127, %s130
      %p136 = scmp.eq.s32.totalorder %s14, 0
      %p137 = por %p135, %p136
      %p138 = scmp.ne.s32.totalorder %s127, %s130
      %p139 = scmp.eq.s32.totalorder %s19, 3
      %p140 = por %p138, %p139
      %p141 = scmp.ne.s32.totalorder %s130, %s131
      %p142 = scmp.eq.s32.totalorder %s19, 0
      %p143 = por %p141, %p142
      %p144 = scmp.ne.s32.totalorder %s130, %s131
      %p145 = scmp.eq.s32.totalorder %s20, 3
      %p146 = por %p144, %p145
      %p148 = scmp.ne.s32.totalorder %s131, %s147
      %p149 = scmp.eq.s32.totalorder %s20, 0
      %p150 = por %p148, %p149
      %s152 = sadd.s32 %s151, 1
      %p155 = scmp.eq.s32.totalorder %s14, 3
      %p156 = scmp.ne.s32.totalorder %s151, %s153
      %p157 = scmp.eq.s32.totalorder %s14, 0
      %p158 = por %p156, %p157
      %p159 = scmp.ne.s32.totalorder %s151, %s153
      %p160 = scmp.eq.s32.totalorder %s19, 3
      %p161 = por %p159, %p160
      %p162 = scmp.ne.s32.totalorder %s153, %s154
      %p163 = scmp.eq.s32.totalorder %s19, 0
      %p164 = por %p162, %p163
      %p165 = scmp.ne.s32.totalorder %s153, %s154
      %p166 = scmp.eq.s32.totalorder %s20, 3
      %p167 = por %p165, %p166
      %p169 = scmp.ne.s32.totalorder %s154, %s168
      %p170 = scmp.eq.s32.totalorder %s20, 0
      %p171 = por %p169, %p170
      %s173 = sadd.s32 %s172, 1
      %p176 = scmp.eq.s32.totalorder %s14, 3
      %p177 = scmp.ne.s32.totalorder %s172, %s174
      %p178 = scmp.eq.s32.totalorder %s14, 0
      %p179 = por %p177, %p178
      %p180 = scmp.ne.s32.totalorder %s172, %s174
      %p181 = scmp.eq.s32.totalorder %s19, 3
      %p182 = por %p180, %p181
      %p183 = scmp.ne.s32.totalorder %s174, %s175
      %p184 = scmp.eq.s32.totalorder %s19, 0
      %p185 = por %p183, %p184
      %p186 = scmp.ne.s32.totalorder %s174, %s175
      %p187 = scmp.eq.s32.totalorder %s20, 3
      %p188 = por %p186, %p187
      %p190 = scmp.ne.s32.totalorder %s175, %s189
      %p191 = scmp.eq.s32.totalorder %s20, 0
      %p192 = por %p190, %p191
      %s194 = sadd.s32 %s193, 1
      %p197 = scmp.eq.s32.totalorder %s14, 3
      %p198 = scmp.ne.s32.totalorder %s193, %s195
      %p199 = scmp.eq.s32.totalorder %s14, 0
      %p200 = por %p198, %p199
      %p201 = scmp.ne.s32.totalorder %s193, %s195
      %p202 = scmp.eq.s32.totalorder %s19, 3
      %p203 = por %p201, %p202
      %p204 = scmp.ne.s32.totalorder %s195, %s196
      %p205 = scmp.eq.s32.totalorder %s19, 0
      %p206 = por %p204, %p205
      %p207 = scmp.ne.s32.totalorder %s195, %s196
      %p208 = scmp.eq.s32.totalorder %s20, 3
      %p209 = por %p207, %p208
      %p211 = scmp.ne.s32.totalorder %s196, %s210
      %p212 = scmp.eq.s32.totalorder %s20, 0
      %p213 = por %p211, %p212
      %s214 = ssub.s32 %s21, %s33
      %s215 = ssub.s32 %s22, %s29
      %s216 = sor.u32 %s214, %s215
      %p217 = scmp.eq.s32.totalorder %s216, 0
      %s219 = sadd.s32 %s218, 1
      %s220 = scalar_select %p217, %s218, %s219
      %p223 = pneg %p217
      %p224 = scmp.eq.s32.totalorder %s14, 3
      %p225 = por %p223, %p224
      %p226 = scmp.ne.s32.totalorder %s218, %s221
      %p227 = scmp.eq.s32.totalorder %s14, 0
      %p228 = por %p226, %p227
      %p229 = scmp.ne.s32.totalorder %s218, %s221
      %p230 = scmp.eq.s32.totalorder %s19, 3
      %p231 = por %p229, %p230
      %p232 = scmp.ne.s32.totalorder %s221, %s222
      %p233 = scmp.eq.s32.totalorder %s19, 0
      %p234 = por %p232, %p233
      %p235 = scmp.ne.s32.totalorder %s221, %s222
      %p236 = scmp.eq.s32.totalorder %s20, 3
      %p237 = por %p235, %p236
      %p239 = scmp.ne.s32.totalorder %s222, %s238
      %p240 = scmp.eq.s32.totalorder %s20, 0
      %p241 = por %p239, %p240
      %p242 = scmp.le.s32.totalorder 1, %s14
      %p243 = scmp.lt.s32.totalorder %s14, 5
      %p244 = pnand %p242, %p243
      %p245 = pneg %p244
      // Predicated region
      $region9: #{tpu_custom_call.1} parent=5 // pred_check
        _
      $region10: #{tpu_custom_call.1} parent=5 // pred_check_branch
        %247 = sbr.rel (%p244) target = $region12
      $region11: #{tpu_custom_call.1} parent=5 // pred_region
        %s248 = ssub.s32 %s14, 1
        // Predicated region
        $region13: #{tpu_custom_call.1} parent=11 // pred_check
          %p249 = pneg %p47
        $region14: #{tpu_custom_call.1} parent=11 // pred_check_branch
          %251 = sbr.rel (%p249) target = $region16
        $region15: #{tpu_custom_call.1} parent=11 // pred_region
          %253 = vsyncadd [#allocation4], 0
          %s255 = sshll.u32 %s0, 4
          %s256 = int_to_ptr.vmem [resolvable:$true] %s255
          %258 = dma.vmem_to_smem %s256, 16, [#allocation3], [#allocation4]
        $region16: #{tpu_custom_call.1} parent=11 // pred_fallthru
          _
        // Predicated region
        $region17: #{tpu_custom_call.1} parent=11 // pred_check
          %p259 = pneg %p164
        $region18: #{tpu_custom_call.1} parent=11 // pred_check_branch
          %261 = sbr.rel (%p259) target = $region20
        $region19: #{tpu_custom_call.1} parent=11 // pred_region
          _
        $region20: #{tpu_custom_call.1} parent=11 // pred_fallthru
          _
        // Predicated region
        $region21: #{tpu_custom_call.1} parent=11 // pred_check
          %p262 = pneg %p185
        $region22: #{tpu_custom_call.1} parent=11 // pred_check_branch
          %264 = sbr.rel (%p262) target = $region24
        $region23: #{tpu_custom_call.1} parent=11 // pred_region
          _
        $region24: #{tpu_custom_call.1} parent=11 // pred_fallthru
          _
        // Predicated region
        $region25: #{tpu_custom_call.1} parent=11 // pred_check
          %p265 = pneg %p206
        $region26: #{tpu_custom_call.1} parent=11 // pred_check_branch
          %267 = sbr.rel (%p265) target = $region28
        $region27: #{tpu_custom_call.1} parent=11 // pred_region
          _
        $region28: #{tpu_custom_call.1} parent=11 // pred_fallthru
          _
      $region12: #{tpu_custom_call.1} parent=5 // pred_fallthru
        _
      %p268 = scmp.lt.s32.totalorder %s14, 4
      // Predicated region
      $region29: #{tpu_custom_call.1} parent=5 // pred_check
        %p269 = pneg %p268
      $region30: #{tpu_custom_call.1} parent=5 // pred_check_branch
        %271 = sbr.rel (%p269) target = $region32
      $region31: #{tpu_custom_call.1} parent=5 // pred_region
        // Predicated region
        $region33: #{tpu_custom_call.1} parent=31 // pred_check
          %p272 = pneg %p75
        $region34: #{tpu_custom_call.1} parent=31 // pred_check_branch
          %274 = sbr.rel (%p272) target = $region36
        $region35: #{tpu_custom_call.1} parent=31 // pred_region
          %s275 = ssub.s32 %s22, 1
          %p276 = scmp.gt.s32.totalorder %s275, 0
          %s277 = scalar_select %p276, %s275, 0
          %s278 = smul.u32 16, %s277
          %p279 = scmp.lt.s32.totalorder %s21, 1
          %s280 = scalar_select %p279, %s21, 1
          %p281 = scmp.lt.s32.totalorder %s278, 31
          %s282 = scalar_select %p281, %s278, 31
          %s283 = smul.addr %s280, 32
          %s284 = sadd.s32 %s282, %s283
          %s285 = smul.addr %s284, 4
          %s286 = scalar_lea.vmem %s1, %s285
          %s287 = ssub.s32 %s22, 1
          %p288 = scmp.gt.s32.totalorder %s287, 0
          %s289 = scalar_select %p288, %s287, 0
          %s290 = smul.u32 16, %s289
        $region36: #{tpu_custom_call.1} parent=31 // pred_fallthru
          _
        // Predicated region
        $region37: #{tpu_custom_call.1} parent=31 // pred_check
          %p291 = pneg %p103
        $region38: #{tpu_custom_call.1} parent=31 // pred_check_branch
          %293 = sbr.rel (%p291) target = $region40
        $region39: #{tpu_custom_call.1} parent=31 // pred_region
          %s294 = smul.u32 16, %s22
          %p295 = scmp.lt.s32.totalorder %s21, 1
          %s296 = scalar_select %p295, %s21, 1
          %p297 = scmp.lt.s32.totalorder %s294, 31
          %s298 = scalar_select %p297, %s294, 31
          %s299 = smul.addr %s296, 32
          %s300 = sadd.s32 %s298, %s299
          %s301 = smul.addr %s300, 4
          %s302 = scalar_lea.vmem %s2, %s301
          %s303 = smul.u32 16, %s22
        $region40: #{tpu_custom_call.1} parent=31 // pred_fallthru
          _
        // Predicated region
        $region41: #{tpu_custom_call.1} parent=31 // pred_check
          %p304 = pneg %p137
        $region42: #{tpu_custom_call.1} parent=31 // pred_check_branch
          %306 = sbr.rel (%p304) target = $region44
        $region43: #{tpu_custom_call.1} parent=31 // pred_region
          %s307 = sadd.s32 %s22, 1
          %p308 = scmp.lt.s32.totalorder %s307, 1
          %s309 = scalar_select %p308, %s307, 1
          %s310 = smul.u32 16, %s309
          %p311 = scmp.lt.s32.totalorder %s21, 1
          %s312 = scalar_select %p311, %s21, 1
          %p313 = scmp.lt.s32.totalorder %s310, 31
          %s314 = scalar_select %p313, %s310, 31
          %s315 = smul.addr %s312, 32
          %s316 = sadd.s32 %s314, %s315
          %s317 = smul.addr %s316, 4
          %s318 = scalar_lea.vmem %s3, %s317
          %s319 = sadd.s32 %s22, 1
          %p320 = scmp.lt.s32.totalorder %s319, 1
          %s321 = scalar_select %p320, %s319, 1
          %s322 = smul.u32 16, %s321
        $region44: #{tpu_custom_call.1} parent=31 // pred_fallthru
          _
      $region32: #{tpu_custom_call.1} parent=5 // pred_fallthru
        _
      %p323 = scmp.le.s32.totalorder 1, %s14
      %p324 = scmp.lt.s32.totalorder %s14, 5
      %p325 = pnand %p323, %p324
      %p326 = pneg %p325
      // Predicated region
      $region45: #{tpu_custom_call.1} parent=5 // pred_check
        _
      $region46: #{tpu_custom_call.1} parent=5 // pred_check_branch
        %328 = sbr.rel (%p325) target = $region48
      $region47: #{tpu_custom_call.1} parent=5 // pred_region
        %s329 = ssub.s32 %s14, 1
        // Predicated region
        $region49: #{tpu_custom_call.1} parent=47 // pred_check
          %p330 = pneg %p47
        $region50: #{tpu_custom_call.1} parent=47 // pred_check_branch
          %332 = sbr.rel (%p330) target = $region52
        $region51: #{tpu_custom_call.1} parent=47 // pred_region
          %334 = dma.done [#allocation4], 16
        $region52: #{tpu_custom_call.1} parent=47 // pred_fallthru
          _
        %335 = sfence
        %p336 = pneg %p47
        %p337 = pneg %p44
        %s338 = ssub.s32 %s24, 1
        %p339 = scmp.gt.s32.totalorder %s338, 0
        %s340 = scalar_select %p339, %s338, 0
        %s341 = smul.u32 16, %s340
        %p342 = scmp.lt.s32.totalorder %s23, 1
        %s343 = scalar_select %p342, %s23, 1
        %p344 = scmp.lt.s32.totalorder %s341, 31
        %s345 = scalar_select %p344, %s341, 31
        %s346 = smul.addr %s343, 32
        %s347 = sadd.s32 %s345, %s346
        %s348 = smul.addr %s347, 4
        %s349 = scalar_lea.vmem %s1, %s348
        %p350 = pneg %p81
        %p351 = pneg %p78
        %s352 = smul.u32 16, %s24
        %p353 = scmp.lt.s32.totalorder %s23, 1
        %s354 = scalar_select %p353, %s23, 1
        %p355 = scmp.lt.s32.totalorder %s352, 31
        %s356 = scalar_select %p355, %s352, 31
        %s357 = smul.addr %s354, 32
        %s358 = sadd.s32 %s356, %s357
        %s359 = smul.addr %s358, 4
        %s360 = scalar_lea.vmem %s2, %s359
        %p361 = pneg %p109
        %p362 = pneg %p106
        %s363 = sadd.s32 %s24, 1
        %p364 = scmp.lt.s32.totalorder %s363, 1
        %s365 = scalar_select %p364, %s363, 1
        %s366 = smul.u32 16, %s365
        %p367 = scmp.lt.s32.totalorder %s23, 1
        %s368 = scalar_select %p367, %s23, 1
        %p369 = scmp.lt.s32.totalorder %s366, 31
        %s370 = scalar_select %p369, %s366, 31
        %s371 = smul.addr %s368, 32
        %s372 = sadd.s32 %s370, %s371
        %s373 = smul.addr %s372, 4
        %s374 = scalar_lea.vmem %s3, %s373
        %p375 = pneg %p143
        %p376 = pneg %p140
        %p377 = pneg %p164
        %p378 = pneg %p161
        %p379 = pneg %p185
        %p380 = pneg %p182
        %p381 = pneg %p206
        %p382 = pneg %p203
        %p383 = pneg %p234
        %p384 = pneg %p231
        %s385 = smul.u32 16, %s24
        %p386 = scmp.lt.s32.totalorder %s23, 1
        %s387 = scalar_select %p386, %s23, 1
        %p388 = scmp.lt.s32.totalorder %s385, 31
        %s389 = scalar_select %p388, %s385, 31
        %s390 = smul.addr %s387, 32
        %s391 = sadd.s32 %s389, %s390
        %s392 = smul.addr %s391, 8
        %s393 = scalar_lea.vmem %s7, %s392
        %s394 = ssub.s32 %s24, 1
        %p395 = scmp.gt.s32.totalorder %s394, 0
        %s396 = scalar_select %p395, %s394, 0
        %s397 = smul.u32 16, %s396
        %p398 = scmp.lt.s32.totalorder %s23, 1
        %s399 = scalar_select %p398, %s23, 1
        %p400 = scmp.lt.s32.totalorder %s397, 31
        %s401 = scalar_select %p400, %s397, 31
        %s402 = smul.addr %s399, 32
        %s403 = sadd.s32 %s401, %s402
        %s404 = smul.addr %s403, 4
        %s405 = scalar_lea.vmem %s1, %s404
        %s406 = ssub.s32 %s24, 1
        %p407 = scmp.gt.s32.totalorder %s406, 0
        %s408 = scalar_select %p407, %s406, 0
        %s409 = smul.u32 16, %s408
        %s410 = smul.u32 16, %s24
        %p411 = scmp.lt.s32.totalorder %s23, 1
        %s412 = scalar_select %p411, %s23, 1
        %p413 = scmp.lt.s32.totalorder %s410, 31
        %s414 = scalar_select %p413, %s410, 31
        %s415 = smul.addr %s412, 32
        %s416 = sadd.s32 %s414, %s415
        %s417 = smul.addr %s416, 4
        %s418 = scalar_lea.vmem %s2, %s417
        %s419 = smul.u32 16, %s24
        %s420 = sadd.s32 %s24, 1
        %p421 = scmp.lt.s32.totalorder %s420, 1
        %s422 = scalar_select %p421, %s420, 1
        %s423 = smul.u32 16, %s422
        %p424 = scmp.lt.s32.totalorder %s23, 1
        %s425 = scalar_select %p424, %s23, 1
        %p426 = scmp.lt.s32.totalorder %s423, 31
        %s427 = scalar_select %p426, %s423, 31
        %s428 = smul.addr %s425, 32
        %s429 = sadd.s32 %s427, %s428
        %s430 = smul.addr %s429, 4
        %s431 = scalar_lea.vmem %s3, %s430
        %s432 = sadd.s32 %s24, 1
        %p433 = scmp.lt.s32.totalorder %s432, 1
        %s434 = scalar_select %p433, %s432, 1
        %s435 = smul.u32 16, %s434
        %s436 = smul.u32 16, %s24
        %p437 = scmp.lt.s32.totalorder %s23, 1
        %s438 = scalar_select %p437, %s23, 1
        %p439 = scmp.lt.s32.totalorder %s436, 31
        %s440 = scalar_select %p439, %s436, 31
        %s441 = smul.addr %s438, 32
        %s442 = sadd.s32 %s440, %s441
        %s443 = smul.addr %s442, 8
        %s444 = scalar_lea.vmem %s7, %s443
        %s445 = smul.u32 16, %s24
        %v447 = vld [vmem:[%s405 + $0x28] sm:$0xf]
        %v448 = vld [vmem:[%s405 + $0x2c] sm:$0xf]
        %v449 = vld [vmem:[%s405 + $0x30] sm:$0xf]
        %v450 = vld [vmem:[%s405 + $0x34] sm:$0xf]
        %v451 = vld [vmem:[%s405 + $0x38] sm:$0xf]
        %v452 = vld [vmem:[%s405 + $0x3c] sm:$0xf]
        %v453 = vld [vmem:[%s418] sm:$0xf]
        %v454 = vld [vmem:[%s418 + $0x4] sm:$0xf]
        %v455 = vld [vmem:[%s418 + $0x8] sm:$0xf]
        %v456 = vld [vmem:[%s418 + $0xc] sm:$0xf]
        %v457 = vld [vmem:[%s418 + $0x10] sm:$0xf]
        %v458 = vld [vmem:[%s418 + $0x14] sm:$0xf]
        %v459 = vld [vmem:[%s418 + $0x18] sm:$0xf]
        %v460 = vld [vmem:[%s418 + $0x1c] sm:$0xf]
        %v461 = vld [vmem:[%s418 + $0x20] sm:$0xf]
        %v462 = vld [vmem:[%s418 + $0x24] sm:$0xf]
        %v463 = vld [vmem:[%s418 + $0x28] sm:$0xf]
        %v464 = vld [vmem:[%s418 + $0x2c] sm:$0xf]
        %v465 = vld [vmem:[%s418 + $0x30] sm:$0xf]
        %v466 = vld [vmem:[%s418 + $0x34] sm:$0xf]
        %v467 = vld [vmem:[%s418 + $0x38] sm:$0xf]
        %v468 = vld [vmem:[%s418 + $0x3c] sm:$0xf]
        %v469 = vld [vmem:[%s431] sm:$0xf]
        %v470 = vld [vmem:[%s431 + $0x4] sm:$0xf]
        %v471 = vld [vmem:[%s431 + $0x8] sm:$0xf]
        %v472 = vld [vmem:[%s431 + $0xc] sm:$0xf]
        %v473 = vld [vmem:[%s431 + $0x10] sm:$0xf]
        %v474 = vld [vmem:[%s431 + $0x14] sm:$0xf]
        %v481 = vunpack.c.l.b16 %v447
        %v482 = vunpack.c.l.b16 %v448
        %v483 = vunpack.c.l.b16 %v449
        %v484 = vunpack.c.l.b16 %v450
        %v485 = vunpack.c.l.b16 %v451
        %v486 = vunpack.c.l.b16 %v452
        %v487 = vpack.c.b16 %v482, %v481
        %v488 = vpack.c.b16 %v484, %v483
        %v489 = vpack.c.b16 %v486, %v485
        %v506 = vunpack.c.l.b16 %v453
        %v507 = vunpack.c.l.b16 %v454
        %v508 = vunpack.c.l.b16 %v455
        %v509 = vunpack.c.l.b16 %v456
        %v510 = vunpack.c.l.b16 %v457
        %v511 = vunpack.c.l.b16 %v458
        %v512 = vunpack.c.l.b16 %v459
        %v513 = vunpack.c.l.b16 %v460
        %v514 = vunpack.c.l.b16 %v461
        %v515 = vunpack.c.l.b16 %v462
        %v516 = vunpack.c.l.b16 %v463
        %v517 = vunpack.c.l.b16 %v464
        %v518 = vunpack.c.l.b16 %v465
        %v519 = vunpack.c.l.b16 %v466
        %v520 = vunpack.c.l.b16 %v467
        %v521 = vunpack.c.l.b16 %v468
        %v522 = vpack.c.b16 %v507, %v506
        %v523 = vpack.c.b16 %v509, %v508
        %v524 = vpack.c.b16 %v511, %v510
        %v525 = vpack.c.b16 %v513, %v512
        %v526 = vpack.c.b16 %v515, %v514
        %v527 = vpack.c.b16 %v517, %v516
        %v528 = vpack.c.b16 %v519, %v518
        %v529 = vpack.c.b16 %v521, %v520
        %v536 = vunpack.c.l.b16 %v469
        %v537 = vunpack.c.l.b16 %v470
        %v538 = vunpack.c.l.b16 %v471
        %v539 = vunpack.c.l.b16 %v472
        %v540 = vunpack.c.l.b16 %v473
        %v541 = vunpack.c.l.b16 %v474
        %v542 = vpack.c.b16 %v537, %v536
        %v543 = vpack.c.b16 %v539, %v538
        %v544 = vpack.c.b16 %v541, %v540
        %v545 = vld [vmem:[%s4] sm:$0x3]
        %vm546 = vcmask 31744
        %v548 = vsel %vm546, %v487, 0
        %v551 = vsel %vm546, %v488, 0
        %v554 = vsel %vm546, %v489, 0
        %v557 = vsel %vm546, %v522, 0
        %v560 = vsel %vm546, %v523, 0
        %v563 = vsel %vm546, %v524, 0
        %v566 = vsel %vm546, %v525, 0
        %v569 = vsel %vm546, %v526, 0
        %v572 = vsel %vm546, %v527, 0
        %v575 = vsel %vm546, %v528, 0
        %v578 = vsel %vm546, %v529, 0
        %v581 = vsel %vm546, %v542, 0
        %v584 = vsel %vm546, %v543, 0
        %v587 = vsel %vm546, %v544, 0
        %vm589 = vcmask 1041408
        %v591 = vsel %vm589, %v545, 0
        %593 = vmatpush.bf16.msra.mxu0 0
        %594 = vmatpush.bf16.msra.mxu0 0
        %595 = vmatpush.bf16.msra.mxu0 0
        %596 = vmatpush.bf16.msra.mxu0 0
        %597 = vmatpush.bf16.msra.mxu0 0
        %598 = vmatpush.bf16.msra.mxu0 0
        %599 = vmatpush.bf16.msra.mxu0 0
        %600 = vmatpush.bf16.msra.mxu0 %v591
        %601 = vmatmul.bf16.gmra.mxu0 %v548
        %v602 = vpop.f32.mrf.mxu0
        %v603 = vadd.f32 0.0, %v602
        %v604 = vpop.f32.mrf.mxu0
        %v605 = vadd.f32 0.0, %v604
        %606 = vmatmul.bf16.gmra.mxu0 %v551
        %v607 = vpop.f32.mrf.mxu0
        %v608 = vadd.f32 0.0, %v607
        %v609 = vpop.f32.mrf.mxu0
        %v610 = vadd.f32 0.0, %v609
        %611 = vmatmul.bf16.gmra.mxu0 %v554
        %v612 = vpop.f32.mrf.mxu0
        %v613 = vadd.f32 0.0, %v612
        %v614 = vpop.f32.mrf.mxu0
        %v615 = vadd.f32 0.0, %v614
        %616 = vmatmul.bf16.gmra.mxu0 %v557
        %v617 = vpop.f32.mrf.mxu0
        %v618 = vadd.f32 0.0, %v617
        %v619 = vpop.f32.mrf.mxu0
        %v620 = vadd.f32 0.0, %v619
        %621 = vmatmul.bf16.gmra.mxu0 %v560
        %v622 = vpop.f32.mrf.mxu0
        %v623 = vadd.f32 0.0, %v622
        %v624 = vpop.f32.mrf.mxu0
        %v625 = vadd.f32 0.0, %v624
        %626 = vmatmul.bf16.gmra.mxu0 %v563
        %v627 = vpop.f32.mrf.mxu0
        %v628 = vadd.f32 0.0, %v627
        %v629 = vpop.f32.mrf.mxu0
        %v630 = vadd.f32 0.0, %v629
        %631 = vmatmul.bf16.gmra.mxu0 %v566
        %v632 = vpop.f32.mrf.mxu0
        %v633 = vadd.f32 0.0, %v632
        %v634 = vpop.f32.mrf.mxu0
        %v635 = vadd.f32 0.0, %v634
        %636 = vmatmul.bf16.gmra.mxu0 %v569
        %v637 = vpop.f32.mrf.mxu0
        %v638 = vadd.f32 0.0, %v637
        %v639 = vpop.f32.mrf.mxu0
        %v640 = vadd.f32 0.0, %v639
        %641 = vmatmul.bf16.gmra.mxu0 %v572
        %v642 = vpop.f32.mrf.mxu0
        %v643 = vadd.f32 0.0, %v642
        %v644 = vpop.f32.mrf.mxu0
        %v645 = vadd.f32 0.0, %v644
        %646 = vmatmul.bf16.gmra.mxu0 %v575
        %v647 = vpop.f32.mrf.mxu0
        %v648 = vadd.f32 0.0, %v647
        %v649 = vpop.f32.mrf.mxu0
        %v650 = vadd.f32 0.0, %v649
        %651 = vmatmul.bf16.gmra.mxu0 %v578
        %v652 = vpop.f32.mrf.mxu0
        %v653 = vadd.f32 0.0, %v652
        %v654 = vpop.f32.mrf.mxu0
        %v655 = vadd.f32 0.0, %v654
        %656 = vmatmul.bf16.gmra.mxu0 %v581
        %v657 = vpop.f32.mrf.mxu0
        %v658 = vadd.f32 0.0, %v657
        %v659 = vpop.f32.mrf.mxu0
        %v660 = vadd.f32 0.0, %v659
        %661 = vmatmul.bf16.gmra.mxu0 %v584
        %v662 = vpop.f32.mrf.mxu0
        %v663 = vadd.f32 0.0, %v662
        %v664 = vpop.f32.mrf.mxu0
        %v665 = vadd.f32 0.0, %v664
        %666 = vmatmul.bf16.gmra.mxu0 %v587
        %v667 = vpop.f32.mrf.mxu0
        %v668 = vadd.f32 0.0, %v667
        %v669 = vpop.f32.mrf.mxu0
        %v670 = vadd.f32 0.0, %v669
        %671 = vdwg.mxu0
        %s672 = sld [smem:[#allocation3]]
        %v673 = vmax.f32 %v603, 0.0
        %v674 = vmax.f32 %v605, 0.0
        %v675 = vmax.f32 %v608, 0.0
        %v676 = vmax.f32 %v610, 0.0
        %v677 = vmax.f32 %v613, 0.0
        %v678 = vmax.f32 %v615, 0.0
        %v679 = vmax.f32 %v618, 0.0
        %v680 = vmax.f32 %v620, 0.0
        %v681 = vmax.f32 %v623, 0.0
        %v682 = vmax.f32 %v625, 0.0
        %v683 = vmax.f32 %v628, 0.0
        %v684 = vmax.f32 %v630, 0.0
        %v685 = vmax.f32 %v633, 0.0
        %v686 = vmax.f32 %v635, 0.0
        %v687 = vmax.f32 %v638, 0.0
        %v688 = vmax.f32 %v640, 0.0
        %v689 = vmax.f32 %v643, 0.0
        %v690 = vmax.f32 %v645, 0.0
        %v691 = vmax.f32 %v648, 0.0
        %v692 = vmax.f32 %v650, 0.0
        %v693 = vmax.f32 %v653, 0.0
        %v694 = vmax.f32 %v655, 0.0
        %v695 = vmax.f32 %v658, 0.0
        %v696 = vmax.f32 %v660, 0.0
        %v697 = vmax.f32 %v663, 0.0
        %v698 = vmax.f32 %v665, 0.0
        %v699 = vmax.f32 %v668, 0.0
        %v700 = vmax.f32 %v670, 0.0
        %v701 = vmul.f32 %v673, %v673
        %v702 = vmul.f32 %v674, %v674
        %v703 = vmul.f32 %v675, %v675
        %v704 = vmul.f32 %v676, %v676
        %v705 = vmul.f32 %v677, %v677
        %v706 = vmul.f32 %v678, %v678
        %v707 = vmul.f32 %v679, %v679
        %v708 = vmul.f32 %v680, %v680
        %v709 = vmul.f32 %v681, %v681
        %v710 = vmul.f32 %v682, %v682
        %v711 = vmul.f32 %v683, %v683
        %v712 = vmul.f32 %v684, %v684
        %v713 = vmul.f32 %v685, %v685
        %v714 = vmul.f32 %v686, %v686
        %v715 = vmul.f32 %v687, %v687
        %v716 = vmul.f32 %v688, %v688
        %v717 = vmul.f32 %v689, %v689
        %v718 = vmul.f32 %v690, %v690
        %v719 = vmul.f32 %v691, %v691
        %v720 = vmul.f32 %v692, %v692
        %v721 = vmul.f32 %v693, %v693
        %v722 = vmul.f32 %v694, %v694
        %v723 = vmul.f32 %v695, %v695
        %v724 = vmul.f32 %v696, %v696
        %v725 = vmul.f32 %v697, %v697
        %v726 = vmul.f32 %v698, %v698
        %v727 = vmul.f32 %v699, %v699
        %v728 = vmul.f32 %v700, %v700
        %v729 = vstv %s672
        %v730 = vmul.f32 %v729, %v701
        %v731 = vmul.f32 %v729, %v702
        %v732 = vmul.f32 %v729, %v703
        %v733 = vmul.f32 %v729, %v704
        %v734 = vmul.f32 %v729, %v705
        %v735 = vmul.f32 %v729, %v706
        %v736 = vmul.f32 %v729, %v707
        %v737 = vmul.f32 %v729, %v708
        %v738 = vmul.f32 %v729, %v709
        %v739 = vmul.f32 %v729, %v710
        %v740 = vmul.f32 %v729, %v711
        %v741 = vmul.f32 %v729, %v712
        %v742 = vmul.f32 %v729, %v713
        %v743 = vmul.f32 %v729, %v714
        %v744 = vmul.f32 %v729, %v715
        %v745 = vmul.f32 %v729, %v716
        %v746 = vmul.f32 %v729, %v717
        %v747 = vmul.f32 %v729, %v718
        %v748 = vmul.f32 %v729, %v719
        %v749 = vmul.f32 %v729, %v720
        %v750 = vmul.f32 %v729, %v721
        %v751 = vmul.f32 %v729, %v722
        %v752 = vmul.f32 %v729, %v723
        %v753 = vmul.f32 %v729, %v724
        %v754 = vmul.f32 %v729, %v725
        %v755 = vmul.f32 %v729, %v726
        %v756 = vmul.f32 %v729, %v727
        %v757 = vmul.f32 %v729, %v728
        %s758 = sld [smem:[#allocation3 + $0x1]]
        %v759 = vstv %s758
        %v760 = vadd.f32 %v730, %v759
        %v761 = vadd.f32 %v731, %v759
        %v762 = vadd.f32 %v732, %v759
        %v763 = vadd.f32 %v733, %v759
        %v764 = vadd.f32 %v734, %v759
        %v765 = vadd.f32 %v735, %v759
        %v766 = vadd.f32 %v736, %v759
        %v767 = vadd.f32 %v737, %v759
        %v768 = vadd.f32 %v738, %v759
        %v769 = vadd.f32 %v739, %v759
        %v770 = vadd.f32 %v740, %v759
        %v771 = vadd.f32 %v741, %v759
        %v772 = vadd.f32 %v742, %v759
        %v773 = vadd.f32 %v743, %v759
        %v774 = vadd.f32 %v744, %v759
        %v775 = vadd.f32 %v745, %v759
        %v776 = vadd.f32 %v746, %v759
        %v777 = vadd.f32 %v747, %v759
        %v778 = vadd.f32 %v748, %v759
        %v779 = vadd.f32 %v749, %v759
        %v780 = vadd.f32 %v750, %v759
        %v781 = vadd.f32 %v751, %v759
        %v782 = vadd.f32 %v752, %v759
        %v783 = vadd.f32 %v753, %v759
        %v784 = vadd.f32 %v754, %v759
        %v785 = vadd.f32 %v755, %v759
        %v786 = vadd.f32 %v756, %v759
        %v787 = vadd.f32 %v757, %v759
        %vm788 = vcmask 59392
        %789 = vst.msk [vmem:[#allocation2] sm:$0x7] %vm788, 0.0
        %790 = vst.msk [vmem:[#allocation2 + $0x18] sm:$0x7] %vm788, 0.0
        %791 = vst.msk [vmem:[#allocation2 + $0x30] sm:$0x7] %vm788, 0.0
        %792 = vst.msk [vmem:[#allocation2 + $0x48] sm:$0x7] %vm788, 0.0
        %793 = vst.msk [vmem:[#allocation2 + $0x60] sm:$0x7] %vm788, 0.0
        %794 = vst.msk [vmem:[#allocation2 + $0x78] sm:$0x7] %vm788, 0.0
        %795 = vst.msk [vmem:[#allocation2 + $0x90] sm:$0x7] %vm788, 0.0
        %796 = vst.msk [vmem:[#allocation2 + $0xa8] sm:$0x7] %vm788, 0.0
        %797 = vst.msk [vmem:[#allocation2 + $0xc0] sm:$0x7] %vm788, 0.0
        %798 = vst.msk [vmem:[#allocation2 + $0xd8] sm:$0x7] %vm788, 0.0
        %799 = vst.msk [vmem:[#allocation2 + $0xf0] sm:$0x7] %vm788, 0.0
        %800 = vst.msk [vmem:[#allocation2 + $0x108] sm:$0x7] %vm788, 0.0
        %801 = vst.msk [vmem:[#allocation2 + $0x120] sm:$0x7] %vm788, 0.0
        %802 = vst.msk [vmem:[#allocation2 + $0x138] sm:$0x7] %vm788, 0.0
        %803 = vst.msk [vmem:[#allocation2 + $0x13] sm:$0x7] %vm788, 0.0
        %804 = vst.msk [vmem:[#allocation2 + $0x2b] sm:$0x7] %vm788, 0.0
        %805 = vst.msk [vmem:[#allocation2 + $0x43] sm:$0x7] %vm788, 0.0
        %806 = vst.msk [vmem:[#allocation2 + $0x5b] sm:$0x7] %vm788, 0.0
        %807 = vst.msk [vmem:[#allocation2 + $0x73] sm:$0x7] %vm788, 0.0
        %808 = vst.msk [vmem:[#allocation2 + $0x8b] sm:$0x7] %vm788, 0.0
        %809 = vst.msk [vmem:[#allocation2 + $0xa3] sm:$0x7] %vm788, 0.0
        %810 = vst.msk [vmem:[#allocation2 + $0xbb] sm:$0x7] %vm788, 0.0
        %811 = vst.msk [vmem:[#allocation2 + $0xd3] sm:$0x7] %vm788, 0.0
        %812 = vst.msk [vmem:[#allocation2 + $0xeb] sm:$0x7] %vm788, 0.0
        %813 = vst.msk [vmem:[#allocation2 + $0x103] sm:$0x7] %vm788, 0.0
        %814 = vst.msk [vmem:[#allocation2 + $0x11b] sm:$0x7] %vm788, 0.0
        %815 = vst.msk [vmem:[#allocation2 + $0x133] sm:$0x7] %vm788, 0.0
        %816 = vst.msk [vmem:[#allocation2 + $0x14b] sm:$0x7] %vm788, 0.0
        %vm817 = vcmask 64512
        %818 = vst.msk [vmem:[#allocation2 + $0x3] sm:$0xff] %vm817, %v760
        %819 = vst.msk [vmem:[#allocation2 + $0xb] sm:$0xff] %vm817, %v761
        %820 = vst.msk [vmem:[#allocation2 + $0x1b] sm:$0xff] %vm817, %v762
        %821 = vst.msk [vmem:[#allocation2 + $0x23] sm:$0xff] %vm817, %v763
        %822 = vst.msk [vmem:[#allocation2 + $0x33] sm:$0xff] %vm817, %v764
        %823 = vst.msk [vmem:[#allocation2 + $0x3b] sm:$0xff] %vm817, %v765
        %824 = vst.msk [vmem:[#allocation2 + $0x4b] sm:$0xff] %vm817, %v766
        %825 = vst.msk [vmem:[#allocation2 + $0x53] sm:$0xff] %vm817, %v767
        %826 = vst.msk [vmem:[#allocation2 + $0x63] sm:$0xff] %vm817, %v768
        %827 = vst.msk [vmem:[#allocation2 + $0x6b] sm:$0xff] %vm817, %v769
        %828 = vst.msk [vmem:[#allocation2 + $0x7b] sm:$0xff] %vm817, %v770
        %829 = vst.msk [vmem:[#allocation2 + $0x83] sm:$0xff] %vm817, %v771
        %830 = vst.msk [vmem:[#allocation2 + $0x93] sm:$0xff] %vm817, %v772
        %831 = vst.msk [vmem:[#allocation2 + $0x9b] sm:$0xff] %vm817, %v773
        %832 = vst.msk [vmem:[#allocation2 + $0xab] sm:$0xff] %vm817, %v774
        %833 = vst.msk [vmem:[#allocation2 + $0xb3] sm:$0xff] %vm817, %v775
        %834 = vst.msk [vmem:[#allocation2 + $0xc3] sm:$0xff] %vm817, %v776
        %835 = vst.msk [vmem:[#allocation2 + $0xcb] sm:$0xff] %vm817, %v777
        %836 = vst.msk [vmem:[#allocation2 + $0xdb] sm:$0xff] %vm817, %v778
        %837 = vst.msk [vmem:[#allocation2 + $0xe3] sm:$0xff] %vm817, %v779
        %838 = vst.msk [vmem:[#allocation2 + $0xf3] sm:$0xff] %vm817, %v780
        %839 = vst.msk [vmem:[#allocation2 + $0xfb] sm:$0xff] %vm817, %v781
        %840 = vst.msk [vmem:[#allocation2 + $0x10b] sm:$0xff] %vm817, %v782
        %841 = vst.msk [vmem:[#allocation2 + $0x113] sm:$0xff] %vm817, %v783
        %842 = vst.msk [vmem:[#allocation2 + $0x123] sm:$0xff] %vm817, %v784
        %843 = vst.msk [vmem:[#allocation2 + $0x12b] sm:$0xff] %vm817, %v785
        %844 = vst.msk [vmem:[#allocation2 + $0x13b] sm:$0xff] %vm817, %v786
        %845 = vst.msk [vmem:[#allocation2 + $0x143] sm:$0xff] %vm817, %v787
        %p846 = scmp.eq.s32.totalorder %s24, 0
        // Predicated region
        $region53: #{tpu_custom_call.1} parent=47 // pred_check
          %p847 = pneg %p846
        $region54: #{tpu_custom_call.1} parent=47 // pred_check_branch
          %849 = sbr.rel (%p847) target = $region56
        $region55: #{tpu_custom_call.1} parent=47 // pred_region
          %850 = vst.msk [vmem:[#allocation2] sm:$0xff] %vm817, 0.0
          %851 = vst.msk [vmem:[#allocation2 + $0x8] sm:$0xff] %vm817, 0.0
          %vm852 = vcmask 62464
          %853 = vst.msk [vmem:[#allocation2 + $0x10] sm:$0x3f] %vm852, 0.0
          %854 = vst.msk [vmem:[#allocation2 + $0x18] sm:$0xff] %vm817, 0.0
          %855 = vst.msk [vmem:[#allocation2 + $0x20] sm:$0xff] %vm817, 0.0
          %856 = vst.msk [vmem:[#allocation2 + $0x28] sm:$0x3f] %vm852, 0.0
          %857 = vst.msk [vmem:[#allocation2 + $0x30] sm:$0xff] %vm817, 0.0
          %858 = vst.msk [vmem:[#allocation2 + $0x38] sm:$0xff] %vm817, 0.0
          %859 = vst.msk [vmem:[#allocation2 + $0x40] sm:$0x3f] %vm852, 0.0
        $region56: #{tpu_custom_call.1} parent=47 // pred_fallthru
          _
        %p860 = scmp.eq.s32.totalorder %s24, 1
        // Predicated region
        $region57: #{tpu_custom_call.1} parent=47 // pred_check
          %p861 = pneg %p860
        $region58: #{tpu_custom_call.1} parent=47 // pred_check_branch
          %863 = sbr.rel (%p861) target = $region60
        $region59: #{tpu_custom_call.1} parent=47 // pred_region
          %s864 = scalar_lea.vmem [#allocation2], 264
          %865 = vst.msk [vmem:[%s864] sm:$0xff] %vm817, 0.0
          %866 = vst.msk [vmem:[%s864 + $0x8] sm:$0xff] %vm817, 0.0
          %vm867 = vcmask 62464
          %868 = vst.msk [vmem:[%s864 + $0x10] sm:$0x3f] %vm867, 0.0
          %869 = vst.msk [vmem:[%s864 + $0x18] sm:$0xff] %vm817, 0.0
          %870 = vst.msk [vmem:[%s864 + $0x20] sm:$0xff] %vm817, 0.0
          %871 = vst.msk [vmem:[%s864 + $0x28] sm:$0x3f] %vm867, 0.0
          %872 = vst.msk [vmem:[%s864 + $0x30] sm:$0xff] %vm817, 0.0
          %873 = vst.msk [vmem:[%s864 + $0x38] sm:$0xff] %vm817, 0.0
          %874 = vst.msk [vmem:[%s864 + $0x40] sm:$0x3f] %vm867, 0.0
        $region60: #{tpu_custom_call.1} parent=47 // pred_fallthru
          _
        %v875 = vld [vmem:[#allocation2] sm:$0xff]
        %v876 = vld [vmem:[#allocation2 + $0x8] sm:$0xff]
        %v877 = vld [vmem:[#allocation2 + $0x10] sm:$0x3f]
        %v878 = vld [vmem:[#allocation2 + $0x18] sm:$0xff]
        %v879 = vld [vmem:[#allocation2 + $0x20] sm:$0xff]
        %v880 = vld [vmem:[#allocation2 + $0x28] sm:$0x3f]
        %v881 = vld [vmem:[#allocation2 + $0x30] sm:$0xff]
        %v882 = vld [vmem:[#allocation2 + $0x38] sm:$0xff]
        %v883 = vld [vmem:[#allocation2 + $0x40] sm:$0x3f]
        %v884 = vld [vmem:[#allocation2 + $0x48] sm:$0xff]
        %v885 = vld [vmem:[#allocation2 + $0x50] sm:$0xff]
        %v886 = vld [vmem:[#allocation2 + $0x58] sm:$0x3f]
        %v887 = vld [vmem:[#allocation2 + $0x60] sm:$0xff]
        %v888 = vld [vmem:[#allocation2 + $0x68] sm:$0xff]
        %v889 = vld [vmem:[#allocation2 + $0x70] sm:$0x3f]
        %v890 = vld [vmem:[#allocation2 + $0x78] sm:$0xff]
        %v891 = vld [vmem:[#allocation2 + $0x80] sm:$0xff]
        %v892 = vld [vmem:[#allocation2 + $0x88] sm:$0x3f]
        %v893 = vld [vmem:[#allocation2 + $0x90] sm:$0xff]
        %v894 = vld [vmem:[#allocation2 + $0x98] sm:$0xff]
        %v895 = vld [vmem:[#allocation2 + $0xa0] sm:$0x3f]
        %v896 = vld [vmem:[#allocation2 + $0xa8] sm:$0xff]
        %v897 = vld [vmem:[#allocation2 + $0xb0] sm:$0xff]
        %v898 = vld [vmem:[#allocation2 + $0xb8] sm:$0x3f]
        %v899 = vld [vmem:[%s5] sm:$0x1]
        %v900 = vperm.slane %v899, 0
        %v901 = vmul.f32 %v875, %v900
        %v902 = vmul.f32 %v876, %v900
        %v903 = vmul.f32 %v878, %v900
        %v904 = vmul.f32 %v879, %v900
        %v905 = vmul.f32 %v881, %v900
        %v906 = vmul.f32 %v882, %v900
        %v907 = vmul.f32 %v884, %v900
        %v908 = vmul.f32 %v885, %v900
        %v909 = vmul.f32 %v887, %v900
        %v910 = vmul.f32 %v888, %v900
        %v911 = vmul.f32 %v890, %v900
        %v912 = vmul.f32 %v891, %v900
        %v913 = vmul.f32 %v893, %v900
        %v914 = vmul.f32 %v894, %v900
        %v915 = vmul.f32 %v896, %v900
        %v916 = vmul.f32 %v897, %v900
        %v917 = vadd.f32 %v901, 0.0
        %v918 = vadd.f32 %v902, 0.0
        %v919 = vadd.f32 %v903, 0.0
        %v920 = vadd.f32 %v904, 0.0
        %v921 = vadd.f32 %v905, 0.0
        %v922 = vadd.f32 %v906, 0.0
        %v923 = vadd.f32 %v907, 0.0
        %v924 = vadd.f32 %v908, 0.0
        %v925 = vadd.f32 %v909, 0.0
        %v926 = vadd.f32 %v910, 0.0
        %v927 = vadd.f32 %v911, 0.0
        %v928 = vadd.f32 %v912, 0.0
        %v929 = vadd.f32 %v913, 0.0
        %v930 = vadd.f32 %v914, 0.0
        %v931 = vadd.f32 %v915, 0.0
        %v932 = vadd.f32 %v916, 0.0
        %v933 = vld [vmem:[%s5 + $0x1] sm:$0x1]
        %v934 = vperm.slane %v933, 0
        %v935 = vmul.f32 %v875, %v934
        %v936 = vmul.f32 %v876, %v934
        %v937 = vmul.f32 %v877, %v934
        %v938 = vmul.f32 %v878, %v934
        %v939 = vmul.f32 %v879, %v934
        %v940 = vmul.f32 %v880, %v934
        %v941 = vmul.f32 %v881, %v934
        %v942 = vmul.f32 %v882, %v934
        %v943 = vmul.f32 %v883, %v934
        %v944 = vmul.f32 %v884, %v934
        %v945 = vmul.f32 %v885, %v934
        %v946 = vmul.f32 %v886, %v934
        %v947 = vmul.f32 %v887, %v934
        %v948 = vmul.f32 %v888, %v934
        %v949 = vmul.f32 %v889, %v934
        %v950 = vmul.f32 %v890, %v934
        %v951 = vmul.f32 %v891, %v934
        %v952 = vmul.f32 %v892, %v934
        %v953 = vmul.f32 %v893, %v934
        %v954 = vmul.f32 %v894, %v934
        %v955 = vmul.f32 %v895, %v934
        %v956 = vmul.f32 %v896, %v934
        %v957 = vmul.f32 %v897, %v934
        %v958 = vmul.f32 %v898, %v934
        %vm983 = vcmask 1046528
        %v984 = vrot.slane %v935, 1
        %v985 = vrot.slane %v936, 1
        %v986 = vsel %vm983, %v984, %v985
        %v987 = vrot.slane %v937, 1
        %v988 = vsel %vm983, %v985, %v987
        %v989 = vrot.slane %v938, 1
        %v990 = vrot.slane %v939, 1
        %v991 = vsel %vm983, %v989, %v990
        %v992 = vrot.slane %v940, 1
        %v993 = vsel %vm983, %v990, %v992
        %v994 = vrot.slane %v941, 1
        %v995 = vrot.slane %v942, 1
        %v996 = vsel %vm983, %v994, %v995
        %v997 = vrot.slane %v943, 1
        %v998 = vsel %vm983, %v995, %v997
        %v999 = vrot.slane %v944, 1
        %v1000 = vrot.slane %v945, 1
        %v1001 = vsel %vm983, %v999, %v1000
        %v1002 = vrot.slane %v946, 1
        %v1003 = vsel %vm983, %v1000, %v1002
        %v1004 = vrot.slane %v947, 1
        %v1005 = vrot.slane %v948, 1
        %v1006 = vsel %vm983, %v1004, %v1005
        %v1007 = vrot.slane %v949, 1
        %v1008 = vsel %vm983, %v1005, %v1007
        %v1009 = vrot.slane %v950, 1
        %v1010 = vrot.slane %v951, 1
        %v1011 = vsel %vm983, %v1009, %v1010
        %v1012 = vrot.slane %v952, 1
        %v1013 = vsel %vm983, %v1010, %v1012
        %v1014 = vrot.slane %v953, 1
        %v1015 = vrot.slane %v954, 1
        %v1016 = vsel %vm983, %v1014, %v1015
        %v1017 = vrot.slane %v955, 1
        %v1018 = vsel %vm983, %v1015, %v1017
        %v1019 = vrot.slane %v956, 1
        %v1020 = vrot.slane %v957, 1
        %v1021 = vsel %vm983, %v1019, %v1020
        %v1022 = vrot.slane %v958, 1
        %v1023 = vsel %vm983, %v1020, %v1022
        %v1040 = vadd.f32 %v917, %v986
        %v1041 = vadd.f32 %v918, %v988
        %v1042 = vadd.f32 %v919, %v991
        %v1043 = vadd.f32 %v920, %v993
        %v1044 = vadd.f32 %v921, %v996
        %v1045 = vadd.f32 %v922, %v998
        %v1046 = vadd.f32 %v923, %v1001
        %v1047 = vadd.f32 %v924, %v1003
        %v1048 = vadd.f32 %v925, %v1006
        %v1049 = vadd.f32 %v926, %v1008
        %v1050 = vadd.f32 %v927, %v1011
        %v1051 = vadd.f32 %v928, %v1013
        %v1052 = vadd.f32 %v929, %v1016
        %v1053 = vadd.f32 %v930, %v1018
        %v1054 = vadd.f32 %v931, %v1021
        %v1055 = vadd.f32 %v932, %v1023
        %v1056 = vld [vmem:[%s5 + $0x2] sm:$0x1]
        %v1057 = vperm.slane %v1056, 0
        %v1058 = vmul.f32 %v875, %v1057
        %v1059 = vmul.f32 %v876, %v1057
        %v1060 = vmul.f32 %v877, %v1057
        %v1061 = vmul.f32 %v878, %v1057
        %v1062 = vmul.f32 %v879, %v1057
        %v1063 = vmul.f32 %v880, %v1057
        %v1064 = vmul.f32 %v881, %v1057
        %v1065 = vmul.f32 %v882, %v1057
        %v1066 = vmul.f32 %v883, %v1057
        %v1067 = vmul.f32 %v884, %v1057
        %v1068 = vmul.f32 %v885, %v1057
        %v1069 = vmul.f32 %v886, %v1057
        %v1070 = vmul.f32 %v887, %v1057
        %v1071 = vmul.f32 %v888, %v1057
        %v1072 = vmul.f32 %v889, %v1057
        %v1073 = vmul.f32 %v890, %v1057
        %v1074 = vmul.f32 %v891, %v1057
        %v1075 = vmul.f32 %v892, %v1057
        %v1076 = vmul.f32 %v893, %v1057
        %v1077 = vmul.f32 %v894, %v1057
        %v1078 = vmul.f32 %v895, %v1057
        %v1079 = vmul.f32 %v896, %v1057
        %v1080 = vmul.f32 %v897, %v1057
        %v1081 = vmul.f32 %v898, %v1057
        %vm1106 = vcmask 1045504
        %v1107 = vrot.slane %v1058, 2
        %v1108 = vrot.slane %v1059, 2
        %v1109 = vsel %vm1106, %v1107, %v1108
        %v1110 = vrot.slane %v1060, 2
        %v1111 = vsel %vm1106, %v1108, %v1110
        %v1112 = vrot.slane %v1061, 2
        %v1113 = vrot.slane %v1062, 2
        %v1114 = vsel %vm1106, %v1112, %v1113
        %v1115 = vrot.slane %v1063, 2
        %v1116 = vsel %vm1106, %v1113, %v1115
        %v1117 = vrot.slane %v1064, 2
        %v1118 = vrot.slane %v1065, 2
        %v1119 = vsel %vm1106, %v1117, %v1118
        %v1120 = vrot.slane %v1066, 2
        %v1121 = vsel %vm1106, %v1118, %v1120
        %v1122 = vrot.slane %v1067, 2
        %v1123 = vrot.slane %v1068, 2
        %v1124 = vsel %vm1106, %v1122, %v1123
        %v1125 = vrot.slane %v1069, 2
        %v1126 = vsel %vm1106, %v1123, %v1125
        %v1127 = vrot.slane %v1070, 2
        %v1128 = vrot.slane %v1071, 2
        %v1129 = vsel %vm1106, %v1127, %v1128
        %v1130 = vrot.slane %v1072, 2
        %v1131 = vsel %vm1106, %v1128, %v1130
        %v1132 = vrot.slane %v1073, 2
        %v1133 = vrot.slane %v1074, 2
        %v1134 = vsel %vm1106, %v1132, %v1133
        %v1135 = vrot.slane %v1075, 2
        %v1136 = vsel %vm1106, %v1133, %v1135
        %v1137 = vrot.slane %v1076, 2
        %v1138 = vrot.slane %v1077, 2
        %v1139 = vsel %vm1106, %v1137, %v1138
        %v1140 = vrot.slane %v1078, 2
        %v1141 = vsel %vm1106, %v1138, %v1140
        %v1142 = vrot.slane %v1079, 2
        %v1143 = vrot.slane %v1080, 2
        %v1144 = vsel %vm1106, %v1142, %v1143
        %v1145 = vrot.slane %v1081, 2
        %v1146 = vsel %vm1106, %v1143, %v1145
        %v1163 = vadd.f32 %v1040, %v1109
        %v1164 = vadd.f32 %v1041, %v1111
        %v1165 = vadd.f32 %v1042, %v1114
        %v1166 = vadd.f32 %v1043, %v1116
        %v1167 = vadd.f32 %v1044, %v1119
        %v1168 = vadd.f32 %v1045, %v1121
        %v1169 = vadd.f32 %v1046, %v1124
        %v1170 = vadd.f32 %v1047, %v1126
        %v1171 = vadd.f32 %v1048, %v1129
        %v1172 = vadd.f32 %v1049, %v1131
        %v1173 = vadd.f32 %v1050, %v1134
        %v1174 = vadd.f32 %v1051, %v1136
        %v1175 = vadd.f32 %v1052, %v1139
        %v1176 = vadd.f32 %v1053, %v1141
        %v1177 = vadd.f32 %v1054, %v1144
        %v1178 = vadd.f32 %v1055, %v1146
        %v1179 = vld [vmem:[%s5 + $0x3] sm:$0x1]
        %v1180 = vperm.slane %v1179, 0
        %v1181 = vmul.f32 %v875, %v1180
        %v1182 = vmul.f32 %v876, %v1180
        %v1183 = vmul.f32 %v877, %v1180
        %v1184 = vmul.f32 %v878, %v1180
        %v1185 = vmul.f32 %v879, %v1180
        %v1186 = vmul.f32 %v880, %v1180
        %v1187 = vmul.f32 %v881, %v1180
        %v1188 = vmul.f32 %v882, %v1180
        %v1189 = vmul.f32 %v883, %v1180
        %v1190 = vmul.f32 %v884, %v1180
        %v1191 = vmul.f32 %v885, %v1180
        %v1192 = vmul.f32 %v886, %v1180
        %v1193 = vmul.f32 %v887, %v1180
        %v1194 = vmul.f32 %v888, %v1180
        %v1195 = vmul.f32 %v889, %v1180
        %v1196 = vmul.f32 %v890, %v1180
        %v1197 = vmul.f32 %v891, %v1180
        %v1198 = vmul.f32 %v892, %v1180
        %v1199 = vmul.f32 %v893, %v1180
        %v1200 = vmul.f32 %v894, %v1180
        %v1201 = vmul.f32 %v895, %v1180
        %v1202 = vmul.f32 %v896, %v1180
        %v1203 = vmul.f32 %v897, %v1180
        %v1204 = vmul.f32 %v898, %v1180
        %vm1229 = vcmask 1044480
        %v1230 = vrot.slane %v1181, 3
        %v1231 = vrot.slane %v1182, 3
        %v1232 = vsel %vm1229, %v1230, %v1231
        %v1233 = vrot.slane %v1183, 3
        %v1234 = vsel %vm1229, %v1231, %v1233
        %v1235 = vrot.slane %v1184, 3
        %v1236 = vrot.slane %v1185, 3
        %v1237 = vsel %vm1229, %v1235, %v1236
        %v1238 = vrot.slane %v1186, 3
        %v1239 = vsel %vm1229, %v1236, %v1238
        %v1240 = vrot.slane %v1187, 3
        %v1241 = vrot.slane %v1188, 3
        %v1242 = vsel %vm1229, %v1240, %v1241
        %v1243 = vrot.slane %v1189, 3
        %v1244 = vsel %vm1229, %v1241, %v1243
        %v1245 = vrot.slane %v1190, 3
        %v1246 = vrot.slane %v1191, 3
        %v1247 = vsel %vm1229, %v1245, %v1246
        %v1248 = vrot.slane %v1192, 3
        %v1249 = vsel %vm1229, %v1246, %v1248
        %v1250 = vrot.slane %v1193, 3
        %v1251 = vrot.slane %v1194, 3
        %v1252 = vsel %vm1229, %v1250, %v1251
        %v1253 = vrot.slane %v1195, 3
        %v1254 = vsel %vm1229, %v1251, %v1253
        %v1255 = vrot.slane %v1196, 3
        %v1256 = vrot.slane %v1197, 3
        %v1257 = vsel %vm1229, %v1255, %v1256
        %v1258 = vrot.slane %v1198, 3
        %v1259 = vsel %vm1229, %v1256, %v1258
        %v1260 = vrot.slane %v1199, 3
        %v1261 = vrot.slane %v1200, 3
        %v1262 = vsel %vm1229, %v1260, %v1261
        %v1263 = vrot.slane %v1201, 3
        %v1264 = vsel %vm1229, %v1261, %v1263
        %v1265 = vrot.slane %v1202, 3
        %v1266 = vrot.slane %v1203, 3
        %v1267 = vsel %vm1229, %v1265, %v1266
        %v1268 = vrot.slane %v1204, 3
        %v1269 = vsel %vm1229, %v1266, %v1268
        %v1286 = vadd.f32 %v1163, %v1232
        %v1287 = vadd.f32 %v1164, %v1234
        %v1288 = vadd.f32 %v1165, %v1237
        %v1289 = vadd.f32 %v1166, %v1239
        %v1290 = vadd.f32 %v1167, %v1242
        %v1291 = vadd.f32 %v1168, %v1244
        %v1292 = vadd.f32 %v1169, %v1247
        %v1293 = vadd.f32 %v1170, %v1249
        %v1294 = vadd.f32 %v1171, %v1252
        %v1295 = vadd.f32 %v1172, %v1254
        %v1296 = vadd.f32 %v1173, %v1257
        %v1297 = vadd.f32 %v1174, %v1259
        %v1298 = vadd.f32 %v1175, %v1262
        %v1299 = vadd.f32 %v1176, %v1264
        %v1300 = vadd.f32 %v1177, %v1267
        %v1301 = vadd.f32 %v1178, %v1269
        %v1302 = vld [vmem:[%s5 + $0x4] sm:$0x1]
        %v1303 = vperm.slane %v1302, 0
        %v1304 = vmul.f32 %v875, %v1303
        %v1305 = vmul.f32 %v876, %v1303
        %v1306 = vmul.f32 %v877, %v1303
        %v1307 = vmul.f32 %v878, %v1303
        %v1308 = vmul.f32 %v879, %v1303
        %v1309 = vmul.f32 %v880, %v1303
        %v1310 = vmul.f32 %v881, %v1303
        %v1311 = vmul.f32 %v882, %v1303
        %v1312 = vmul.f32 %v883, %v1303
        %v1313 = vmul.f32 %v884, %v1303
        %v1314 = vmul.f32 %v885, %v1303
        %v1315 = vmul.f32 %v886, %v1303
        %v1316 = vmul.f32 %v887, %v1303
        %v1317 = vmul.f32 %v888, %v1303
        %v1318 = vmul.f32 %v889, %v1303
        %v1319 = vmul.f32 %v890, %v1303
        %v1320 = vmul.f32 %v891, %v1303
        %v1321 = vmul.f32 %v892, %v1303
        %v1322 = vmul.f32 %v893, %v1303
        %v1323 = vmul.f32 %v894, %v1303
        %v1324 = vmul.f32 %v895, %v1303
        %v1325 = vmul.f32 %v896, %v1303
        %v1326 = vmul.f32 %v897, %v1303
        %v1327 = vmul.f32 %v898, %v1303
        %vm1352 = vcmask 1043456
        %v1353 = vrot.slane %v1304, 4
        %v1354 = vrot.slane %v1305, 4
        %v1355 = vsel %vm1352, %v1353, %v1354
        %v1356 = vrot.slane %v1306, 4
        %v1357 = vsel %vm1352, %v1354, %v1356
        %v1358 = vrot.slane %v1307, 4
        %v1359 = vrot.slane %v1308, 4
        %v1360 = vsel %vm1352, %v1358, %v1359
        %v1361 = vrot.slane %v1309, 4
        %v1362 = vsel %vm1352, %v1359, %v1361
        %v1363 = vrot.slane %v1310, 4
        %v1364 = vrot.slane %v1311, 4
        %v1365 = vsel %vm1352, %v1363, %v1364
        %v1366 = vrot.slane %v1312, 4
        %v1367 = vsel %vm1352, %v1364, %v1366
        %v1368 = vrot.slane %v1313, 4
        %v1369 = vrot.slane %v1314, 4
        %v1370 = vsel %vm1352, %v1368, %v1369
        %v1371 = vrot.slane %v1315, 4
        %v1372 = vsel %vm1352, %v1369, %v1371
        %v1373 = vrot.slane %v1316, 4
        %v1374 = vrot.slane %v1317, 4
        %v1375 = vsel %vm1352, %v1373, %v1374
        %v1376 = vrot.slane %v1318, 4
        %v1377 = vsel %vm1352, %v1374, %v1376
        %v1378 = vrot.slane %v1319, 4
        %v1379 = vrot.slane %v1320, 4
        %v1380 = vsel %vm1352, %v1378, %v1379
        %v1381 = vrot.slane %v1321, 4
        %v1382 = vsel %vm1352, %v1379, %v1381
        %v1383 = vrot.slane %v1322, 4
        %v1384 = vrot.slane %v1323, 4
        %v1385 = vsel %vm1352, %v1383, %v1384
        %v1386 = vrot.slane %v1324, 4
        %v1387 = vsel %vm1352, %v1384, %v1386
        %v1388 = vrot.slane %v1325, 4
        %v1389 = vrot.slane %v1326, 4
        %v1390 = vsel %vm1352, %v1388, %v1389
        %v1391 = vrot.slane %v1327, 4
        %v1392 = vsel %vm1352, %v1389, %v1391
        %v1409 = vadd.f32 %v1286, %v1355
        %v1410 = vadd.f32 %v1287, %v1357
        %v1411 = vadd.f32 %v1288, %v1360
        %v1412 = vadd.f32 %v1289, %v1362
        %v1413 = vadd.f32 %v1290, %v1365
        %v1414 = vadd.f32 %v1291, %v1367
        %v1415 = vadd.f32 %v1292, %v1370
        %v1416 = vadd.f32 %v1293, %v1372
        %v1417 = vadd.f32 %v1294, %v1375
        %v1418 = vadd.f32 %v1295, %v1377
        %v1419 = vadd.f32 %v1296, %v1380
        %v1420 = vadd.f32 %v1297, %v1382
        %v1421 = vadd.f32 %v1298, %v1385
        %v1422 = vadd.f32 %v1299, %v1387
        %v1423 = vadd.f32 %v1300, %v1390
        %v1424 = vadd.f32 %v1301, %v1392
        %v1425 = vld [vmem:[%s5 + $0x5] sm:$0x1]
        %v1426 = vperm.slane %v1425, 0
        %v1427 = vmul.f32 %v875, %v1426
        %v1428 = vmul.f32 %v876, %v1426
        %v1429 = vmul.f32 %v877, %v1426
        %v1430 = vmul.f32 %v878, %v1426
        %v1431 = vmul.f32 %v879, %v1426
        %v1432 = vmul.f32 %v880, %v1426
        %v1433 = vmul.f32 %v881, %v1426
        %v1434 = vmul.f32 %v882, %v1426
        %v1435 = vmul.f32 %v883, %v1426
        %v1436 = vmul.f32 %v884, %v1426
        %v1437 = vmul.f32 %v885, %v1426
        %v1438 = vmul.f32 %v886, %v1426
        %v1439 = vmul.f32 %v887, %v1426
        %v1440 = vmul.f32 %v888, %v1426
        %v1441 = vmul.f32 %v889, %v1426
        %v1442 = vmul.f32 %v890, %v1426
        %v1443 = vmul.f32 %v891, %v1426
        %v1444 = vmul.f32 %v892, %v1426
        %v1445 = vmul.f32 %v893, %v1426
        %v1446 = vmul.f32 %v894, %v1426
        %v1447 = vmul.f32 %v895, %v1426
        %v1448 = vmul.f32 %v896, %v1426
        %v1449 = vmul.f32 %v897, %v1426
        %v1450 = vmul.f32 %v898, %v1426
        %vm1475 = vcmask 1042432
        %v1476 = vrot.slane %v1427, 5
        %v1477 = vrot.slane %v1428, 5
        %v1478 = vsel %vm1475, %v1476, %v1477
        %v1479 = vrot.slane %v1429, 5
        %v1480 = vsel %vm1475, %v1477, %v1479
        %v1481 = vrot.slane %v1430, 5
        %v1482 = vrot.slane %v1431, 5
        %v1483 = vsel %vm1475, %v1481, %v1482
        %v1484 = vrot.slane %v1432, 5
        %v1485 = vsel %vm1475, %v1482, %v1484
        %v1486 = vrot.slane %v1433, 5
        %v1487 = vrot.slane %v1434, 5
        %v1488 = vsel %vm1475, %v1486, %v1487
        %v1489 = vrot.slane %v1435, 5
        %v1490 = vsel %vm1475, %v1487, %v1489
        %v1491 = vrot.slane %v1436, 5
        %v1492 = vrot.slane %v1437, 5
        %v1493 = vsel %vm1475, %v1491, %v1492
        %v1494 = vrot.slane %v1438, 5
        %v1495 = vsel %vm1475, %v1492, %v1494
        %v1496 = vrot.slane %v1439, 5
        %v1497 = vrot.slane %v1440, 5
        %v1498 = vsel %vm1475, %v1496, %v1497
        %v1499 = vrot.slane %v1441, 5
        %v1500 = vsel %vm1475, %v1497, %v1499
        %v1501 = vrot.slane %v1442, 5
        %v1502 = vrot.slane %v1443, 5
        %v1503 = vsel %vm1475, %v1501, %v1502
        %v1504 = vrot.slane %v1444, 5
        %v1505 = vsel %vm1475, %v1502, %v1504
        %v1506 = vrot.slane %v1445, 5
        %v1507 = vrot.slane %v1446, 5
        %v1508 = vsel %vm1475, %v1506, %v1507
        %v1509 = vrot.slane %v1447, 5
        %v1510 = vsel %vm1475, %v1507, %v1509
        %v1511 = vrot.slane %v1448, 5
        %v1512 = vrot.slane %v1449, 5
        %v1513 = vsel %vm1475, %v1511, %v1512
        %v1514 = vrot.slane %v1450, 5
        %v1515 = vsel %vm1475, %v1512, %v1514
        %v1532 = vadd.f32 %v1409, %v1478
        %v1533 = vadd.f32 %v1410, %v1480
        %v1534 = vadd.f32 %v1411, %v1483
        %v1535 = vadd.f32 %v1412, %v1485
        %v1536 = vadd.f32 %v1413, %v1488
        %v1537 = vadd.f32 %v1414, %v1490
        %v1538 = vadd.f32 %v1415, %v1493
        %v1539 = vadd.f32 %v1416, %v1495
        %v1540 = vadd.f32 %v1417, %v1498
        %v1541 = vadd.f32 %v1418, %v1500
        %v1542 = vadd.f32 %v1419, %v1503
        %v1543 = vadd.f32 %v1420, %v1505
        %v1544 = vadd.f32 %v1421, %v1508
        %v1545 = vadd.f32 %v1422, %v1510
        %v1546 = vadd.f32 %v1423, %v1513
        %v1547 = vadd.f32 %v1424, %v1515
        %v1548 = vld [vmem:[%s5 + $0x6] sm:$0x1]
        %v1549 = vperm.slane %v1548, 0
        %v1550 = vmul.f32 %v875, %v1549
        %v1551 = vmul.f32 %v876, %v1549
        %v1552 = vmul.f32 %v877, %v1549
        %v1553 = vmul.f32 %v878, %v1549
        %v1554 = vmul.f32 %v879, %v1549
        %v1555 = vmul.f32 %v880, %v1549
        %v1556 = vmul.f32 %v881, %v1549
        %v1557 = vmul.f32 %v882, %v1549
        %v1558 = vmul.f32 %v883, %v1549
        %v1559 = vmul.f32 %v884, %v1549
        %v1560 = vmul.f32 %v885, %v1549
        %v1561 = vmul.f32 %v886, %v1549
        %v1562 = vmul.f32 %v887, %v1549
        %v1563 = vmul.f32 %v888, %v1549
        %v1564 = vmul.f32 %v889, %v1549
        %v1565 = vmul.f32 %v890, %v1549
        %v1566 = vmul.f32 %v891, %v1549
        %v1567 = vmul.f32 %v892, %v1549
        %v1568 = vmul.f32 %v893, %v1549
        %v1569 = vmul.f32 %v894, %v1549
        %v1570 = vmul.f32 %v895, %v1549
        %v1571 = vmul.f32 %v896, %v1549
        %v1572 = vmul.f32 %v897, %v1549
        %v1573 = vmul.f32 %v898, %v1549
        %v1598 = vrot.slane %v1550, 6
        %v1599 = vrot.slane %v1551, 6
        %v1600 = vsel %vm589, %v1598, %v1599
        %v1601 = vrot.slane %v1552, 6
        %v1602 = vsel %vm589, %v1599, %v1601
        %v1603 = vrot.slane %v1553, 6
        %v1604 = vrot.slane %v1554, 6
        %v1605 = vsel %vm589, %v1603, %v1604
        %v1606 = vrot.slane %v1555, 6
        %v1607 = vsel %vm589, %v1604, %v1606
        %v1608 = vrot.slane %v1556, 6
        %v1609 = vrot.slane %v1557, 6
        %v1610 = vsel %vm589, %v1608, %v1609
        %v1611 = vrot.slane %v1558, 6
        %v1612 = vsel %vm589, %v1609, %v1611
        %v1613 = vrot.slane %v1559, 6
        %v1614 = vrot.slane %v1560, 6
        %v1615 = vsel %vm589, %v1613, %v1614
        %v1616 = vrot.slane %v1561, 6
        %v1617 = vsel %vm589, %v1614, %v1616
        %v1618 = vrot.slane %v1562, 6
        %v1619 = vrot.slane %v1563, 6
        %v1620 = vsel %vm589, %v1618, %v1619
        %v1621 = vrot.slane %v1564, 6
        %v1622 = vsel %vm589, %v1619, %v1621
        %v1623 = vrot.slane %v1565, 6
        %v1624 = vrot.slane %v1566, 6
        %v1625 = vsel %vm589, %v1623, %v1624
        %v1626 = vrot.slane %v1567, 6
        %v1627 = vsel %vm589, %v1624, %v1626
        %v1628 = vrot.slane %v1568, 6
        %v1629 = vrot.slane %v1569, 6
        %v1630 = vsel %vm589, %v1628, %v1629
        %v1631 = vrot.slane %v1570, 6
        %v1632 = vsel %vm589, %v1629, %v1631
        %v1633 = vrot.slane %v1571, 6
        %v1634 = vrot.slane %v1572, 6
        %v1635 = vsel %vm589, %v1633, %v1634
        %v1636 = vrot.slane %v1573, 6
        %v1637 = vsel %vm589, %v1634, %v1636
        %v1654 = vadd.f32 %v1532, %v1600
        %v1655 = vadd.f32 %v1533, %v1602
        %v1656 = vadd.f32 %v1534, %v1605
        %v1657 = vadd.f32 %v1535, %v1607
        %v1658 = vadd.f32 %v1536, %v1610
        %v1659 = vadd.f32 %v1537, %v1612
        %v1660 = vadd.f32 %v1538, %v1615
        %v1661 = vadd.f32 %v1539, %v1617
        %v1662 = vadd.f32 %v1540, %v1620
        %v1663 = vadd.f32 %v1541, %v1622
        %v1664 = vadd.f32 %v1542, %v1625
        %v1665 = vadd.f32 %v1543, %v1627
        %v1666 = vadd.f32 %v1544, %v1630
        %v1667 = vadd.f32 %v1545, %v1632
        %v1668 = vadd.f32 %v1546, %v1635
        %v1669 = vadd.f32 %v1547, %v1637
        %s1670 = scalar_lea.vmem [#allocation2], 24
        %v1671 = vld [vmem:[%s1670] sm:$0xff]
        %v1672 = vld [vmem:[%s1670 + $0x8] sm:$0xff]
        %v1673 = vld [vmem:[%s1670 + $0x10] sm:$0x3f]
        %v1674 = vld [vmem:[%s1670 + $0x18] sm:$0xff]
        %v1675 = vld [vmem:[%s1670 + $0x20] sm:$0xff]
        %v1676 = vld [vmem:[%s1670 + $0x28] sm:$0x3f]
        %v1677 = vld [vmem:[%s1670 + $0x30] sm:$0xff]
        %v1678 = vld [vmem:[%s1670 + $0x38] sm:$0xff]
        %v1679 = vld [vmem:[%s1670 + $0x40] sm:$0x3f]
        %v1680 = vld [vmem:[%s1670 + $0x48] sm:$0xff]
        %v1681 = vld [vmem:[%s1670 + $0x50] sm:$0xff]
        %v1682 = vld [vmem:[%s1670 + $0x58] sm:$0x3f]
        %v1683 = vld [vmem:[%s1670 + $0x60] sm:$0xff]
        %v1684 = vld [vmem:[%s1670 + $0x68] sm:$0xff]
        %v1685 = vld [vmem:[%s1670 + $0x70] sm:$0x3f]
        %v1686 = vld [vmem:[%s1670 + $0x78] sm:$0xff]
        %v1687 = vld [vmem:[%s1670 + $0x80] sm:$0xff]
        %v1688 = vld [vmem:[%s1670 + $0x88] sm:$0x3f]
        %v1689 = vld [vmem:[%s1670 + $0x90] sm:$0xff]
        %v1690 = vld [vmem:[%s1670 + $0x98] sm:$0xff]
        %v1691 = vld [vmem:[%s1670 + $0xa0] sm:$0x3f]
        %v1692 = vld [vmem:[%s1670 + $0xa8] sm:$0xff]
        %v1693 = vld [vmem:[%s1670 + $0xb0] sm:$0xff]
        %v1694 = vld [vmem:[%s1670 + $0xb8] sm:$0x3f]
        %v1695 = vld [vmem:[%s5 + $0x7] sm:$0x1]
        %v1696 = vperm.slane %v1695, 0
        %v1697 = vmul.f32 %v1671, %v1696
        %v1698 = vmul.f32 %v1672, %v1696
        %v1699 = vmul.f32 %v1674, %v1696
        %v1700 = vmul.f32 %v1675, %v1696
        %v1701 = vmul.f32 %v1677, %v1696
        %v1702 = vmul.f32 %v1678, %v1696
        %v1703 = vmul.f32 %v1680, %v1696
        %v1704 = vmul.f32 %v1681, %v1696
        %v1705 = vmul.f32 %v1683, %v1696
        %v1706 = vmul.f32 %v1684, %v1696
        %v1707 = vmul.f32 %v1686, %v1696
        %v1708 = vmul.f32 %v1687, %v1696
        %v1709 = vmul.f32 %v1689, %v1696
        %v1710 = vmul.f32 %v1690, %v1696
        %v1711 = vmul.f32 %v1692, %v1696
        %v1712 = vmul.f32 %v1693, %v1696
        %v1713 = vadd.f32 %v1654, %v1697
        %v1714 = vadd.f32 %v1655, %v1698
        %v1715 = vadd.f32 %v1656, %v1699
        %v1716 = vadd.f32 %v1657, %v1700
        %v1717 = vadd.f32 %v1658, %v1701
        %v1718 = vadd.f32 %v1659, %v1702
        %v1719 = vadd.f32 %v1660, %v1703
        %v1720 = vadd.f32 %v1661, %v1704
        %v1721 = vadd.f32 %v1662, %v1705
        %v1722 = vadd.f32 %v1663, %v1706
        %v1723 = vadd.f32 %v1664, %v1707
        %v1724 = vadd.f32 %v1665, %v1708
        %v1725 = vadd.f32 %v1666, %v1709
        %v1726 = vadd.f32 %v1667, %v1710
        %v1727 = vadd.f32 %v1668, %v1711
        %v1728 = vadd.f32 %v1669, %v1712
        %v1729 = vld [vmem:[%s5 + $0x8] sm:$0x1]
        %v1730 = vperm.slane %v1729, 0
        %v1731 = vmul.f32 %v1671, %v1730
        %v1732 = vmul.f32 %v1672, %v1730
        %v1733 = vmul.f32 %v1673, %v1730
        %v1734 = vmul.f32 %v1674, %v1730
        %v1735 = vmul.f32 %v1675, %v1730
        %v1736 = vmul.f32 %v1676, %v1730
        %v1737 = vmul.f32 %v1677, %v1730
        %v1738 = vmul.f32 %v1678, %v1730
        %v1739 = vmul.f32 %v1679, %v1730
        %v1740 = vmul.f32 %v1680, %v1730
        %v1741 = vmul.f32 %v1681, %v1730
        %v1742 = vmul.f32 %v1682, %v1730
        %v1743 = vmul.f32 %v1683, %v1730
        %v1744 = vmul.f32 %v1684, %v1730
        %v1745 = vmul.f32 %v1685, %v1730
        %v1746 = vmul.f32 %v1686, %v1730
        %v1747 = vmul.f32 %v1687, %v1730
        %v1748 = vmul.f32 %v1688, %v1730
        %v1749 = vmul.f32 %v1689, %v1730
        %v1750 = vmul.f32 %v1690, %v1730
        %v1751 = vmul.f32 %v1691, %v1730
        %v1752 = vmul.f32 %v1692, %v1730
        %v1753 = vmul.f32 %v1693, %v1730
        %v1754 = vmul.f32 %v1694, %v1730
        %v1779 = vrot.slane %v1731, 1
        %v1780 = vrot.slane %v1732, 1
        %v1781 = vsel %vm983, %v1779, %v1780
        %v1782 = vrot.slane %v1733, 1
        %v1783 = vsel %vm983, %v1780, %v1782
        %v1784 = vrot.slane %v1734, 1
        %v1785 = vrot.slane %v1735, 1
        %v1786 = vsel %vm983, %v1784, %v1785
        %v1787 = vrot.slane %v1736, 1
        %v1788 = vsel %vm983, %v1785, %v1787
        %v1789 = vrot.slane %v1737, 1
        %v1790 = vrot.slane %v1738, 1
        %v1791 = vsel %vm983, %v1789, %v1790
        %v1792 = vrot.slane %v1739, 1
        %v1793 = vsel %vm983, %v1790, %v1792
        %v1794 = vrot.slane %v1740, 1
        %v1795 = vrot.slane %v1741, 1
        %v1796 = vsel %vm983, %v1794, %v1795
        %v1797 = vrot.slane %v1742, 1
        %v1798 = vsel %vm983, %v1795, %v1797
        %v1799 = vrot.slane %v1743, 1
        %v1800 = vrot.slane %v1744, 1
        %v1801 = vsel %vm983, %v1799, %v1800
        %v1802 = vrot.slane %v1745, 1
        %v1803 = vsel %vm983, %v1800, %v1802
        %v1804 = vrot.slane %v1746, 1
        %v1805 = vrot.slane %v1747, 1
        %v1806 = vsel %vm983, %v1804, %v1805
        %v1807 = vrot.slane %v1748, 1
        %v1808 = vsel %vm983, %v1805, %v1807
        %v1809 = vrot.slane %v1749, 1
        %v1810 = vrot.slane %v1750, 1
        %v1811 = vsel %vm983, %v1809, %v1810
        %v1812 = vrot.slane %v1751, 1
        %v1813 = vsel %vm983, %v1810, %v1812
        %v1814 = vrot.slane %v1752, 1
        %v1815 = vrot.slane %v1753, 1
        %v1816 = vsel %vm983, %v1814, %v1815
        %v1817 = vrot.slane %v1754, 1
        %v1818 = vsel %vm983, %v1815, %v1817
        %v1835 = vadd.f32 %v1713, %v1781
        %v1836 = vadd.f32 %v1714, %v1783
        %v1837 = vadd.f32 %v1715, %v1786
        %v1838 = vadd.f32 %v1716, %v1788
        %v1839 = vadd.f32 %v1717, %v1791
        %v1840 = vadd.f32 %v1718, %v1793
        %v1841 = vadd.f32 %v1719, %v1796
        %v1842 = vadd.f32 %v1720, %v1798
        %v1843 = vadd.f32 %v1721, %v1801
        %v1844 = vadd.f32 %v1722, %v1803
        %v1845 = vadd.f32 %v1723, %v1806
        %v1846 = vadd.f32 %v1724, %v1808
        %v1847 = vadd.f32 %v1725, %v1811
        %v1848 = vadd.f32 %v1726, %v1813
        %v1849 = vadd.f32 %v1727, %v1816
        %v1850 = vadd.f32 %v1728, %v1818
        %v1851 = vld [vmem:[%s5 + $0x9] sm:$0x1]
        %v1852 = vperm.slane %v1851, 0
        %v1853 = vmul.f32 %v1671, %v1852
        %v1854 = vmul.f32 %v1672, %v1852
        %v1855 = vmul.f32 %v1673, %v1852
        %v1856 = vmul.f32 %v1674, %v1852
        %v1857 = vmul.f32 %v1675, %v1852
        %v1858 = vmul.f32 %v1676, %v1852
        %v1859 = vmul.f32 %v1677, %v1852
        %v1860 = vmul.f32 %v1678, %v1852
        %v1861 = vmul.f32 %v1679, %v1852
        %v1862 = vmul.f32 %v1680, %v1852
        %v1863 = vmul.f32 %v1681, %v1852
        %v1864 = vmul.f32 %v1682, %v1852
        %v1865 = vmul.f32 %v1683, %v1852
        %v1866 = vmul.f32 %v1684, %v1852
        %v1867 = vmul.f32 %v1685, %v1852
        %v1868 = vmul.f32 %v1686, %v1852
        %v1869 = vmul.f32 %v1687, %v1852
        %v1870 = vmul.f32 %v1688, %v1852
        %v1871 = vmul.f32 %v1689, %v1852
        %v1872 = vmul.f32 %v1690, %v1852
        %v1873 = vmul.f32 %v1691, %v1852
        %v1874 = vmul.f32 %v1692, %v1852
        %v1875 = vmul.f32 %v1693, %v1852
        %v1876 = vmul.f32 %v1694, %v1852
        %v1901 = vrot.slane %v1853, 2
        %v1902 = vrot.slane %v1854, 2
        %v1903 = vsel %vm1106, %v1901, %v1902
        %v1904 = vrot.slane %v1855, 2
        %v1905 = vsel %vm1106, %v1902, %v1904
        %v1906 = vrot.slane %v1856, 2
        %v1907 = vrot.slane %v1857, 2
        %v1908 = vsel %vm1106, %v1906, %v1907
        %v1909 = vrot.slane %v1858, 2
        %v1910 = vsel %vm1106, %v1907, %v1909
        %v1911 = vrot.slane %v1859, 2
        %v1912 = vrot.slane %v1860, 2
        %v1913 = vsel %vm1106, %v1911, %v1912
        %v1914 = vrot.slane %v1861, 2
        %v1915 = vsel %vm1106, %v1912, %v1914
        %v1916 = vrot.slane %v1862, 2
        %v1917 = vrot.slane %v1863, 2
        %v1918 = vsel %vm1106, %v1916, %v1917
        %v1919 = vrot.slane %v1864, 2
        %v1920 = vsel %vm1106, %v1917, %v1919
        %v1921 = vrot.slane %v1865, 2
        %v1922 = vrot.slane %v1866, 2
        %v1923 = vsel %vm1106, %v1921, %v1922
        %v1924 = vrot.slane %v1867, 2
        %v1925 = vsel %vm1106, %v1922, %v1924
        %v1926 = vrot.slane %v1868, 2
        %v1927 = vrot.slane %v1869, 2
        %v1928 = vsel %vm1106, %v1926, %v1927
        %v1929 = vrot.slane %v1870, 2
        %v1930 = vsel %vm1106, %v1927, %v1929
        %v1931 = vrot.slane %v1871, 2
        %v1932 = vrot.slane %v1872, 2
        %v1933 = vsel %vm1106, %v1931, %v1932
        %v1934 = vrot.slane %v1873, 2
        %v1935 = vsel %vm1106, %v1932, %v1934
        %v1936 = vrot.slane %v1874, 2
        %v1937 = vrot.slane %v1875, 2
        %v1938 = vsel %vm1106, %v1936, %v1937
        %v1939 = vrot.slane %v1876, 2
        %v1940 = vsel %vm1106, %v1937, %v1939
        %v1957 = vadd.f32 %v1835, %v1903
        %v1958 = vadd.f32 %v1836, %v1905
        %v1959 = vadd.f32 %v1837, %v1908
        %v1960 = vadd.f32 %v1838, %v1910
        %v1961 = vadd.f32 %v1839, %v1913
        %v1962 = vadd.f32 %v1840, %v1915
        %v1963 = vadd.f32 %v1841, %v1918
        %v1964 = vadd.f32 %v1842, %v1920
        %v1965 = vadd.f32 %v1843, %v1923
        %v1966 = vadd.f32 %v1844, %v1925
        %v1967 = vadd.f32 %v1845, %v1928
        %v1968 = vadd.f32 %v1846, %v1930
        %v1969 = vadd.f32 %v1847, %v1933
        %v1970 = vadd.f32 %v1848, %v1935
        %v1971 = vadd.f32 %v1849, %v1938
        %v1972 = vadd.f32 %v1850, %v1940
        %v1973 = vld [vmem:[%s5 + $0xa] sm:$0x1]
        %v1974 = vperm.slane %v1973, 0
        %v1975 = vmul.f32 %v1671, %v1974
        %v1976 = vmul.f32 %v1672, %v1974
        %v1977 = vmul.f32 %v1673, %v1974
        %v1978 = vmul.f32 %v1674, %v1974
        %v1979 = vmul.f32 %v1675, %v1974
        %v1980 = vmul.f32 %v1676, %v1974
        %v1981 = vmul.f32 %v1677, %v1974
        %v1982 = vmul.f32 %v1678, %v1974
        %v1983 = vmul.f32 %v1679, %v1974
        %v1984 = vmul.f32 %v1680, %v1974
        %v1985 = vmul.f32 %v1681, %v1974
        %v1986 = vmul.f32 %v1682, %v1974
        %v1987 = vmul.f32 %v1683, %v1974
        %v1988 = vmul.f32 %v1684, %v1974
        %v1989 = vmul.f32 %v1685, %v1974
        %v1990 = vmul.f32 %v1686, %v1974
        %v1991 = vmul.f32 %v1687, %v1974
        %v1992 = vmul.f32 %v1688, %v1974
        %v1993 = vmul.f32 %v1689, %v1974
        %v1994 = vmul.f32 %v1690, %v1974
        %v1995 = vmul.f32 %v1691, %v1974
        %v1996 = vmul.f32 %v1692, %v1974
        %v1997 = vmul.f32 %v1693, %v1974
        %v1998 = vmul.f32 %v1694, %v1974
        %v2023 = vrot.slane %v1975, 3
        %v2024 = vrot.slane %v1976, 3
        %v2025 = vsel %vm1229, %v2023, %v2024
        %v2026 = vrot.slane %v1977, 3
        %v2027 = vsel %vm1229, %v2024, %v2026
        %v2028 = vrot.slane %v1978, 3
        %v2029 = vrot.slane %v1979, 3
        %v2030 = vsel %vm1229, %v2028, %v2029
        %v2031 = vrot.slane %v1980, 3
        %v2032 = vsel %vm1229, %v2029, %v2031
        %v2033 = vrot.slane %v1981, 3
        %v2034 = vrot.slane %v1982, 3
        %v2035 = vsel %vm1229, %v2033, %v2034
        %v2036 = vrot.slane %v1983, 3
        %v2037 = vsel %vm1229, %v2034, %v2036
        %v2038 = vrot.slane %v1984, 3
        %v2039 = vrot.slane %v1985, 3
        %v2040 = vsel %vm1229, %v2038, %v2039
        %v2041 = vrot.slane %v1986, 3
        %v2042 = vsel %vm1229, %v2039, %v2041
        %v2043 = vrot.slane %v1987, 3
        %v2044 = vrot.slane %v1988, 3
        %v2045 = vsel %vm1229, %v2043, %v2044
        %v2046 = vrot.slane %v1989, 3
        %v2047 = vsel %vm1229, %v2044, %v2046
        %v2048 = vrot.slane %v1990, 3
        %v2049 = vrot.slane %v1991, 3
        %v2050 = vsel %vm1229, %v2048, %v2049
        %v2051 = vrot.slane %v1992, 3
        %v2052 = vsel %vm1229, %v2049, %v2051
        %v2053 = vrot.slane %v1993, 3
        %v2054 = vrot.slane %v1994, 3
        %v2055 = vsel %vm1229, %v2053, %v2054
        %v2056 = vrot.slane %v1995, 3
        %v2057 = vsel %vm1229, %v2054, %v2056
        %v2058 = vrot.slane %v1996, 3
        %v2059 = vrot.slane %v1997, 3
        %v2060 = vsel %vm1229, %v2058, %v2059
        %v2061 = vrot.slane %v1998, 3
        %v2062 = vsel %vm1229, %v2059, %v2061
        %v2079 = vadd.f32 %v1957, %v2025
        %v2080 = vadd.f32 %v1958, %v2027
        %v2081 = vadd.f32 %v1959, %v2030
        %v2082 = vadd.f32 %v1960, %v2032
        %v2083 = vadd.f32 %v1961, %v2035
        %v2084 = vadd.f32 %v1962, %v2037
        %v2085 = vadd.f32 %v1963, %v2040
        %v2086 = vadd.f32 %v1964, %v2042
        %v2087 = vadd.f32 %v1965, %v2045
        %v2088 = vadd.f32 %v1966, %v2047
        %v2089 = vadd.f32 %v1967, %v2050
        %v2090 = vadd.f32 %v1968, %v2052
        %v2091 = vadd.f32 %v1969, %v2055
        %v2092 = vadd.f32 %v1970, %v2057
        %v2093 = vadd.f32 %v1971, %v2060
        %v2094 = vadd.f32 %v1972, %v2062
        %v2095 = vld [vmem:[%s5 + $0xb] sm:$0x1]
        %v2096 = vperm.slane %v2095, 0
        %v2097 = vmul.f32 %v1671, %v2096
        %v2098 = vmul.f32 %v1672, %v2096
        %v2099 = vmul.f32 %v1673, %v2096
        %v2100 = vmul.f32 %v1674, %v2096
        %v2101 = vmul.f32 %v1675, %v2096
        %v2102 = vmul.f32 %v1676, %v2096
        %v2103 = vmul.f32 %v1677, %v2096
        %v2104 = vmul.f32 %v1678, %v2096
        %v2105 = vmul.f32 %v1679, %v2096
        %v2106 = vmul.f32 %v1680, %v2096
        %v2107 = vmul.f32 %v1681, %v2096
        %v2108 = vmul.f32 %v1682, %v2096
        %v2109 = vmul.f32 %v1683, %v2096
        %v2110 = vmul.f32 %v1684, %v2096
        %v2111 = vmul.f32 %v1685, %v2096
        %v2112 = vmul.f32 %v1686, %v2096
        %v2113 = vmul.f32 %v1687, %v2096
        %v2114 = vmul.f32 %v1688, %v2096
        %v2115 = vmul.f32 %v1689, %v2096
        %v2116 = vmul.f32 %v1690, %v2096
        %v2117 = vmul.f32 %v1691, %v2096
        %v2118 = vmul.f32 %v1692, %v2096
        %v2119 = vmul.f32 %v1693, %v2096
        %v2120 = vmul.f32 %v1694, %v2096
        %v2145 = vrot.slane %v2097, 4
        %v2146 = vrot.slane %v2098, 4
        %v2147 = vsel %vm1352, %v2145, %v2146
        %v2148 = vrot.slane %v2099, 4
        %v2149 = vsel %vm1352, %v2146, %v2148
        %v2150 = vrot.slane %v2100, 4
        %v2151 = vrot.slane %v2101, 4
        %v2152 = vsel %vm1352, %v2150, %v2151
        %v2153 = vrot.slane %v2102, 4
        %v2154 = vsel %vm1352, %v2151, %v2153
        %v2155 = vrot.slane %v2103, 4
        %v2156 = vrot.slane %v2104, 4
        %v2157 = vsel %vm1352, %v2155, %v2156
        %v2158 = vrot.slane %v2105, 4
        %v2159 = vsel %vm1352, %v2156, %v2158
        %v2160 = vrot.slane %v2106, 4
        %v2161 = vrot.slane %v2107, 4
        %v2162 = vsel %vm1352, %v2160, %v2161
        %v2163 = vrot.slane %v2108, 4
        %v2164 = vsel %vm1352, %v2161, %v2163
        %v2165 = vrot.slane %v2109, 4
        %v2166 = vrot.slane %v2110, 4
        %v2167 = vsel %vm1352, %v2165, %v2166
        %v2168 = vrot.slane %v2111, 4
        %v2169 = vsel %vm1352, %v2166, %v2168
        %v2170 = vrot.slane %v2112, 4
        %v2171 = vrot.slane %v2113, 4
        %v2172 = vsel %vm1352, %v2170, %v2171
        %v2173 = vrot.slane %v2114, 4
        %v2174 = vsel %vm1352, %v2171, %v2173
        %v2175 = vrot.slane %v2115, 4
        %v2176 = vrot.slane %v2116, 4
        %v2177 = vsel %vm1352, %v2175, %v2176
        %v2178 = vrot.slane %v2117, 4
        %v2179 = vsel %vm1352, %v2176, %v2178
        %v2180 = vrot.slane %v2118, 4
        %v2181 = vrot.slane %v2119, 4
        %v2182 = vsel %vm1352, %v2180, %v2181
        %v2183 = vrot.slane %v2120, 4
        %v2184 = vsel %vm1352, %v2181, %v2183
        %v2201 = vadd.f32 %v2079, %v2147
        %v2202 = vadd.f32 %v2080, %v2149
        %v2203 = vadd.f32 %v2081, %v2152
        %v2204 = vadd.f32 %v2082, %v2154
        %v2205 = vadd.f32 %v2083, %v2157
        %v2206 = vadd.f32 %v2084, %v2159
        %v2207 = vadd.f32 %v2085, %v2162
        %v2208 = vadd.f32 %v2086, %v2164
        %v2209 = vadd.f32 %v2087, %v2167
        %v2210 = vadd.f32 %v2088, %v2169
        %v2211 = vadd.f32 %v2089, %v2172
        %v2212 = vadd.f32 %v2090, %v2174
        %v2213 = vadd.f32 %v2091, %v2177
        %v2214 = vadd.f32 %v2092, %v2179
        %v2215 = vadd.f32 %v2093, %v2182
        %v2216 = vadd.f32 %v2094, %v2184
        %v2217 = vld [vmem:[%s5 + $0xc] sm:$0x1]
        %v2218 = vperm.slane %v2217, 0
        %v2219 = vmul.f32 %v1671, %v2218
        %v2220 = vmul.f32 %v1672, %v2218
        %v2221 = vmul.f32 %v1673, %v2218
        %v2222 = vmul.f32 %v1674, %v2218
        %v2223 = vmul.f32 %v1675, %v2218
        %v2224 = vmul.f32 %v1676, %v2218
        %v2225 = vmul.f32 %v1677, %v2218
        %v2226 = vmul.f32 %v1678, %v2218
        %v2227 = vmul.f32 %v1679, %v2218
        %v2228 = vmul.f32 %v1680, %v2218
        %v2229 = vmul.f32 %v1681, %v2218
        %v2230 = vmul.f32 %v1682, %v2218
        %v2231 = vmul.f32 %v1683, %v2218
        %v2232 = vmul.f32 %v1684, %v2218
        %v2233 = vmul.f32 %v1685, %v2218
        %v2234 = vmul.f32 %v1686, %v2218
        %v2235 = vmul.f32 %v1687, %v2218
        %v2236 = vmul.f32 %v1688, %v2218
        %v2237 = vmul.f32 %v1689, %v2218
        %v2238 = vmul.f32 %v1690, %v2218
        %v2239 = vmul.f32 %v1691, %v2218
        %v2240 = vmul.f32 %v1692, %v2218
        %v2241 = vmul.f32 %v1693, %v2218
        %v2242 = vmul.f32 %v1694, %v2218
        %v2267 = vrot.slane %v2219, 5
        %v2268 = vrot.slane %v2220, 5
        %v2269 = vsel %vm1475, %v2267, %v2268
        %v2270 = vrot.slane %v2221, 5
        %v2271 = vsel %vm1475, %v2268, %v2270
        %v2272 = vrot.slane %v2222, 5
        %v2273 = vrot.slane %v2223, 5
        %v2274 = vsel %vm1475, %v2272, %v2273
        %v2275 = vrot.slane %v2224, 5
        %v2276 = vsel %vm1475, %v2273, %v2275
        %v2277 = vrot.slane %v2225, 5
        %v2278 = vrot.slane %v2226, 5
        %v2279 = vsel %vm1475, %v2277, %v2278
        %v2280 = vrot.slane %v2227, 5
        %v2281 = vsel %vm1475, %v2278, %v2280
        %v2282 = vrot.slane %v2228, 5
        %v2283 = vrot.slane %v2229, 5
        %v2284 = vsel %vm1475, %v2282, %v2283
        %v2285 = vrot.slane %v2230, 5
        %v2286 = vsel %vm1475, %v2283, %v2285
        %v2287 = vrot.slane %v2231, 5
        %v2288 = vrot.slane %v2232, 5
        %v2289 = vsel %vm1475, %v2287, %v2288
        %v2290 = vrot.slane %v2233, 5
        %v2291 = vsel %vm1475, %v2288, %v2290
        %v2292 = vrot.slane %v2234, 5
        %v2293 = vrot.slane %v2235, 5
        %v2294 = vsel %vm1475, %v2292, %v2293
        %v2295 = vrot.slane %v2236, 5
        %v2296 = vsel %vm1475, %v2293, %v2295
        %v2297 = vrot.slane %v2237, 5
        %v2298 = vrot.slane %v2238, 5
        %v2299 = vsel %vm1475, %v2297, %v2298
        %v2300 = vrot.slane %v2239, 5
        %v2301 = vsel %vm1475, %v2298, %v2300
        %v2302 = vrot.slane %v2240, 5
        %v2303 = vrot.slane %v2241, 5
        %v2304 = vsel %vm1475, %v2302, %v2303
        %v2305 = vrot.slane %v2242, 5
        %v2306 = vsel %vm1475, %v2303, %v2305
        %v2323 = vadd.f32 %v2201, %v2269
        %v2324 = vadd.f32 %v2202, %v2271
        %v2325 = vadd.f32 %v2203, %v2274
        %v2326 = vadd.f32 %v2204, %v2276
        %v2327 = vadd.f32 %v2205, %v2279
        %v2328 = vadd.f32 %v2206, %v2281
        %v2329 = vadd.f32 %v2207, %v2284
        %v2330 = vadd.f32 %v2208, %v2286
        %v2331 = vadd.f32 %v2209, %v2289
        %v2332 = vadd.f32 %v2210, %v2291
        %v2333 = vadd.f32 %v2211, %v2294
        %v2334 = vadd.f32 %v2212, %v2296
        %v2335 = vadd.f32 %v2213, %v2299
        %v2336 = vadd.f32 %v2214, %v2301
        %v2337 = vadd.f32 %v2215, %v2304
        %v2338 = vadd.f32 %v2216, %v2306
        %v2339 = vld [vmem:[%s5 + $0xd] sm:$0x1]
        %v2340 = vperm.slane %v2339, 0
        %v2341 = vmul.f32 %v1671, %v2340
        %v2342 = vmul.f32 %v1672, %v2340
        %v2343 = vmul.f32 %v1673, %v2340
        %v2344 = vmul.f32 %v1674, %v2340
        %v2345 = vmul.f32 %v1675, %v2340
        %v2346 = vmul.f32 %v1676, %v2340
        %v2347 = vmul.f32 %v1677, %v2340
        %v2348 = vmul.f32 %v1678, %v2340
        %v2349 = vmul.f32 %v1679, %v2340
        %v2350 = vmul.f32 %v1680, %v2340
        %v2351 = vmul.f32 %v1681, %v2340
        %v2352 = vmul.f32 %v1682, %v2340
        %v2353 = vmul.f32 %v1683, %v2340
        %v2354 = vmul.f32 %v1684, %v2340
        %v2355 = vmul.f32 %v1685, %v2340
        %v2356 = vmul.f32 %v1686, %v2340
        %v2357 = vmul.f32 %v1687, %v2340
        %v2358 = vmul.f32 %v1688, %v2340
        %v2359 = vmul.f32 %v1689, %v2340
        %v2360 = vmul.f32 %v1690, %v2340
        %v2361 = vmul.f32 %v1691, %v2340
        %v2362 = vmul.f32 %v1692, %v2340
        %v2363 = vmul.f32 %v1693, %v2340
        %v2364 = vmul.f32 %v1694, %v2340
        %v2389 = vrot.slane %v2341, 6
        %v2390 = vrot.slane %v2342, 6
        %v2391 = vsel %vm589, %v2389, %v2390
        %v2392 = vrot.slane %v2343, 6
        %v2393 = vsel %vm589, %v2390, %v2392
        %v2394 = vrot.slane %v2344, 6
        %v2395 = vrot.slane %v2345, 6
        %v2396 = vsel %vm589, %v2394, %v2395
        %v2397 = vrot.slane %v2346, 6
        %v2398 = vsel %vm589, %v2395, %v2397
        %v2399 = vrot.slane %v2347, 6
        %v2400 = vrot.slane %v2348, 6
        %v2401 = vsel %vm589, %v2399, %v2400
        %v2402 = vrot.slane %v2349, 6
        %v2403 = vsel %vm589, %v2400, %v2402
        %v2404 = vrot.slane %v2350, 6
        %v2405 = vrot.slane %v2351, 6
        %v2406 = vsel %vm589, %v2404, %v2405
        %v2407 = vrot.slane %v2352, 6
        %v2408 = vsel %vm589, %v2405, %v2407
        %v2409 = vrot.slane %v2353, 6
        %v2410 = vrot.slane %v2354, 6
        %v2411 = vsel %vm589, %v2409, %v2410
        %v2412 = vrot.slane %v2355, 6
        %v2413 = vsel %vm589, %v2410, %v2412
        %v2414 = vrot.slane %v2356, 6
        %v2415 = vrot.slane %v2357, 6
        %v2416 = vsel %vm589, %v2414, %v2415
        %v2417 = vrot.slane %v2358, 6
        %v2418 = vsel %vm589, %v2415, %v2417
        %v2419 = vrot.slane %v2359, 6
        %v2420 = vrot.slane %v2360, 6
        %v2421 = vsel %vm589, %v2419, %v2420
        %v2422 = vrot.slane %v2361, 6
        %v2423 = vsel %vm589, %v2420, %v2422
        %v2424 = vrot.slane %v2362, 6
        %v2425 = vrot.slane %v2363, 6
        %v2426 = vsel %vm589, %v2424, %v2425
        %v2427 = vrot.slane %v2364, 6
        %v2428 = vsel %vm589, %v2425, %v2427
        %v2445 = vadd.f32 %v2323, %v2391
        %v2446 = vadd.f32 %v2324, %v2393
        %v2447 = vadd.f32 %v2325, %v2396
        %v2448 = vadd.f32 %v2326, %v2398
        %v2449 = vadd.f32 %v2327, %v2401
        %v2450 = vadd.f32 %v2328, %v2403
        %v2451 = vadd.f32 %v2329, %v2406
        %v2452 = vadd.f32 %v2330, %v2408
        %v2453 = vadd.f32 %v2331, %v2411
        %v2454 = vadd.f32 %v2332, %v2413
        %v2455 = vadd.f32 %v2333, %v2416
        %v2456 = vadd.f32 %v2334, %v2418
        %v2457 = vadd.f32 %v2335, %v2421
        %v2458 = vadd.f32 %v2336, %v2423
        %v2459 = vadd.f32 %v2337, %v2426
        %v2460 = vadd.f32 %v2338, %v2428
        %s2461 = scalar_lea.vmem [#allocation2], 48
        %v2462 = vld [vmem:[%s2461] sm:$0xff]
        %v2463 = vld [vmem:[%s2461 + $0x8] sm:$0xff]
        %v2464 = vld [vmem:[%s2461 + $0x10] sm:$0x3f]
        %v2465 = vld [vmem:[%s2461 + $0x18] sm:$0xff]
        %v2466 = vld [vmem:[%s2461 + $0x20] sm:$0xff]
        %v2467 = vld [vmem:[%s2461 + $0x28] sm:$0x3f]
        %v2468 = vld [vmem:[%s2461 + $0x30] sm:$0xff]
        %v2469 = vld [vmem:[%s2461 + $0x38] sm:$0xff]
        %v2470 = vld [vmem:[%s2461 + $0x40] sm:$0x3f]
        %v2471 = vld [vmem:[%s2461 + $0x48] sm:$0xff]
        %v2472 = vld [vmem:[%s2461 + $0x50] sm:$0xff]
        %v2473 = vld [vmem:[%s2461 + $0x58] sm:$0x3f]
        %v2474 = vld [vmem:[%s2461 + $0x60] sm:$0xff]
        %v2475 = vld [vmem:[%s2461 + $0x68] sm:$0xff]
        %v2476 = vld [vmem:[%s2461 + $0x70] sm:$0x3f]
        %v2477 = vld [vmem:[%s2461 + $0x78] sm:$0xff]
        %v2478 = vld [vmem:[%s2461 + $0x80] sm:$0xff]
        %v2479 = vld [vmem:[%s2461 + $0x88] sm:$0x3f]
        %v2480 = vld [vmem:[%s2461 + $0x90] sm:$0xff]
        %v2481 = vld [vmem:[%s2461 + $0x98] sm:$0xff]
        %v2482 = vld [vmem:[%s2461 + $0xa0] sm:$0x3f]
        %v2483 = vld [vmem:[%s2461 + $0xa8] sm:$0xff]
        %v2484 = vld [vmem:[%s2461 + $0xb0] sm:$0xff]
        %v2485 = vld [vmem:[%s2461 + $0xb8] sm:$0x3f]
        %v2486 = vld [vmem:[%s5 + $0xe] sm:$0x1]
        %v2487 = vperm.slane %v2486, 0
        %v2488 = vmul.f32 %v2462, %v2487
        %v2489 = vmul.f32 %v2463, %v2487
        %v2490 = vmul.f32 %v2465, %v2487
        %v2491 = vmul.f32 %v2466, %v2487
        %v2492 = vmul.f32 %v2468, %v2487
        %v2493 = vmul.f32 %v2469, %v2487
        %v2494 = vmul.f32 %v2471, %v2487
        %v2495 = vmul.f32 %v2472, %v2487
        %v2496 = vmul.f32 %v2474, %v2487
        %v2497 = vmul.f32 %v2475, %v2487
        %v2498 = vmul.f32 %v2477, %v2487
        %v2499 = vmul.f32 %v2478, %v2487
        %v2500 = vmul.f32 %v2480, %v2487
        %v2501 = vmul.f32 %v2481, %v2487
        %v2502 = vmul.f32 %v2483, %v2487
        %v2503 = vmul.f32 %v2484, %v2487
        %v2504 = vadd.f32 %v2445, %v2488
        %v2505 = vadd.f32 %v2446, %v2489
        %v2506 = vadd.f32 %v2447, %v2490
        %v2507 = vadd.f32 %v2448, %v2491
        %v2508 = vadd.f32 %v2449, %v2492
        %v2509 = vadd.f32 %v2450, %v2493
        %v2510 = vadd.f32 %v2451, %v2494
        %v2511 = vadd.f32 %v2452, %v2495
        %v2512 = vadd.f32 %v2453, %v2496
        %v2513 = vadd.f32 %v2454, %v2497
        %v2514 = vadd.f32 %v2455, %v2498
        %v2515 = vadd.f32 %v2456, %v2499
        %v2516 = vadd.f32 %v2457, %v2500
        %v2517 = vadd.f32 %v2458, %v2501
        %v2518 = vadd.f32 %v2459, %v2502
        %v2519 = vadd.f32 %v2460, %v2503
        %v2520 = vld [vmem:[%s5 + $0xf] sm:$0x1]
        %v2521 = vperm.slane %v2520, 0
        %v2522 = vmul.f32 %v2462, %v2521
        %v2523 = vmul.f32 %v2463, %v2521
        %v2524 = vmul.f32 %v2464, %v2521
        %v2525 = vmul.f32 %v2465, %v2521
        %v2526 = vmul.f32 %v2466, %v2521
        %v2527 = vmul.f32 %v2467, %v2521
        %v2528 = vmul.f32 %v2468, %v2521
        %v2529 = vmul.f32 %v2469, %v2521
        %v2530 = vmul.f32 %v2470, %v2521
        %v2531 = vmul.f32 %v2471, %v2521
        %v2532 = vmul.f32 %v2472, %v2521
        %v2533 = vmul.f32 %v2473, %v2521
        %v2534 = vmul.f32 %v2474, %v2521
        %v2535 = vmul.f32 %v2475, %v2521
        %v2536 = vmul.f32 %v2476, %v2521
        %v2537 = vmul.f32 %v2477, %v2521
        %v2538 = vmul.f32 %v2478, %v2521
        %v2539 = vmul.f32 %v2479, %v2521
        %v2540 = vmul.f32 %v2480, %v2521
        %v2541 = vmul.f32 %v2481, %v2521
        %v2542 = vmul.f32 %v2482, %v2521
        %v2543 = vmul.f32 %v2483, %v2521
        %v2544 = vmul.f32 %v2484, %v2521
        %v2545 = vmul.f32 %v2485, %v2521
        %v2570 = vrot.slane %v2522, 1
        %v2571 = vrot.slane %v2523, 1
        %v2572 = vsel %vm983, %v2570, %v2571
        %v2573 = vrot.slane %v2524, 1
        %v2574 = vsel %vm983, %v2571, %v2573
        %v2575 = vrot.slane %v2525, 1
        %v2576 = vrot.slane %v2526, 1
        %v2577 = vsel %vm983, %v2575, %v2576
        %v2578 = vrot.slane %v2527, 1
        %v2579 = vsel %vm983, %v2576, %v2578
        %v2580 = vrot.slane %v2528, 1
        %v2581 = vrot.slane %v2529, 1
        %v2582 = vsel %vm983, %v2580, %v2581
        %v2583 = vrot.slane %v2530, 1
        %v2584 = vsel %vm983, %v2581, %v2583
        %v2585 = vrot.slane %v2531, 1
        %v2586 = vrot.slane %v2532, 1
        %v2587 = vsel %vm983, %v2585, %v2586
        %v2588 = vrot.slane %v2533, 1
        %v2589 = vsel %vm983, %v2586, %v2588
        %v2590 = vrot.slane %v2534, 1
        %v2591 = vrot.slane %v2535, 1
        %v2592 = vsel %vm983, %v2590, %v2591
        %v2593 = vrot.slane %v2536, 1
        %v2594 = vsel %vm983, %v2591, %v2593
        %v2595 = vrot.slane %v2537, 1
        %v2596 = vrot.slane %v2538, 1
        %v2597 = vsel %vm983, %v2595, %v2596
        %v2598 = vrot.slane %v2539, 1
        %v2599 = vsel %vm983, %v2596, %v2598
        %v2600 = vrot.slane %v2540, 1
        %v2601 = vrot.slane %v2541, 1
        %v2602 = vsel %vm983, %v2600, %v2601
        %v2603 = vrot.slane %v2542, 1
        %v2604 = vsel %vm983, %v2601, %v2603
        %v2605 = vrot.slane %v2543, 1
        %v2606 = vrot.slane %v2544, 1
        %v2607 = vsel %vm983, %v2605, %v2606
        %v2608 = vrot.slane %v2545, 1
        %v2609 = vsel %vm983, %v2606, %v2608
        %v2626 = vadd.f32 %v2504, %v2572
        %v2627 = vadd.f32 %v2505, %v2574
        %v2628 = vadd.f32 %v2506, %v2577
        %v2629 = vadd.f32 %v2507, %v2579
        %v2630 = vadd.f32 %v2508, %v2582
        %v2631 = vadd.f32 %v2509, %v2584
        %v2632 = vadd.f32 %v2510, %v2587
        %v2633 = vadd.f32 %v2511, %v2589
        %v2634 = vadd.f32 %v2512, %v2592
        %v2635 = vadd.f32 %v2513, %v2594
        %v2636 = vadd.f32 %v2514, %v2597
        %v2637 = vadd.f32 %v2515, %v2599
        %v2638 = vadd.f32 %v2516, %v2602
        %v2639 = vadd.f32 %v2517, %v2604
        %v2640 = vadd.f32 %v2518, %v2607
        %v2641 = vadd.f32 %v2519, %v2609
        %v2642 = vld [vmem:[%s5 + $0x10] sm:$0x1]
        %v2643 = vperm.slane %v2642, 0
        %v2644 = vmul.f32 %v2462, %v2643
        %v2645 = vmul.f32 %v2463, %v2643
        %v2646 = vmul.f32 %v2464, %v2643
        %v2647 = vmul.f32 %v2465, %v2643
        %v2648 = vmul.f32 %v2466, %v2643
        %v2649 = vmul.f32 %v2467, %v2643
        %v2650 = vmul.f32 %v2468, %v2643
        %v2651 = vmul.f32 %v2469, %v2643
        %v2652 = vmul.f32 %v2470, %v2643
        %v2653 = vmul.f32 %v2471, %v2643
        %v2654 = vmul.f32 %v2472, %v2643
        %v2655 = vmul.f32 %v2473, %v2643
        %v2656 = vmul.f32 %v2474, %v2643
        %v2657 = vmul.f32 %v2475, %v2643
        %v2658 = vmul.f32 %v2476, %v2643
        %v2659 = vmul.f32 %v2477, %v2643
        %v2660 = vmul.f32 %v2478, %v2643
        %v2661 = vmul.f32 %v2479, %v2643
        %v2662 = vmul.f32 %v2480, %v2643
        %v2663 = vmul.f32 %v2481, %v2643
        %v2664 = vmul.f32 %v2482, %v2643
        %v2665 = vmul.f32 %v2483, %v2643
        %v2666 = vmul.f32 %v2484, %v2643
        %v2667 = vmul.f32 %v2485, %v2643
        %v2692 = vrot.slane %v2644, 2
        %v2693 = vrot.slane %v2645, 2
        %v2694 = vsel %vm1106, %v2692, %v2693
        %v2695 = vrot.slane %v2646, 2
        %v2696 = vsel %vm1106, %v2693, %v2695
        %v2697 = vrot.slane %v2647, 2
        %v2698 = vrot.slane %v2648, 2
        %v2699 = vsel %vm1106, %v2697, %v2698
        %v2700 = vrot.slane %v2649, 2
        %v2701 = vsel %vm1106, %v2698, %v2700
        %v2702 = vrot.slane %v2650, 2
        %v2703 = vrot.slane %v2651, 2
        %v2704 = vsel %vm1106, %v2702, %v2703
        %v2705 = vrot.slane %v2652, 2
        %v2706 = vsel %vm1106, %v2703, %v2705
        %v2707 = vrot.slane %v2653, 2
        %v2708 = vrot.slane %v2654, 2
        %v2709 = vsel %vm1106, %v2707, %v2708
        %v2710 = vrot.slane %v2655, 2
        %v2711 = vsel %vm1106, %v2708, %v2710
        %v2712 = vrot.slane %v2656, 2
        %v2713 = vrot.slane %v2657, 2
        %v2714 = vsel %vm1106, %v2712, %v2713
        %v2715 = vrot.slane %v2658, 2
        %v2716 = vsel %vm1106, %v2713, %v2715
        %v2717 = vrot.slane %v2659, 2
        %v2718 = vrot.slane %v2660, 2
        %v2719 = vsel %vm1106, %v2717, %v2718
        %v2720 = vrot.slane %v2661, 2
        %v2721 = vsel %vm1106, %v2718, %v2720
        %v2722 = vrot.slane %v2662, 2
        %v2723 = vrot.slane %v2663, 2
        %v2724 = vsel %vm1106, %v2722, %v2723
        %v2725 = vrot.slane %v2664, 2
        %v2726 = vsel %vm1106, %v2723, %v2725
        %v2727 = vrot.slane %v2665, 2
        %v2728 = vrot.slane %v2666, 2
        %v2729 = vsel %vm1106, %v2727, %v2728
        %v2730 = vrot.slane %v2667, 2
        %v2731 = vsel %vm1106, %v2728, %v2730
        %v2748 = vadd.f32 %v2626, %v2694
        %v2749 = vadd.f32 %v2627, %v2696
        %v2750 = vadd.f32 %v2628, %v2699
        %v2751 = vadd.f32 %v2629, %v2701
        %v2752 = vadd.f32 %v2630, %v2704
        %v2753 = vadd.f32 %v2631, %v2706
        %v2754 = vadd.f32 %v2632, %v2709
        %v2755 = vadd.f32 %v2633, %v2711
        %v2756 = vadd.f32 %v2634, %v2714
        %v2757 = vadd.f32 %v2635, %v2716
        %v2758 = vadd.f32 %v2636, %v2719
        %v2759 = vadd.f32 %v2637, %v2721
        %v2760 = vadd.f32 %v2638, %v2724
        %v2761 = vadd.f32 %v2639, %v2726
        %v2762 = vadd.f32 %v2640, %v2729
        %v2763 = vadd.f32 %v2641, %v2731
        %v2764 = vld [vmem:[%s5 + $0x11] sm:$0x1]
        %v2765 = vperm.slane %v2764, 0
        %v2766 = vmul.f32 %v2462, %v2765
        %v2767 = vmul.f32 %v2463, %v2765
        %v2768 = vmul.f32 %v2464, %v2765
        %v2769 = vmul.f32 %v2465, %v2765
        %v2770 = vmul.f32 %v2466, %v2765
        %v2771 = vmul.f32 %v2467, %v2765
        %v2772 = vmul.f32 %v2468, %v2765
        %v2773 = vmul.f32 %v2469, %v2765
        %v2774 = vmul.f32 %v2470, %v2765
        %v2775 = vmul.f32 %v2471, %v2765
        %v2776 = vmul.f32 %v2472, %v2765
        %v2777 = vmul.f32 %v2473, %v2765
        %v2778 = vmul.f32 %v2474, %v2765
        %v2779 = vmul.f32 %v2475, %v2765
        %v2780 = vmul.f32 %v2476, %v2765
        %v2781 = vmul.f32 %v2477, %v2765
        %v2782 = vmul.f32 %v2478, %v2765
        %v2783 = vmul.f32 %v2479, %v2765
        %v2784 = vmul.f32 %v2480, %v2765
        %v2785 = vmul.f32 %v2481, %v2765
        %v2786 = vmul.f32 %v2482, %v2765
        %v2787 = vmul.f32 %v2483, %v2765
        %v2788 = vmul.f32 %v2484, %v2765
        %v2789 = vmul.f32 %v2485, %v2765
        %v2814 = vrot.slane %v2766, 3
        %v2815 = vrot.slane %v2767, 3
        %v2816 = vsel %vm1229, %v2814, %v2815
        %v2817 = vrot.slane %v2768, 3
        %v2818 = vsel %vm1229, %v2815, %v2817
        %v2819 = vrot.slane %v2769, 3
        %v2820 = vrot.slane %v2770, 3
        %v2821 = vsel %vm1229, %v2819, %v2820
        %v2822 = vrot.slane %v2771, 3
        %v2823 = vsel %vm1229, %v2820, %v2822
        %v2824 = vrot.slane %v2772, 3
        %v2825 = vrot.slane %v2773, 3
        %v2826 = vsel %vm1229, %v2824, %v2825
        %v2827 = vrot.slane %v2774, 3
        %v2828 = vsel %vm1229, %v2825, %v2827
        %v2829 = vrot.slane %v2775, 3
        %v2830 = vrot.slane %v2776, 3
        %v2831 = vsel %vm1229, %v2829, %v2830
        %v2832 = vrot.slane %v2777, 3
        %v2833 = vsel %vm1229, %v2830, %v2832
        %v2834 = vrot.slane %v2778, 3
        %v2835 = vrot.slane %v2779, 3
        %v2836 = vsel %vm1229, %v2834, %v2835
        %v2837 = vrot.slane %v2780, 3
        %v2838 = vsel %vm1229, %v2835, %v2837
        %v2839 = vrot.slane %v2781, 3
        %v2840 = vrot.slane %v2782, 3
        %v2841 = vsel %vm1229, %v2839, %v2840
        %v2842 = vrot.slane %v2783, 3
        %v2843 = vsel %vm1229, %v2840, %v2842
        %v2844 = vrot.slane %v2784, 3
        %v2845 = vrot.slane %v2785, 3
        %v2846 = vsel %vm1229, %v2844, %v2845
        %v2847 = vrot.slane %v2786, 3
        %v2848 = vsel %vm1229, %v2845, %v2847
        %v2849 = vrot.slane %v2787, 3
        %v2850 = vrot.slane %v2788, 3
        %v2851 = vsel %vm1229, %v2849, %v2850
        %v2852 = vrot.slane %v2789, 3
        %v2853 = vsel %vm1229, %v2850, %v2852
        %v2870 = vadd.f32 %v2748, %v2816
        %v2871 = vadd.f32 %v2749, %v2818
        %v2872 = vadd.f32 %v2750, %v2821
        %v2873 = vadd.f32 %v2751, %v2823
        %v2874 = vadd.f32 %v2752, %v2826
        %v2875 = vadd.f32 %v2753, %v2828
        %v2876 = vadd.f32 %v2754, %v2831
        %v2877 = vadd.f32 %v2755, %v2833
        %v2878 = vadd.f32 %v2756, %v2836
        %v2879 = vadd.f32 %v2757, %v2838
        %v2880 = vadd.f32 %v2758, %v2841
        %v2881 = vadd.f32 %v2759, %v2843
        %v2882 = vadd.f32 %v2760, %v2846
        %v2883 = vadd.f32 %v2761, %v2848
        %v2884 = vadd.f32 %v2762, %v2851
        %v2885 = vadd.f32 %v2763, %v2853
        %v2886 = vld [vmem:[%s5 + $0x12] sm:$0x1]
        %v2887 = vperm.slane %v2886, 0
        %v2888 = vmul.f32 %v2462, %v2887
        %v2889 = vmul.f32 %v2463, %v2887
        %v2890 = vmul.f32 %v2464, %v2887
        %v2891 = vmul.f32 %v2465, %v2887
        %v2892 = vmul.f32 %v2466, %v2887
        %v2893 = vmul.f32 %v2467, %v2887
        %v2894 = vmul.f32 %v2468, %v2887
        %v2895 = vmul.f32 %v2469, %v2887
        %v2896 = vmul.f32 %v2470, %v2887
        %v2897 = vmul.f32 %v2471, %v2887
        %v2898 = vmul.f32 %v2472, %v2887
        %v2899 = vmul.f32 %v2473, %v2887
        %v2900 = vmul.f32 %v2474, %v2887
        %v2901 = vmul.f32 %v2475, %v2887
        %v2902 = vmul.f32 %v2476, %v2887
        %v2903 = vmul.f32 %v2477, %v2887
        %v2904 = vmul.f32 %v2478, %v2887
        %v2905 = vmul.f32 %v2479, %v2887
        %v2906 = vmul.f32 %v2480, %v2887
        %v2907 = vmul.f32 %v2481, %v2887
        %v2908 = vmul.f32 %v2482, %v2887
        %v2909 = vmul.f32 %v2483, %v2887
        %v2910 = vmul.f32 %v2484, %v2887
        %v2911 = vmul.f32 %v2485, %v2887
        %v2936 = vrot.slane %v2888, 4
        %v2937 = vrot.slane %v2889, 4
        %v2938 = vsel %vm1352, %v2936, %v2937
        %v2939 = vrot.slane %v2890, 4
        %v2940 = vsel %vm1352, %v2937, %v2939
        %v2941 = vrot.slane %v2891, 4
        %v2942 = vrot.slane %v2892, 4
        %v2943 = vsel %vm1352, %v2941, %v2942
        %v2944 = vrot.slane %v2893, 4
        %v2945 = vsel %vm1352, %v2942, %v2944
        %v2946 = vrot.slane %v2894, 4
        %v2947 = vrot.slane %v2895, 4
        %v2948 = vsel %vm1352, %v2946, %v2947
        %v2949 = vrot.slane %v2896, 4
        %v2950 = vsel %vm1352, %v2947, %v2949
        %v2951 = vrot.slane %v2897, 4
        %v2952 = vrot.slane %v2898, 4
        %v2953 = vsel %vm1352, %v2951, %v2952
        %v2954 = vrot.slane %v2899, 4
        %v2955 = vsel %vm1352, %v2952, %v2954
        %v2956 = vrot.slane %v2900, 4
        %v2957 = vrot.slane %v2901, 4
        %v2958 = vsel %vm1352, %v2956, %v2957
        %v2959 = vrot.slane %v2902, 4
        %v2960 = vsel %vm1352, %v2957, %v2959
        %v2961 = vrot.slane %v2903, 4
        %v2962 = vrot.slane %v2904, 4
        %v2963 = vsel %vm1352, %v2961, %v2962
        %v2964 = vrot.slane %v2905, 4
        %v2965 = vsel %vm1352, %v2962, %v2964
        %v2966 = vrot.slane %v2906, 4
        %v2967 = vrot.slane %v2907, 4
        %v2968 = vsel %vm1352, %v2966, %v2967
        %v2969 = vrot.slane %v2908, 4
        %v2970 = vsel %vm1352, %v2967, %v2969
        %v2971 = vrot.slane %v2909, 4
        %v2972 = vrot.slane %v2910, 4
        %v2973 = vsel %vm1352, %v2971, %v2972
        %v2974 = vrot.slane %v2911, 4
        %v2975 = vsel %vm1352, %v2972, %v2974
        %v2992 = vadd.f32 %v2870, %v2938
        %v2993 = vadd.f32 %v2871, %v2940
        %v2994 = vadd.f32 %v2872, %v2943
        %v2995 = vadd.f32 %v2873, %v2945
        %v2996 = vadd.f32 %v2874, %v2948
        %v2997 = vadd.f32 %v2875, %v2950
        %v2998 = vadd.f32 %v2876, %v2953
        %v2999 = vadd.f32 %v2877, %v2955
        %v3000 = vadd.f32 %v2878, %v2958
        %v3001 = vadd.f32 %v2879, %v2960
        %v3002 = vadd.f32 %v2880, %v2963
        %v3003 = vadd.f32 %v2881, %v2965
        %v3004 = vadd.f32 %v2882, %v2968
        %v3005 = vadd.f32 %v2883, %v2970
        %v3006 = vadd.f32 %v2884, %v2973
        %v3007 = vadd.f32 %v2885, %v2975
        %v3008 = vld [vmem:[%s5 + $0x13] sm:$0x1]
        %v3009 = vperm.slane %v3008, 0
        %v3010 = vmul.f32 %v2462, %v3009
        %v3011 = vmul.f32 %v2463, %v3009
        %v3012 = vmul.f32 %v2464, %v3009
        %v3013 = vmul.f32 %v2465, %v3009
        %v3014 = vmul.f32 %v2466, %v3009
        %v3015 = vmul.f32 %v2467, %v3009
        %v3016 = vmul.f32 %v2468, %v3009
        %v3017 = vmul.f32 %v2469, %v3009
        %v3018 = vmul.f32 %v2470, %v3009
        %v3019 = vmul.f32 %v2471, %v3009
        %v3020 = vmul.f32 %v2472, %v3009
        %v3021 = vmul.f32 %v2473, %v3009
        %v3022 = vmul.f32 %v2474, %v3009
        %v3023 = vmul.f32 %v2475, %v3009
        %v3024 = vmul.f32 %v2476, %v3009
        %v3025 = vmul.f32 %v2477, %v3009
        %v3026 = vmul.f32 %v2478, %v3009
        %v3027 = vmul.f32 %v2479, %v3009
        %v3028 = vmul.f32 %v2480, %v3009
        %v3029 = vmul.f32 %v2481, %v3009
        %v3030 = vmul.f32 %v2482, %v3009
        %v3031 = vmul.f32 %v2483, %v3009
        %v3032 = vmul.f32 %v2484, %v3009
        %v3033 = vmul.f32 %v2485, %v3009
        %v3058 = vrot.slane %v3010, 5
        %v3059 = vrot.slane %v3011, 5
        %v3060 = vsel %vm1475, %v3058, %v3059
        %v3061 = vrot.slane %v3012, 5
        %v3062 = vsel %vm1475, %v3059, %v3061
        %v3063 = vrot.slane %v3013, 5
        %v3064 = vrot.slane %v3014, 5
        %v3065 = vsel %vm1475, %v3063, %v3064
        %v3066 = vrot.slane %v3015, 5
        %v3067 = vsel %vm1475, %v3064, %v3066
        %v3068 = vrot.slane %v3016, 5
        %v3069 = vrot.slane %v3017, 5
        %v3070 = vsel %vm1475, %v3068, %v3069
        %v3071 = vrot.slane %v3018, 5
        %v3072 = vsel %vm1475, %v3069, %v3071
        %v3073 = vrot.slane %v3019, 5
        %v3074 = vrot.slane %v3020, 5
        %v3075 = vsel %vm1475, %v3073, %v3074
        %v3076 = vrot.slane %v3021, 5
        %v3077 = vsel %vm1475, %v3074, %v3076
        %v3078 = vrot.slane %v3022, 5
        %v3079 = vrot.slane %v3023, 5
        %v3080 = vsel %vm1475, %v3078, %v3079
        %v3081 = vrot.slane %v3024, 5
        %v3082 = vsel %vm1475, %v3079, %v3081
        %v3083 = vrot.slane %v3025, 5
        %v3084 = vrot.slane %v3026, 5
        %v3085 = vsel %vm1475, %v3083, %v3084
        %v3086 = vrot.slane %v3027, 5
        %v3087 = vsel %vm1475, %v3084, %v3086
        %v3088 = vrot.slane %v3028, 5
        %v3089 = vrot.slane %v3029, 5
        %v3090 = vsel %vm1475, %v3088, %v3089
        %v3091 = vrot.slane %v3030, 5
        %v3092 = vsel %vm1475, %v3089, %v3091
        %v3093 = vrot.slane %v3031, 5
        %v3094 = vrot.slane %v3032, 5
        %v3095 = vsel %vm1475, %v3093, %v3094
        %v3096 = vrot.slane %v3033, 5
        %v3097 = vsel %vm1475, %v3094, %v3096
        %v3114 = vadd.f32 %v2992, %v3060
        %v3115 = vadd.f32 %v2993, %v3062
        %v3116 = vadd.f32 %v2994, %v3065
        %v3117 = vadd.f32 %v2995, %v3067
        %v3118 = vadd.f32 %v2996, %v3070
        %v3119 = vadd.f32 %v2997, %v3072
        %v3120 = vadd.f32 %v2998, %v3075
        %v3121 = vadd.f32 %v2999, %v3077
        %v3122 = vadd.f32 %v3000, %v3080
        %v3123 = vadd.f32 %v3001, %v3082
        %v3124 = vadd.f32 %v3002, %v3085
        %v3125 = vadd.f32 %v3003, %v3087
        %v3126 = vadd.f32 %v3004, %v3090
        %v3127 = vadd.f32 %v3005, %v3092
        %v3128 = vadd.f32 %v3006, %v3095
        %v3129 = vadd.f32 %v3007, %v3097
        %v3130 = vld [vmem:[%s5 + $0x14] sm:$0x1]
        %v3131 = vperm.slane %v3130, 0
        %v3132 = vmul.f32 %v2462, %v3131
        %v3133 = vmul.f32 %v2463, %v3131
        %v3134 = vmul.f32 %v2464, %v3131
        %v3135 = vmul.f32 %v2465, %v3131
        %v3136 = vmul.f32 %v2466, %v3131
        %v3137 = vmul.f32 %v2467, %v3131
        %v3138 = vmul.f32 %v2468, %v3131
        %v3139 = vmul.f32 %v2469, %v3131
        %v3140 = vmul.f32 %v2470, %v3131
        %v3141 = vmul.f32 %v2471, %v3131
        %v3142 = vmul.f32 %v2472, %v3131
        %v3143 = vmul.f32 %v2473, %v3131
        %v3144 = vmul.f32 %v2474, %v3131
        %v3145 = vmul.f32 %v2475, %v3131
        %v3146 = vmul.f32 %v2476, %v3131
        %v3147 = vmul.f32 %v2477, %v3131
        %v3148 = vmul.f32 %v2478, %v3131
        %v3149 = vmul.f32 %v2479, %v3131
        %v3150 = vmul.f32 %v2480, %v3131
        %v3151 = vmul.f32 %v2481, %v3131
        %v3152 = vmul.f32 %v2482, %v3131
        %v3153 = vmul.f32 %v2483, %v3131
        %v3154 = vmul.f32 %v2484, %v3131
        %v3155 = vmul.f32 %v2485, %v3131
        %v3180 = vrot.slane %v3132, 6
        %v3181 = vrot.slane %v3133, 6
        %v3182 = vsel %vm589, %v3180, %v3181
        %v3183 = vrot.slane %v3134, 6
        %v3184 = vsel %vm589, %v3181, %v3183
        %v3185 = vrot.slane %v3135, 6
        %v3186 = vrot.slane %v3136, 6
        %v3187 = vsel %vm589, %v3185, %v3186
        %v3188 = vrot.slane %v3137, 6
        %v3189 = vsel %vm589, %v3186, %v3188
        %v3190 = vrot.slane %v3138, 6
        %v3191 = vrot.slane %v3139, 6
        %v3192 = vsel %vm589, %v3190, %v3191
        %v3193 = vrot.slane %v3140, 6
        %v3194 = vsel %vm589, %v3191, %v3193
        %v3195 = vrot.slane %v3141, 6
        %v3196 = vrot.slane %v3142, 6
        %v3197 = vsel %vm589, %v3195, %v3196
        %v3198 = vrot.slane %v3143, 6
        %v3199 = vsel %vm589, %v3196, %v3198
        %v3200 = vrot.slane %v3144, 6
        %v3201 = vrot.slane %v3145, 6
        %v3202 = vsel %vm589, %v3200, %v3201
        %v3203 = vrot.slane %v3146, 6
        %v3204 = vsel %vm589, %v3201, %v3203
        %v3205 = vrot.slane %v3147, 6
        %v3206 = vrot.slane %v3148, 6
        %v3207 = vsel %vm589, %v3205, %v3206
        %v3208 = vrot.slane %v3149, 6
        %v3209 = vsel %vm589, %v3206, %v3208
        %v3210 = vrot.slane %v3150, 6
        %v3211 = vrot.slane %v3151, 6
        %v3212 = vsel %vm589, %v3210, %v3211
        %v3213 = vrot.slane %v3152, 6
        %v3214 = vsel %vm589, %v3211, %v3213
        %v3215 = vrot.slane %v3153, 6
        %v3216 = vrot.slane %v3154, 6
        %v3217 = vsel %vm589, %v3215, %v3216
        %v3218 = vrot.slane %v3155, 6
        %v3219 = vsel %vm589, %v3216, %v3218
        %v3236 = vadd.f32 %v3114, %v3182
        %v3237 = vadd.f32 %v3115, %v3184
        %v3238 = vadd.f32 %v3116, %v3187
        %v3239 = vadd.f32 %v3117, %v3189
        %v3240 = vadd.f32 %v3118, %v3192
        %v3241 = vadd.f32 %v3119, %v3194
        %v3242 = vadd.f32 %v3120, %v3197
        %v3243 = vadd.f32 %v3121, %v3199
        %v3244 = vadd.f32 %v3122, %v3202
        %v3245 = vadd.f32 %v3123, %v3204
        %v3246 = vadd.f32 %v3124, %v3207
        %v3247 = vadd.f32 %v3125, %v3209
        %v3248 = vadd.f32 %v3126, %v3212
        %v3249 = vadd.f32 %v3127, %v3214
        %v3250 = vadd.f32 %v3128, %v3217
        %v3251 = vadd.f32 %v3129, %v3219
        %s3252 = scalar_lea.vmem [#allocation2], 72
        %v3253 = vld [vmem:[%s3252] sm:$0xff]
        %v3254 = vld [vmem:[%s3252 + $0x8] sm:$0xff]
        %v3255 = vld [vmem:[%s3252 + $0x10] sm:$0x3f]
        %v3256 = vld [vmem:[%s3252 + $0x18] sm:$0xff]
        %v3257 = vld [vmem:[%s3252 + $0x20] sm:$0xff]
        %v3258 = vld [vmem:[%s3252 + $0x28] sm:$0x3f]
        %v3259 = vld [vmem:[%s3252 + $0x30] sm:$0xff]
        %v3260 = vld [vmem:[%s3252 + $0x38] sm:$0xff]
        %v3261 = vld [vmem:[%s3252 + $0x40] sm:$0x3f]
        %v3262 = vld [vmem:[%s3252 + $0x48] sm:$0xff]
        %v3263 = vld [vmem:[%s3252 + $0x50] sm:$0xff]
        %v3264 = vld [vmem:[%s3252 + $0x58] sm:$0x3f]
        %v3265 = vld [vmem:[%s3252 + $0x60] sm:$0xff]
        %v3266 = vld [vmem:[%s3252 + $0x68] sm:$0xff]
        %v3267 = vld [vmem:[%s3252 + $0x70] sm:$0x3f]
        %v3268 = vld [vmem:[%s3252 + $0x78] sm:$0xff]
        %v3269 = vld [vmem:[%s3252 + $0x80] sm:$0xff]
        %v3270 = vld [vmem:[%s3252 + $0x88] sm:$0x3f]
        %v3271 = vld [vmem:[%s3252 + $0x90] sm:$0xff]
        %v3272 = vld [vmem:[%s3252 + $0x98] sm:$0xff]
        %v3273 = vld [vmem:[%s3252 + $0xa0] sm:$0x3f]
        %v3274 = vld [vmem:[%s3252 + $0xa8] sm:$0xff]
        %v3275 = vld [vmem:[%s3252 + $0xb0] sm:$0xff]
        %v3276 = vld [vmem:[%s3252 + $0xb8] sm:$0x3f]
        %v3277 = vld [vmem:[%s5 + $0x15] sm:$0x1]
        %v3278 = vperm.slane %v3277, 0
        %v3279 = vmul.f32 %v3253, %v3278
        %v3280 = vmul.f32 %v3254, %v3278
        %v3281 = vmul.f32 %v3256, %v3278
        %v3282 = vmul.f32 %v3257, %v3278
        %v3283 = vmul.f32 %v3259, %v3278
        %v3284 = vmul.f32 %v3260, %v3278
        %v3285 = vmul.f32 %v3262, %v3278
        %v3286 = vmul.f32 %v3263, %v3278
        %v3287 = vmul.f32 %v3265, %v3278
        %v3288 = vmul.f32 %v3266, %v3278
        %v3289 = vmul.f32 %v3268, %v3278
        %v3290 = vmul.f32 %v3269, %v3278
        %v3291 = vmul.f32 %v3271, %v3278
        %v3292 = vmul.f32 %v3272, %v3278
        %v3293 = vmul.f32 %v3274, %v3278
        %v3294 = vmul.f32 %v3275, %v3278
        %v3295 = vadd.f32 %v3236, %v3279
        %v3296 = vadd.f32 %v3237, %v3280
        %v3297 = vadd.f32 %v3238, %v3281
        %v3298 = vadd.f32 %v3239, %v3282
        %v3299 = vadd.f32 %v3240, %v3283
        %v3300 = vadd.f32 %v3241, %v3284
        %v3301 = vadd.f32 %v3242, %v3285
        %v3302 = vadd.f32 %v3243, %v3286
        %v3303 = vadd.f32 %v3244, %v3287
        %v3304 = vadd.f32 %v3245, %v3288
        %v3305 = vadd.f32 %v3246, %v3289
        %v3306 = vadd.f32 %v3247, %v3290
        %v3307 = vadd.f32 %v3248, %v3291
        %v3308 = vadd.f32 %v3249, %v3292
        %v3309 = vadd.f32 %v3250, %v3293
        %v3310 = vadd.f32 %v3251, %v3294
        %v3311 = vld [vmem:[%s5 + $0x16] sm:$0x1]
        %v3312 = vperm.slane %v3311, 0
        %v3313 = vmul.f32 %v3253, %v3312
        %v3314 = vmul.f32 %v3254, %v3312
        %v3315 = vmul.f32 %v3255, %v3312
        %v3316 = vmul.f32 %v3256, %v3312
        %v3317 = vmul.f32 %v3257, %v3312
        %v3318 = vmul.f32 %v3258, %v3312
        %v3319 = vmul.f32 %v3259, %v3312
        %v3320 = vmul.f32 %v3260, %v3312
        %v3321 = vmul.f32 %v3261, %v3312
        %v3322 = vmul.f32 %v3262, %v3312
        %v3323 = vmul.f32 %v3263, %v3312
        %v3324 = vmul.f32 %v3264, %v3312
        %v3325 = vmul.f32 %v3265, %v3312
        %v3326 = vmul.f32 %v3266, %v3312
        %v3327 = vmul.f32 %v3267, %v3312
        %v3328 = vmul.f32 %v3268, %v3312
        %v3329 = vmul.f32 %v3269, %v3312
        %v3330 = vmul.f32 %v3270, %v3312
        %v3331 = vmul.f32 %v3271, %v3312
        %v3332 = vmul.f32 %v3272, %v3312
        %v3333 = vmul.f32 %v3273, %v3312
        %v3334 = vmul.f32 %v3274, %v3312
        %v3335 = vmul.f32 %v3275, %v3312
        %v3336 = vmul.f32 %v3276, %v3312
        %v3361 = vrot.slane %v3313, 1
        %v3362 = vrot.slane %v3314, 1
        %v3363 = vsel %vm983, %v3361, %v3362
        %v3364 = vrot.slane %v3315, 1
        %v3365 = vsel %vm983, %v3362, %v3364
        %v3366 = vrot.slane %v3316, 1
        %v3367 = vrot.slane %v3317, 1
        %v3368 = vsel %vm983, %v3366, %v3367
        %v3369 = vrot.slane %v3318, 1
        %v3370 = vsel %vm983, %v3367, %v3369
        %v3371 = vrot.slane %v3319, 1
        %v3372 = vrot.slane %v3320, 1
        %v3373 = vsel %vm983, %v3371, %v3372
        %v3374 = vrot.slane %v3321, 1
        %v3375 = vsel %vm983, %v3372, %v3374
        %v3376 = vrot.slane %v3322, 1
        %v3377 = vrot.slane %v3323, 1
        %v3378 = vsel %vm983, %v3376, %v3377
        %v3379 = vrot.slane %v3324, 1
        %v3380 = vsel %vm983, %v3377, %v3379
        %v3381 = vrot.slane %v3325, 1
        %v3382 = vrot.slane %v3326, 1
        %v3383 = vsel %vm983, %v3381, %v3382
        %v3384 = vrot.slane %v3327, 1
        %v3385 = vsel %vm983, %v3382, %v3384
        %v3386 = vrot.slane %v3328, 1
        %v3387 = vrot.slane %v3329, 1
        %v3388 = vsel %vm983, %v3386, %v3387
        %v3389 = vrot.slane %v3330, 1
        %v3390 = vsel %vm983, %v3387, %v3389
        %v3391 = vrot.slane %v3331, 1
        %v3392 = vrot.slane %v3332, 1
        %v3393 = vsel %vm983, %v3391, %v3392
        %v3394 = vrot.slane %v3333, 1
        %v3395 = vsel %vm983, %v3392, %v3394
        %v3396 = vrot.slane %v3334, 1
        %v3397 = vrot.slane %v3335, 1
        %v3398 = vsel %vm983, %v3396, %v3397
        %v3399 = vrot.slane %v3336, 1
        %v3400 = vsel %vm983, %v3397, %v3399
        %v3417 = vadd.f32 %v3295, %v3363
        %v3418 = vadd.f32 %v3296, %v3365
        %v3419 = vadd.f32 %v3297, %v3368
        %v3420 = vadd.f32 %v3298, %v3370
        %v3421 = vadd.f32 %v3299, %v3373
        %v3422 = vadd.f32 %v3300, %v3375
        %v3423 = vadd.f32 %v3301, %v3378
        %v3424 = vadd.f32 %v3302, %v3380
        %v3425 = vadd.f32 %v3303, %v3383
        %v3426 = vadd.f32 %v3304, %v3385
        %v3427 = vadd.f32 %v3305, %v3388
        %v3428 = vadd.f32 %v3306, %v3390
        %v3429 = vadd.f32 %v3307, %v3393
        %v3430 = vadd.f32 %v3308, %v3395
        %v3431 = vadd.f32 %v3309, %v3398
        %v3432 = vadd.f32 %v3310, %v3400
        %v3433 = vld [vmem:[%s5 + $0x17] sm:$0x1]
        %v3434 = vperm.slane %v3433, 0
        %v3435 = vmul.f32 %v3253, %v3434
        %v3436 = vmul.f32 %v3254, %v3434
        %v3437 = vmul.f32 %v3255, %v3434
        %v3438 = vmul.f32 %v3256, %v3434
        %v3439 = vmul.f32 %v3257, %v3434
        %v3440 = vmul.f32 %v3258, %v3434
        %v3441 = vmul.f32 %v3259, %v3434
        %v3442 = vmul.f32 %v3260, %v3434
        %v3443 = vmul.f32 %v3261, %v3434
        %v3444 = vmul.f32 %v3262, %v3434
        %v3445 = vmul.f32 %v3263, %v3434
        %v3446 = vmul.f32 %v3264, %v3434
        %v3447 = vmul.f32 %v3265, %v3434
        %v3448 = vmul.f32 %v3266, %v3434
        %v3449 = vmul.f32 %v3267, %v3434
        %v3450 = vmul.f32 %v3268, %v3434
        %v3451 = vmul.f32 %v3269, %v3434
        %v3452 = vmul.f32 %v3270, %v3434
        %v3453 = vmul.f32 %v3271, %v3434
        %v3454 = vmul.f32 %v3272, %v3434
        %v3455 = vmul.f32 %v3273, %v3434
        %v3456 = vmul.f32 %v3274, %v3434
        %v3457 = vmul.f32 %v3275, %v3434
        %v3458 = vmul.f32 %v3276, %v3434
        %v3483 = vrot.slane %v3435, 2
        %v3484 = vrot.slane %v3436, 2
        %v3485 = vsel %vm1106, %v3483, %v3484
        %v3486 = vrot.slane %v3437, 2
        %v3487 = vsel %vm1106, %v3484, %v3486
        %v3488 = vrot.slane %v3438, 2
        %v3489 = vrot.slane %v3439, 2
        %v3490 = vsel %vm1106, %v3488, %v3489
        %v3491 = vrot.slane %v3440, 2
        %v3492 = vsel %vm1106, %v3489, %v3491
        %v3493 = vrot.slane %v3441, 2
        %v3494 = vrot.slane %v3442, 2
        %v3495 = vsel %vm1106, %v3493, %v3494
        %v3496 = vrot.slane %v3443, 2
        %v3497 = vsel %vm1106, %v3494, %v3496
        %v3498 = vrot.slane %v3444, 2
        %v3499 = vrot.slane %v3445, 2
        %v3500 = vsel %vm1106, %v3498, %v3499
        %v3501 = vrot.slane %v3446, 2
        %v3502 = vsel %vm1106, %v3499, %v3501
        %v3503 = vrot.slane %v3447, 2
        %v3504 = vrot.slane %v3448, 2
        %v3505 = vsel %vm1106, %v3503, %v3504
        %v3506 = vrot.slane %v3449, 2
        %v3507 = vsel %vm1106, %v3504, %v3506
        %v3508 = vrot.slane %v3450, 2
        %v3509 = vrot.slane %v3451, 2
        %v3510 = vsel %vm1106, %v3508, %v3509
        %v3511 = vrot.slane %v3452, 2
        %v3512 = vsel %vm1106, %v3509, %v3511
        %v3513 = vrot.slane %v3453, 2
        %v3514 = vrot.slane %v3454, 2
        %v3515 = vsel %vm1106, %v3513, %v3514
        %v3516 = vrot.slane %v3455, 2
        %v3517 = vsel %vm1106, %v3514, %v3516
        %v3518 = vrot.slane %v3456, 2
        %v3519 = vrot.slane %v3457, 2
        %v3520 = vsel %vm1106, %v3518, %v3519
        %v3521 = vrot.slane %v3458, 2
        %v3522 = vsel %vm1106, %v3519, %v3521
        %v3539 = vadd.f32 %v3417, %v3485
        %v3540 = vadd.f32 %v3418, %v3487
        %v3541 = vadd.f32 %v3419, %v3490
        %v3542 = vadd.f32 %v3420, %v3492
        %v3543 = vadd.f32 %v3421, %v3495
        %v3544 = vadd.f32 %v3422, %v3497
        %v3545 = vadd.f32 %v3423, %v3500
        %v3546 = vadd.f32 %v3424, %v3502
        %v3547 = vadd.f32 %v3425, %v3505
        %v3548 = vadd.f32 %v3426, %v3507
        %v3549 = vadd.f32 %v3427, %v3510
        %v3550 = vadd.f32 %v3428, %v3512
        %v3551 = vadd.f32 %v3429, %v3515
        %v3552 = vadd.f32 %v3430, %v3517
        %v3553 = vadd.f32 %v3431, %v3520
        %v3554 = vadd.f32 %v3432, %v3522
        %v3555 = vld [vmem:[%s5 + $0x18] sm:$0x1]
        %v3556 = vperm.slane %v3555, 0
        %v3557 = vmul.f32 %v3253, %v3556
        %v3558 = vmul.f32 %v3254, %v3556
        %v3559 = vmul.f32 %v3255, %v3556
        %v3560 = vmul.f32 %v3256, %v3556
        %v3561 = vmul.f32 %v3257, %v3556
        %v3562 = vmul.f32 %v3258, %v3556
        %v3563 = vmul.f32 %v3259, %v3556
        %v3564 = vmul.f32 %v3260, %v3556
        %v3565 = vmul.f32 %v3261, %v3556
        %v3566 = vmul.f32 %v3262, %v3556
        %v3567 = vmul.f32 %v3263, %v3556
        %v3568 = vmul.f32 %v3264, %v3556
        %v3569 = vmul.f32 %v3265, %v3556
        %v3570 = vmul.f32 %v3266, %v3556
        %v3571 = vmul.f32 %v3267, %v3556
        %v3572 = vmul.f32 %v3268, %v3556
        %v3573 = vmul.f32 %v3269, %v3556
        %v3574 = vmul.f32 %v3270, %v3556
        %v3575 = vmul.f32 %v3271, %v3556
        %v3576 = vmul.f32 %v3272, %v3556
        %v3577 = vmul.f32 %v3273, %v3556
        %v3578 = vmul.f32 %v3274, %v3556
        %v3579 = vmul.f32 %v3275, %v3556
        %v3580 = vmul.f32 %v3276, %v3556
        %v3605 = vrot.slane %v3557, 3
        %v3606 = vrot.slane %v3558, 3
        %v3607 = vsel %vm1229, %v3605, %v3606
        %v3608 = vrot.slane %v3559, 3
        %v3609 = vsel %vm1229, %v3606, %v3608
        %v3610 = vrot.slane %v3560, 3
        %v3611 = vrot.slane %v3561, 3
        %v3612 = vsel %vm1229, %v3610, %v3611
        %v3613 = vrot.slane %v3562, 3
        %v3614 = vsel %vm1229, %v3611, %v3613
        %v3615 = vrot.slane %v3563, 3
        %v3616 = vrot.slane %v3564, 3
        %v3617 = vsel %vm1229, %v3615, %v3616
        %v3618 = vrot.slane %v3565, 3
        %v3619 = vsel %vm1229, %v3616, %v3618
        %v3620 = vrot.slane %v3566, 3
        %v3621 = vrot.slane %v3567, 3
        %v3622 = vsel %vm1229, %v3620, %v3621
        %v3623 = vrot.slane %v3568, 3
        %v3624 = vsel %vm1229, %v3621, %v3623
        %v3625 = vrot.slane %v3569, 3
        %v3626 = vrot.slane %v3570, 3
        %v3627 = vsel %vm1229, %v3625, %v3626
        %v3628 = vrot.slane %v3571, 3
        %v3629 = vsel %vm1229, %v3626, %v3628
        %v3630 = vrot.slane %v3572, 3
        %v3631 = vrot.slane %v3573, 3
        %v3632 = vsel %vm1229, %v3630, %v3631
        %v3633 = vrot.slane %v3574, 3
        %v3634 = vsel %vm1229, %v3631, %v3633
        %v3635 = vrot.slane %v3575, 3
        %v3636 = vrot.slane %v3576, 3
        %v3637 = vsel %vm1229, %v3635, %v3636
        %v3638 = vrot.slane %v3577, 3
        %v3639 = vsel %vm1229, %v3636, %v3638
        %v3640 = vrot.slane %v3578, 3
        %v3641 = vrot.slane %v3579, 3
        %v3642 = vsel %vm1229, %v3640, %v3641
        %v3643 = vrot.slane %v3580, 3
        %v3644 = vsel %vm1229, %v3641, %v3643
        %v3661 = vadd.f32 %v3539, %v3607
        %v3662 = vadd.f32 %v3540, %v3609
        %v3663 = vadd.f32 %v3541, %v3612
        %v3664 = vadd.f32 %v3542, %v3614
        %v3665 = vadd.f32 %v3543, %v3617
        %v3666 = vadd.f32 %v3544, %v3619
        %v3667 = vadd.f32 %v3545, %v3622
        %v3668 = vadd.f32 %v3546, %v3624
        %v3669 = vadd.f32 %v3547, %v3627
        %v3670 = vadd.f32 %v3548, %v3629
        %v3671 = vadd.f32 %v3549, %v3632
        %v3672 = vadd.f32 %v3550, %v3634
        %v3673 = vadd.f32 %v3551, %v3637
        %v3674 = vadd.f32 %v3552, %v3639
        %v3675 = vadd.f32 %v3553, %v3642
        %v3676 = vadd.f32 %v3554, %v3644
        %v3677 = vld [vmem:[%s5 + $0x19] sm:$0x1]
        %v3678 = vperm.slane %v3677, 0
        %v3679 = vmul.f32 %v3253, %v3678
        %v3680 = vmul.f32 %v3254, %v3678
        %v3681 = vmul.f32 %v3255, %v3678
        %v3682 = vmul.f32 %v3256, %v3678
        %v3683 = vmul.f32 %v3257, %v3678
        %v3684 = vmul.f32 %v3258, %v3678
        %v3685 = vmul.f32 %v3259, %v3678
        %v3686 = vmul.f32 %v3260, %v3678
        %v3687 = vmul.f32 %v3261, %v3678
        %v3688 = vmul.f32 %v3262, %v3678
        %v3689 = vmul.f32 %v3263, %v3678
        %v3690 = vmul.f32 %v3264, %v3678
        %v3691 = vmul.f32 %v3265, %v3678
        %v3692 = vmul.f32 %v3266, %v3678
        %v3693 = vmul.f32 %v3267, %v3678
        %v3694 = vmul.f32 %v3268, %v3678
        %v3695 = vmul.f32 %v3269, %v3678
        %v3696 = vmul.f32 %v3270, %v3678
        %v3697 = vmul.f32 %v3271, %v3678
        %v3698 = vmul.f32 %v3272, %v3678
        %v3699 = vmul.f32 %v3273, %v3678
        %v3700 = vmul.f32 %v3274, %v3678
        %v3701 = vmul.f32 %v3275, %v3678
        %v3702 = vmul.f32 %v3276, %v3678
        %v3727 = vrot.slane %v3679, 4
        %v3728 = vrot.slane %v3680, 4
        %v3729 = vsel %vm1352, %v3727, %v3728
        %v3730 = vrot.slane %v3681, 4
        %v3731 = vsel %vm1352, %v3728, %v3730
        %v3732 = vrot.slane %v3682, 4
        %v3733 = vrot.slane %v3683, 4
        %v3734 = vsel %vm1352, %v3732, %v3733
        %v3735 = vrot.slane %v3684, 4
        %v3736 = vsel %vm1352, %v3733, %v3735
        %v3737 = vrot.slane %v3685, 4
        %v3738 = vrot.slane %v3686, 4
        %v3739 = vsel %vm1352, %v3737, %v3738
        %v3740 = vrot.slane %v3687, 4
        %v3741 = vsel %vm1352, %v3738, %v3740
        %v3742 = vrot.slane %v3688, 4
        %v3743 = vrot.slane %v3689, 4
        %v3744 = vsel %vm1352, %v3742, %v3743
        %v3745 = vrot.slane %v3690, 4
        %v3746 = vsel %vm1352, %v3743, %v3745
        %v3747 = vrot.slane %v3691, 4
        %v3748 = vrot.slane %v3692, 4
        %v3749 = vsel %vm1352, %v3747, %v3748
        %v3750 = vrot.slane %v3693, 4
        %v3751 = vsel %vm1352, %v3748, %v3750
        %v3752 = vrot.slane %v3694, 4
        %v3753 = vrot.slane %v3695, 4
        %v3754 = vsel %vm1352, %v3752, %v3753
        %v3755 = vrot.slane %v3696, 4
        %v3756 = vsel %vm1352, %v3753, %v3755
        %v3757 = vrot.slane %v3697, 4
        %v3758 = vrot.slane %v3698, 4
        %v3759 = vsel %vm1352, %v3757, %v3758
        %v3760 = vrot.slane %v3699, 4
        %v3761 = vsel %vm1352, %v3758, %v3760
        %v3762 = vrot.slane %v3700, 4
        %v3763 = vrot.slane %v3701, 4
        %v3764 = vsel %vm1352, %v3762, %v3763
        %v3765 = vrot.slane %v3702, 4
        %v3766 = vsel %vm1352, %v3763, %v3765
        %v3783 = vadd.f32 %v3661, %v3729
        %v3784 = vadd.f32 %v3662, %v3731
        %v3785 = vadd.f32 %v3663, %v3734
        %v3786 = vadd.f32 %v3664, %v3736
        %v3787 = vadd.f32 %v3665, %v3739
        %v3788 = vadd.f32 %v3666, %v3741
        %v3789 = vadd.f32 %v3667, %v3744
        %v3790 = vadd.f32 %v3668, %v3746
        %v3791 = vadd.f32 %v3669, %v3749
        %v3792 = vadd.f32 %v3670, %v3751
        %v3793 = vadd.f32 %v3671, %v3754
        %v3794 = vadd.f32 %v3672, %v3756
        %v3795 = vadd.f32 %v3673, %v3759
        %v3796 = vadd.f32 %v3674, %v3761
        %v3797 = vadd.f32 %v3675, %v3764
        %v3798 = vadd.f32 %v3676, %v3766
        %v3799 = vld [vmem:[%s5 + $0x1a] sm:$0x1]
        %v3800 = vperm.slane %v3799, 0
        %v3801 = vmul.f32 %v3253, %v3800
        %v3802 = vmul.f32 %v3254, %v3800
        %v3803 = vmul.f32 %v3255, %v3800
        %v3804 = vmul.f32 %v3256, %v3800
        %v3805 = vmul.f32 %v3257, %v3800
        %v3806 = vmul.f32 %v3258, %v3800
        %v3807 = vmul.f32 %v3259, %v3800
        %v3808 = vmul.f32 %v3260, %v3800
        %v3809 = vmul.f32 %v3261, %v3800
        %v3810 = vmul.f32 %v3262, %v3800
        %v3811 = vmul.f32 %v3263, %v3800
        %v3812 = vmul.f32 %v3264, %v3800
        %v3813 = vmul.f32 %v3265, %v3800
        %v3814 = vmul.f32 %v3266, %v3800
        %v3815 = vmul.f32 %v3267, %v3800
        %v3816 = vmul.f32 %v3268, %v3800
        %v3817 = vmul.f32 %v3269, %v3800
        %v3818 = vmul.f32 %v3270, %v3800
        %v3819 = vmul.f32 %v3271, %v3800
        %v3820 = vmul.f32 %v3272, %v3800
        %v3821 = vmul.f32 %v3273, %v3800
        %v3822 = vmul.f32 %v3274, %v3800
        %v3823 = vmul.f32 %v3275, %v3800
        %v3824 = vmul.f32 %v3276, %v3800
        %v3849 = vrot.slane %v3801, 5
        %v3850 = vrot.slane %v3802, 5
        %v3851 = vsel %vm1475, %v3849, %v3850
        %v3852 = vrot.slane %v3803, 5
        %v3853 = vsel %vm1475, %v3850, %v3852
        %v3854 = vrot.slane %v3804, 5
        %v3855 = vrot.slane %v3805, 5
        %v3856 = vsel %vm1475, %v3854, %v3855
        %v3857 = vrot.slane %v3806, 5
        %v3858 = vsel %vm1475, %v3855, %v3857
        %v3859 = vrot.slane %v3807, 5
        %v3860 = vrot.slane %v3808, 5
        %v3861 = vsel %vm1475, %v3859, %v3860
        %v3862 = vrot.slane %v3809, 5
        %v3863 = vsel %vm1475, %v3860, %v3862
        %v3864 = vrot.slane %v3810, 5
        %v3865 = vrot.slane %v3811, 5
        %v3866 = vsel %vm1475, %v3864, %v3865
        %v3867 = vrot.slane %v3812, 5
        %v3868 = vsel %vm1475, %v3865, %v3867
        %v3869 = vrot.slane %v3813, 5
        %v3870 = vrot.slane %v3814, 5
        %v3871 = vsel %vm1475, %v3869, %v3870
        %v3872 = vrot.slane %v3815, 5
        %v3873 = vsel %vm1475, %v3870, %v3872
        %v3874 = vrot.slane %v3816, 5
        %v3875 = vrot.slane %v3817, 5
        %v3876 = vsel %vm1475, %v3874, %v3875
        %v3877 = vrot.slane %v3818, 5
        %v3878 = vsel %vm1475, %v3875, %v3877
        %v3879 = vrot.slane %v3819, 5
        %v3880 = vrot.slane %v3820, 5
        %v3881 = vsel %vm1475, %v3879, %v3880
        %v3882 = vrot.slane %v3821, 5
        %v3883 = vsel %vm1475, %v3880, %v3882
        %v3884 = vrot.slane %v3822, 5
        %v3885 = vrot.slane %v3823, 5
        %v3886 = vsel %vm1475, %v3884, %v3885
        %v3887 = vrot.slane %v3824, 5
        %v3888 = vsel %vm1475, %v3885, %v3887
        %v3905 = vadd.f32 %v3783, %v3851
        %v3906 = vadd.f32 %v3784, %v3853
        %v3907 = vadd.f32 %v3785, %v3856
        %v3908 = vadd.f32 %v3786, %v3858
        %v3909 = vadd.f32 %v3787, %v3861
        %v3910 = vadd.f32 %v3788, %v3863
        %v3911 = vadd.f32 %v3789, %v3866
        %v3912 = vadd.f32 %v3790, %v3868
        %v3913 = vadd.f32 %v3791, %v3871
        %v3914 = vadd.f32 %v3792, %v3873
        %v3915 = vadd.f32 %v3793, %v3876
        %v3916 = vadd.f32 %v3794, %v3878
        %v3917 = vadd.f32 %v3795, %v3881
        %v3918 = vadd.f32 %v3796, %v3883
        %v3919 = vadd.f32 %v3797, %v3886
        %v3920 = vadd.f32 %v3798, %v3888
        %v3921 = vld [vmem:[%s5 + $0x1b] sm:$0x1]
        %v3922 = vperm.slane %v3921, 0
        %v3923 = vmul.f32 %v3253, %v3922
        %v3924 = vmul.f32 %v3254, %v3922
        %v3925 = vmul.f32 %v3255, %v3922
        %v3926 = vmul.f32 %v3256, %v3922
        %v3927 = vmul.f32 %v3257, %v3922
        %v3928 = vmul.f32 %v3258, %v3922
        %v3929 = vmul.f32 %v3259, %v3922
        %v3930 = vmul.f32 %v3260, %v3922
        %v3931 = vmul.f32 %v3261, %v3922
        %v3932 = vmul.f32 %v3262, %v3922
        %v3933 = vmul.f32 %v3263, %v3922
        %v3934 = vmul.f32 %v3264, %v3922
        %v3935 = vmul.f32 %v3265, %v3922
        %v3936 = vmul.f32 %v3266, %v3922
        %v3937 = vmul.f32 %v3267, %v3922
        %v3938 = vmul.f32 %v3268, %v3922
        %v3939 = vmul.f32 %v3269, %v3922
        %v3940 = vmul.f32 %v3270, %v3922
        %v3941 = vmul.f32 %v3271, %v3922
        %v3942 = vmul.f32 %v3272, %v3922
        %v3943 = vmul.f32 %v3273, %v3922
        %v3944 = vmul.f32 %v3274, %v3922
        %v3945 = vmul.f32 %v3275, %v3922
        %v3946 = vmul.f32 %v3276, %v3922
        %v3971 = vrot.slane %v3923, 6
        %v3972 = vrot.slane %v3924, 6
        %v3973 = vsel %vm589, %v3971, %v3972
        %v3974 = vrot.slane %v3925, 6
        %v3975 = vsel %vm589, %v3972, %v3974
        %v3976 = vrot.slane %v3926, 6
        %v3977 = vrot.slane %v3927, 6
        %v3978 = vsel %vm589, %v3976, %v3977
        %v3979 = vrot.slane %v3928, 6
        %v3980 = vsel %vm589, %v3977, %v3979
        %v3981 = vrot.slane %v3929, 6
        %v3982 = vrot.slane %v3930, 6
        %v3983 = vsel %vm589, %v3981, %v3982
        %v3984 = vrot.slane %v3931, 6
        %v3985 = vsel %vm589, %v3982, %v3984
        %v3986 = vrot.slane %v3932, 6
        %v3987 = vrot.slane %v3933, 6
        %v3988 = vsel %vm589, %v3986, %v3987
        %v3989 = vrot.slane %v3934, 6
        %v3990 = vsel %vm589, %v3987, %v3989
        %v3991 = vrot.slane %v3935, 6
        %v3992 = vrot.slane %v3936, 6
        %v3993 = vsel %vm589, %v3991, %v3992
        %v3994 = vrot.slane %v3937, 6
        %v3995 = vsel %vm589, %v3992, %v3994
        %v3996 = vrot.slane %v3938, 6
        %v3997 = vrot.slane %v3939, 6
        %v3998 = vsel %vm589, %v3996, %v3997
        %v3999 = vrot.slane %v3940, 6
        %v4000 = vsel %vm589, %v3997, %v3999
        %v4001 = vrot.slane %v3941, 6
        %v4002 = vrot.slane %v3942, 6
        %v4003 = vsel %vm589, %v4001, %v4002
        %v4004 = vrot.slane %v3943, 6
        %v4005 = vsel %vm589, %v4002, %v4004
        %v4006 = vrot.slane %v3944, 6
        %v4007 = vrot.slane %v3945, 6
        %v4008 = vsel %vm589, %v4006, %v4007
        %v4009 = vrot.slane %v3946, 6
        %v4010 = vsel %vm589, %v4007, %v4009
        %v4027 = vadd.f32 %v3905, %v3973
        %v4028 = vadd.f32 %v3906, %v3975
        %v4029 = vadd.f32 %v3907, %v3978
        %v4030 = vadd.f32 %v3908, %v3980
        %v4031 = vadd.f32 %v3909, %v3983
        %v4032 = vadd.f32 %v3910, %v3985
        %v4033 = vadd.f32 %v3911, %v3988
        %v4034 = vadd.f32 %v3912, %v3990
        %v4035 = vadd.f32 %v3913, %v3993
        %v4036 = vadd.f32 %v3914, %v3995
        %v4037 = vadd.f32 %v3915, %v3998
        %v4038 = vadd.f32 %v3916, %v4000
        %v4039 = vadd.f32 %v3917, %v4003
        %v4040 = vadd.f32 %v3918, %v4005
        %v4041 = vadd.f32 %v3919, %v4008
        %v4042 = vadd.f32 %v3920, %v4010
        %s4043 = scalar_lea.vmem [#allocation2], 96
        %v4044 = vld [vmem:[%s4043] sm:$0xff]
        %v4045 = vld [vmem:[%s4043 + $0x8] sm:$0xff]
        %v4046 = vld [vmem:[%s4043 + $0x10] sm:$0x3f]
        %v4047 = vld [vmem:[%s4043 + $0x18] sm:$0xff]
        %v4048 = vld [vmem:[%s4043 + $0x20] sm:$0xff]
        %v4049 = vld [vmem:[%s4043 + $0x28] sm:$0x3f]
        %v4050 = vld [vmem:[%s4043 + $0x30] sm:$0xff]
        %v4051 = vld [vmem:[%s4043 + $0x38] sm:$0xff]
        %v4052 = vld [vmem:[%s4043 + $0x40] sm:$0x3f]
        %v4053 = vld [vmem:[%s4043 + $0x48] sm:$0xff]
        %v4054 = vld [vmem:[%s4043 + $0x50] sm:$0xff]
        %v4055 = vld [vmem:[%s4043 + $0x58] sm:$0x3f]
        %v4056 = vld [vmem:[%s4043 + $0x60] sm:$0xff]
        %v4057 = vld [vmem:[%s4043 + $0x68] sm:$0xff]
        %v4058 = vld [vmem:[%s4043 + $0x70] sm:$0x3f]
        %v4059 = vld [vmem:[%s4043 + $0x78] sm:$0xff]
        %v4060 = vld [vmem:[%s4043 + $0x80] sm:$0xff]
        %v4061 = vld [vmem:[%s4043 + $0x88] sm:$0x3f]
        %v4062 = vld [vmem:[%s4043 + $0x90] sm:$0xff]
        %v4063 = vld [vmem:[%s4043 + $0x98] sm:$0xff]
        %v4064 = vld [vmem:[%s4043 + $0xa0] sm:$0x3f]
        %v4065 = vld [vmem:[%s4043 + $0xa8] sm:$0xff]
        %v4066 = vld [vmem:[%s4043 + $0xb0] sm:$0xff]
        %v4067 = vld [vmem:[%s4043 + $0xb8] sm:$0x3f]
        %v4068 = vld [vmem:[%s5 + $0x1c] sm:$0x1]
        %v4069 = vperm.slane %v4068, 0
        %v4070 = vmul.f32 %v4044, %v4069
        %v4071 = vmul.f32 %v4045, %v4069
        %v4072 = vmul.f32 %v4047, %v4069
        %v4073 = vmul.f32 %v4048, %v4069
        %v4074 = vmul.f32 %v4050, %v4069
        %v4075 = vmul.f32 %v4051, %v4069
        %v4076 = vmul.f32 %v4053, %v4069
        %v4077 = vmul.f32 %v4054, %v4069
        %v4078 = vmul.f32 %v4056, %v4069
        %v4079 = vmul.f32 %v4057, %v4069
        %v4080 = vmul.f32 %v4059, %v4069
        %v4081 = vmul.f32 %v4060, %v4069
        %v4082 = vmul.f32 %v4062, %v4069
        %v4083 = vmul.f32 %v4063, %v4069
        %v4084 = vmul.f32 %v4065, %v4069
        %v4085 = vmul.f32 %v4066, %v4069
        %v4086 = vadd.f32 %v4027, %v4070
        %v4087 = vadd.f32 %v4028, %v4071
        %v4088 = vadd.f32 %v4029, %v4072
        %v4089 = vadd.f32 %v4030, %v4073
        %v4090 = vadd.f32 %v4031, %v4074
        %v4091 = vadd.f32 %v4032, %v4075
        %v4092 = vadd.f32 %v4033, %v4076
        %v4093 = vadd.f32 %v4034, %v4077
        %v4094 = vadd.f32 %v4035, %v4078
        %v4095 = vadd.f32 %v4036, %v4079
        %v4096 = vadd.f32 %v4037, %v4080
        %v4097 = vadd.f32 %v4038, %v4081
        %v4098 = vadd.f32 %v4039, %v4082
        %v4099 = vadd.f32 %v4040, %v4083
        %v4100 = vadd.f32 %v4041, %v4084
        %v4101 = vadd.f32 %v4042, %v4085
        %v4102 = vld [vmem:[%s5 + $0x1d] sm:$0x1]
        %v4103 = vperm.slane %v4102, 0
        %v4104 = vmul.f32 %v4044, %v4103
        %v4105 = vmul.f32 %v4045, %v4103
        %v4106 = vmul.f32 %v4046, %v4103
        %v4107 = vmul.f32 %v4047, %v4103
        %v4108 = vmul.f32 %v4048, %v4103
        %v4109 = vmul.f32 %v4049, %v4103
        %v4110 = vmul.f32 %v4050, %v4103
        %v4111 = vmul.f32 %v4051, %v4103
        %v4112 = vmul.f32 %v4052, %v4103
        %v4113 = vmul.f32 %v4053, %v4103
        %v4114 = vmul.f32 %v4054, %v4103
        %v4115 = vmul.f32 %v4055, %v4103
        %v4116 = vmul.f32 %v4056, %v4103
        %v4117 = vmul.f32 %v4057, %v4103
        %v4118 = vmul.f32 %v4058, %v4103
        %v4119 = vmul.f32 %v4059, %v4103
        %v4120 = vmul.f32 %v4060, %v4103
        %v4121 = vmul.f32 %v4061, %v4103
        %v4122 = vmul.f32 %v4062, %v4103
        %v4123 = vmul.f32 %v4063, %v4103
        %v4124 = vmul.f32 %v4064, %v4103
        %v4125 = vmul.f32 %v4065, %v4103
        %v4126 = vmul.f32 %v4066, %v4103
        %v4127 = vmul.f32 %v4067, %v4103
        %v4152 = vrot.slane %v4104, 1
        %v4153 = vrot.slane %v4105, 1
        %v4154 = vsel %vm983, %v4152, %v4153
        %v4155 = vrot.slane %v4106, 1
        %v4156 = vsel %vm983, %v4153, %v4155
        %v4157 = vrot.slane %v4107, 1
        %v4158 = vrot.slane %v4108, 1
        %v4159 = vsel %vm983, %v4157, %v4158
        %v4160 = vrot.slane %v4109, 1
        %v4161 = vsel %vm983, %v4158, %v4160
        %v4162 = vrot.slane %v4110, 1
        %v4163 = vrot.slane %v4111, 1
        %v4164 = vsel %vm983, %v4162, %v4163
        %v4165 = vrot.slane %v4112, 1
        %v4166 = vsel %vm983, %v4163, %v4165
        %v4167 = vrot.slane %v4113, 1
        %v4168 = vrot.slane %v4114, 1
        %v4169 = vsel %vm983, %v4167, %v4168
        %v4170 = vrot.slane %v4115, 1
        %v4171 = vsel %vm983, %v4168, %v4170
        %v4172 = vrot.slane %v4116, 1
        %v4173 = vrot.slane %v4117, 1
        %v4174 = vsel %vm983, %v4172, %v4173
        %v4175 = vrot.slane %v4118, 1
        %v4176 = vsel %vm983, %v4173, %v4175
        %v4177 = vrot.slane %v4119, 1
        %v4178 = vrot.slane %v4120, 1
        %v4179 = vsel %vm983, %v4177, %v4178
        %v4180 = vrot.slane %v4121, 1
        %v4181 = vsel %vm983, %v4178, %v4180
        %v4182 = vrot.slane %v4122, 1
        %v4183 = vrot.slane %v4123, 1
        %v4184 = vsel %vm983, %v4182, %v4183
        %v4185 = vrot.slane %v4124, 1
        %v4186 = vsel %vm983, %v4183, %v4185
        %v4187 = vrot.slane %v4125, 1
        %v4188 = vrot.slane %v4126, 1
        %v4189 = vsel %vm983, %v4187, %v4188
        %v4190 = vrot.slane %v4127, 1
        %v4191 = vsel %vm983, %v4188, %v4190
        %v4208 = vadd.f32 %v4086, %v4154
        %v4209 = vadd.f32 %v4087, %v4156
        %v4210 = vadd.f32 %v4088, %v4159
        %v4211 = vadd.f32 %v4089, %v4161
        %v4212 = vadd.f32 %v4090, %v4164
        %v4213 = vadd.f32 %v4091, %v4166
        %v4214 = vadd.f32 %v4092, %v4169
        %v4215 = vadd.f32 %v4093, %v4171
        %v4216 = vadd.f32 %v4094, %v4174
        %v4217 = vadd.f32 %v4095, %v4176
        %v4218 = vadd.f32 %v4096, %v4179
        %v4219 = vadd.f32 %v4097, %v4181
        %v4220 = vadd.f32 %v4098, %v4184
        %v4221 = vadd.f32 %v4099, %v4186
        %v4222 = vadd.f32 %v4100, %v4189
        %v4223 = vadd.f32 %v4101, %v4191
        %v4224 = vld [vmem:[%s5 + $0x1e] sm:$0x1]
        %v4225 = vperm.slane %v4224, 0
        %v4226 = vmul.f32 %v4044, %v4225
        %v4227 = vmul.f32 %v4045, %v4225
        %v4228 = vmul.f32 %v4046, %v4225
        %v4229 = vmul.f32 %v4047, %v4225
        %v4230 = vmul.f32 %v4048, %v4225
        %v4231 = vmul.f32 %v4049, %v4225
        %v4232 = vmul.f32 %v4050, %v4225
        %v4233 = vmul.f32 %v4051, %v4225
        %v4234 = vmul.f32 %v4052, %v4225
        %v4235 = vmul.f32 %v4053, %v4225
        %v4236 = vmul.f32 %v4054, %v4225
        %v4237 = vmul.f32 %v4055, %v4225
        %v4238 = vmul.f32 %v4056, %v4225
        %v4239 = vmul.f32 %v4057, %v4225
        %v4240 = vmul.f32 %v4058, %v4225
        %v4241 = vmul.f32 %v4059, %v4225
        %v4242 = vmul.f32 %v4060, %v4225
        %v4243 = vmul.f32 %v4061, %v4225
        %v4244 = vmul.f32 %v4062, %v4225
        %v4245 = vmul.f32 %v4063, %v4225
        %v4246 = vmul.f32 %v4064, %v4225
        %v4247 = vmul.f32 %v4065, %v4225
        %v4248 = vmul.f32 %v4066, %v4225
        %v4249 = vmul.f32 %v4067, %v4225
        %v4274 = vrot.slane %v4226, 2
        %v4275 = vrot.slane %v4227, 2
        %v4276 = vsel %vm1106, %v4274, %v4275
        %v4277 = vrot.slane %v4228, 2
        %v4278 = vsel %vm1106, %v4275, %v4277
        %v4279 = vrot.slane %v4229, 2
        %v4280 = vrot.slane %v4230, 2
        %v4281 = vsel %vm1106, %v4279, %v4280
        %v4282 = vrot.slane %v4231, 2
        %v4283 = vsel %vm1106, %v4280, %v4282
        %v4284 = vrot.slane %v4232, 2
        %v4285 = vrot.slane %v4233, 2
        %v4286 = vsel %vm1106, %v4284, %v4285
        %v4287 = vrot.slane %v4234, 2
        %v4288 = vsel %vm1106, %v4285, %v4287
        %v4289 = vrot.slane %v4235, 2
        %v4290 = vrot.slane %v4236, 2
        %v4291 = vsel %vm1106, %v4289, %v4290
        %v4292 = vrot.slane %v4237, 2
        %v4293 = vsel %vm1106, %v4290, %v4292
        %v4294 = vrot.slane %v4238, 2
        %v4295 = vrot.slane %v4239, 2
        %v4296 = vsel %vm1106, %v4294, %v4295
        %v4297 = vrot.slane %v4240, 2
        %v4298 = vsel %vm1106, %v4295, %v4297
        %v4299 = vrot.slane %v4241, 2
        %v4300 = vrot.slane %v4242, 2
        %v4301 = vsel %vm1106, %v4299, %v4300
        %v4302 = vrot.slane %v4243, 2
        %v4303 = vsel %vm1106, %v4300, %v4302
        %v4304 = vrot.slane %v4244, 2
        %v4305 = vrot.slane %v4245, 2
        %v4306 = vsel %vm1106, %v4304, %v4305
        %v4307 = vrot.slane %v4246, 2
        %v4308 = vsel %vm1106, %v4305, %v4307
        %v4309 = vrot.slane %v4247, 2
        %v4310 = vrot.slane %v4248, 2
        %v4311 = vsel %vm1106, %v4309, %v4310
        %v4312 = vrot.slane %v4249, 2
        %v4313 = vsel %vm1106, %v4310, %v4312
        %v4330 = vadd.f32 %v4208, %v4276
        %v4331 = vadd.f32 %v4209, %v4278
        %v4332 = vadd.f32 %v4210, %v4281
        %v4333 = vadd.f32 %v4211, %v4283
        %v4334 = vadd.f32 %v4212, %v4286
        %v4335 = vadd.f32 %v4213, %v4288
        %v4336 = vadd.f32 %v4214, %v4291
        %v4337 = vadd.f32 %v4215, %v4293
        %v4338 = vadd.f32 %v4216, %v4296
        %v4339 = vadd.f32 %v4217, %v4298
        %v4340 = vadd.f32 %v4218, %v4301
        %v4341 = vadd.f32 %v4219, %v4303
        %v4342 = vadd.f32 %v4220, %v4306
        %v4343 = vadd.f32 %v4221, %v4308
        %v4344 = vadd.f32 %v4222, %v4311
        %v4345 = vadd.f32 %v4223, %v4313
        %v4346 = vld [vmem:[%s5 + $0x1f] sm:$0x1]
        %v4347 = vperm.slane %v4346, 0
        %v4348 = vmul.f32 %v4044, %v4347
        %v4349 = vmul.f32 %v4045, %v4347
        %v4350 = vmul.f32 %v4046, %v4347
        %v4351 = vmul.f32 %v4047, %v4347
        %v4352 = vmul.f32 %v4048, %v4347
        %v4353 = vmul.f32 %v4049, %v4347
        %v4354 = vmul.f32 %v4050, %v4347
        %v4355 = vmul.f32 %v4051, %v4347
        %v4356 = vmul.f32 %v4052, %v4347
        %v4357 = vmul.f32 %v4053, %v4347
        %v4358 = vmul.f32 %v4054, %v4347
        %v4359 = vmul.f32 %v4055, %v4347
        %v4360 = vmul.f32 %v4056, %v4347
        %v4361 = vmul.f32 %v4057, %v4347
        %v4362 = vmul.f32 %v4058, %v4347
        %v4363 = vmul.f32 %v4059, %v4347
        %v4364 = vmul.f32 %v4060, %v4347
        %v4365 = vmul.f32 %v4061, %v4347
        %v4366 = vmul.f32 %v4062, %v4347
        %v4367 = vmul.f32 %v4063, %v4347
        %v4368 = vmul.f32 %v4064, %v4347
        %v4369 = vmul.f32 %v4065, %v4347
        %v4370 = vmul.f32 %v4066, %v4347
        %v4371 = vmul.f32 %v4067, %v4347
        %v4396 = vrot.slane %v4348, 3
        %v4397 = vrot.slane %v4349, 3
        %v4398 = vsel %vm1229, %v4396, %v4397
        %v4399 = vrot.slane %v4350, 3
        %v4400 = vsel %vm1229, %v4397, %v4399
        %v4401 = vrot.slane %v4351, 3
        %v4402 = vrot.slane %v4352, 3
        %v4403 = vsel %vm1229, %v4401, %v4402
        %v4404 = vrot.slane %v4353, 3
        %v4405 = vsel %vm1229, %v4402, %v4404
        %v4406 = vrot.slane %v4354, 3
        %v4407 = vrot.slane %v4355, 3
        %v4408 = vsel %vm1229, %v4406, %v4407
        %v4409 = vrot.slane %v4356, 3
        %v4410 = vsel %vm1229, %v4407, %v4409
        %v4411 = vrot.slane %v4357, 3
        %v4412 = vrot.slane %v4358, 3
        %v4413 = vsel %vm1229, %v4411, %v4412
        %v4414 = vrot.slane %v4359, 3
        %v4415 = vsel %vm1229, %v4412, %v4414
        %v4416 = vrot.slane %v4360, 3
        %v4417 = vrot.slane %v4361, 3
        %v4418 = vsel %vm1229, %v4416, %v4417
        %v4419 = vrot.slane %v4362, 3
        %v4420 = vsel %vm1229, %v4417, %v4419
        %v4421 = vrot.slane %v4363, 3
        %v4422 = vrot.slane %v4364, 3
        %v4423 = vsel %vm1229, %v4421, %v4422
        %v4424 = vrot.slane %v4365, 3
        %v4425 = vsel %vm1229, %v4422, %v4424
        %v4426 = vrot.slane %v4366, 3
        %v4427 = vrot.slane %v4367, 3
        %v4428 = vsel %vm1229, %v4426, %v4427
        %v4429 = vrot.slane %v4368, 3
        %v4430 = vsel %vm1229, %v4427, %v4429
        %v4431 = vrot.slane %v4369, 3
        %v4432 = vrot.slane %v4370, 3
        %v4433 = vsel %vm1229, %v4431, %v4432
        %v4434 = vrot.slane %v4371, 3
        %v4435 = vsel %vm1229, %v4432, %v4434
        %v4452 = vadd.f32 %v4330, %v4398
        %v4453 = vadd.f32 %v4331, %v4400
        %v4454 = vadd.f32 %v4332, %v4403
        %v4455 = vadd.f32 %v4333, %v4405
        %v4456 = vadd.f32 %v4334, %v4408
        %v4457 = vadd.f32 %v4335, %v4410
        %v4458 = vadd.f32 %v4336, %v4413
        %v4459 = vadd.f32 %v4337, %v4415
        %v4460 = vadd.f32 %v4338, %v4418
        %v4461 = vadd.f32 %v4339, %v4420
        %v4462 = vadd.f32 %v4340, %v4423
        %v4463 = vadd.f32 %v4341, %v4425
        %v4464 = vadd.f32 %v4342, %v4428
        %v4465 = vadd.f32 %v4343, %v4430
        %v4466 = vadd.f32 %v4344, %v4433
        %v4467 = vadd.f32 %v4345, %v4435
        %v4468 = vld [vmem:[%s5 + $0x20] sm:$0x1]
        %v4469 = vperm.slane %v4468, 0
        %v4470 = vmul.f32 %v4044, %v4469
        %v4471 = vmul.f32 %v4045, %v4469
        %v4472 = vmul.f32 %v4046, %v4469
        %v4473 = vmul.f32 %v4047, %v4469
        %v4474 = vmul.f32 %v4048, %v4469
        %v4475 = vmul.f32 %v4049, %v4469
        %v4476 = vmul.f32 %v4050, %v4469
        %v4477 = vmul.f32 %v4051, %v4469
        %v4478 = vmul.f32 %v4052, %v4469
        %v4479 = vmul.f32 %v4053, %v4469
        %v4480 = vmul.f32 %v4054, %v4469
        %v4481 = vmul.f32 %v4055, %v4469
        %v4482 = vmul.f32 %v4056, %v4469
        %v4483 = vmul.f32 %v4057, %v4469
        %v4484 = vmul.f32 %v4058, %v4469
        %v4485 = vmul.f32 %v4059, %v4469
        %v4486 = vmul.f32 %v4060, %v4469
        %v4487 = vmul.f32 %v4061, %v4469
        %v4488 = vmul.f32 %v4062, %v4469
        %v4489 = vmul.f32 %v4063, %v4469
        %v4490 = vmul.f32 %v4064, %v4469
        %v4491 = vmul.f32 %v4065, %v4469
        %v4492 = vmul.f32 %v4066, %v4469
        %v4493 = vmul.f32 %v4067, %v4469
        %v4518 = vrot.slane %v4470, 4
        %v4519 = vrot.slane %v4471, 4
        %v4520 = vsel %vm1352, %v4518, %v4519
        %v4521 = vrot.slane %v4472, 4
        %v4522 = vsel %vm1352, %v4519, %v4521
        %v4523 = vrot.slane %v4473, 4
        %v4524 = vrot.slane %v4474, 4
        %v4525 = vsel %vm1352, %v4523, %v4524
        %v4526 = vrot.slane %v4475, 4
        %v4527 = vsel %vm1352, %v4524, %v4526
        %v4528 = vrot.slane %v4476, 4
        %v4529 = vrot.slane %v4477, 4
        %v4530 = vsel %vm1352, %v4528, %v4529
        %v4531 = vrot.slane %v4478, 4
        %v4532 = vsel %vm1352, %v4529, %v4531
        %v4533 = vrot.slane %v4479, 4
        %v4534 = vrot.slane %v4480, 4
        %v4535 = vsel %vm1352, %v4533, %v4534
        %v4536 = vrot.slane %v4481, 4
        %v4537 = vsel %vm1352, %v4534, %v4536
        %v4538 = vrot.slane %v4482, 4
        %v4539 = vrot.slane %v4483, 4
        %v4540 = vsel %vm1352, %v4538, %v4539
        %v4541 = vrot.slane %v4484, 4
        %v4542 = vsel %vm1352, %v4539, %v4541
        %v4543 = vrot.slane %v4485, 4
        %v4544 = vrot.slane %v4486, 4
        %v4545 = vsel %vm1352, %v4543, %v4544
        %v4546 = vrot.slane %v4487, 4
        %v4547 = vsel %vm1352, %v4544, %v4546
        %v4548 = vrot.slane %v4488, 4
        %v4549 = vrot.slane %v4489, 4
        %v4550 = vsel %vm1352, %v4548, %v4549
        %v4551 = vrot.slane %v4490, 4
        %v4552 = vsel %vm1352, %v4549, %v4551
        %v4553 = vrot.slane %v4491, 4
        %v4554 = vrot.slane %v4492, 4
        %v4555 = vsel %vm1352, %v4553, %v4554
        %v4556 = vrot.slane %v4493, 4
        %v4557 = vsel %vm1352, %v4554, %v4556
        %v4574 = vadd.f32 %v4452, %v4520
        %v4575 = vadd.f32 %v4453, %v4522
        %v4576 = vadd.f32 %v4454, %v4525
        %v4577 = vadd.f32 %v4455, %v4527
        %v4578 = vadd.f32 %v4456, %v4530
        %v4579 = vadd.f32 %v4457, %v4532
        %v4580 = vadd.f32 %v4458, %v4535
        %v4581 = vadd.f32 %v4459, %v4537
        %v4582 = vadd.f32 %v4460, %v4540
        %v4583 = vadd.f32 %v4461, %v4542
        %v4584 = vadd.f32 %v4462, %v4545
        %v4585 = vadd.f32 %v4463, %v4547
        %v4586 = vadd.f32 %v4464, %v4550
        %v4587 = vadd.f32 %v4465, %v4552
        %v4588 = vadd.f32 %v4466, %v4555
        %v4589 = vadd.f32 %v4467, %v4557
        %v4590 = vld [vmem:[%s5 + $0x21] sm:$0x1]
        %v4591 = vperm.slane %v4590, 0
        %v4592 = vmul.f32 %v4044, %v4591
        %v4593 = vmul.f32 %v4045, %v4591
        %v4594 = vmul.f32 %v4046, %v4591
        %v4595 = vmul.f32 %v4047, %v4591
        %v4596 = vmul.f32 %v4048, %v4591
        %v4597 = vmul.f32 %v4049, %v4591
        %v4598 = vmul.f32 %v4050, %v4591
        %v4599 = vmul.f32 %v4051, %v4591
        %v4600 = vmul.f32 %v4052, %v4591
        %v4601 = vmul.f32 %v4053, %v4591
        %v4602 = vmul.f32 %v4054, %v4591
        %v4603 = vmul.f32 %v4055, %v4591
        %v4604 = vmul.f32 %v4056, %v4591
        %v4605 = vmul.f32 %v4057, %v4591
        %v4606 = vmul.f32 %v4058, %v4591
        %v4607 = vmul.f32 %v4059, %v4591
        %v4608 = vmul.f32 %v4060, %v4591
        %v4609 = vmul.f32 %v4061, %v4591
        %v4610 = vmul.f32 %v4062, %v4591
        %v4611 = vmul.f32 %v4063, %v4591
        %v4612 = vmul.f32 %v4064, %v4591
        %v4613 = vmul.f32 %v4065, %v4591
        %v4614 = vmul.f32 %v4066, %v4591
        %v4615 = vmul.f32 %v4067, %v4591
        %v4640 = vrot.slane %v4592, 5
        %v4641 = vrot.slane %v4593, 5
        %v4642 = vsel %vm1475, %v4640, %v4641
        %v4643 = vrot.slane %v4594, 5
        %v4644 = vsel %vm1475, %v4641, %v4643
        %v4645 = vrot.slane %v4595, 5
        %v4646 = vrot.slane %v4596, 5
        %v4647 = vsel %vm1475, %v4645, %v4646
        %v4648 = vrot.slane %v4597, 5
        %v4649 = vsel %vm1475, %v4646, %v4648
        %v4650 = vrot.slane %v4598, 5
        %v4651 = vrot.slane %v4599, 5
        %v4652 = vsel %vm1475, %v4650, %v4651
        %v4653 = vrot.slane %v4600, 5
        %v4654 = vsel %vm1475, %v4651, %v4653
        %v4655 = vrot.slane %v4601, 5
        %v4656 = vrot.slane %v4602, 5
        %v4657 = vsel %vm1475, %v4655, %v4656
        %v4658 = vrot.slane %v4603, 5
        %v4659 = vsel %vm1475, %v4656, %v4658
        %v4660 = vrot.slane %v4604, 5
        %v4661 = vrot.slane %v4605, 5
        %v4662 = vsel %vm1475, %v4660, %v4661
        %v4663 = vrot.slane %v4606, 5
        %v4664 = vsel %vm1475, %v4661, %v4663
        %v4665 = vrot.slane %v4607, 5
        %v4666 = vrot.slane %v4608, 5
        %v4667 = vsel %vm1475, %v4665, %v4666
        %v4668 = vrot.slane %v4609, 5
        %v4669 = vsel %vm1475, %v4666, %v4668
        %v4670 = vrot.slane %v4610, 5
        %v4671 = vrot.slane %v4611, 5
        %v4672 = vsel %vm1475, %v4670, %v4671
        %v4673 = vrot.slane %v4612, 5
        %v4674 = vsel %vm1475, %v4671, %v4673
        %v4675 = vrot.slane %v4613, 5
        %v4676 = vrot.slane %v4614, 5
        %v4677 = vsel %vm1475, %v4675, %v4676
        %v4678 = vrot.slane %v4615, 5
        %v4679 = vsel %vm1475, %v4676, %v4678
        %v4696 = vadd.f32 %v4574, %v4642
        %v4697 = vadd.f32 %v4575, %v4644
        %v4698 = vadd.f32 %v4576, %v4647
        %v4699 = vadd.f32 %v4577, %v4649
        %v4700 = vadd.f32 %v4578, %v4652
        %v4701 = vadd.f32 %v4579, %v4654
        %v4702 = vadd.f32 %v4580, %v4657
        %v4703 = vadd.f32 %v4581, %v4659
        %v4704 = vadd.f32 %v4582, %v4662
        %v4705 = vadd.f32 %v4583, %v4664
        %v4706 = vadd.f32 %v4584, %v4667
        %v4707 = vadd.f32 %v4585, %v4669
        %v4708 = vadd.f32 %v4586, %v4672
        %v4709 = vadd.f32 %v4587, %v4674
        %v4710 = vadd.f32 %v4588, %v4677
        %v4711 = vadd.f32 %v4589, %v4679
        %v4712 = vld [vmem:[%s5 + $0x22] sm:$0x1]
        %v4713 = vperm.slane %v4712, 0
        %v4714 = vmul.f32 %v4044, %v4713
        %v4715 = vmul.f32 %v4045, %v4713
        %v4716 = vmul.f32 %v4046, %v4713
        %v4717 = vmul.f32 %v4047, %v4713
        %v4718 = vmul.f32 %v4048, %v4713
        %v4719 = vmul.f32 %v4049, %v4713
        %v4720 = vmul.f32 %v4050, %v4713
        %v4721 = vmul.f32 %v4051, %v4713
        %v4722 = vmul.f32 %v4052, %v4713
        %v4723 = vmul.f32 %v4053, %v4713
        %v4724 = vmul.f32 %v4054, %v4713
        %v4725 = vmul.f32 %v4055, %v4713
        %v4726 = vmul.f32 %v4056, %v4713
        %v4727 = vmul.f32 %v4057, %v4713
        %v4728 = vmul.f32 %v4058, %v4713
        %v4729 = vmul.f32 %v4059, %v4713
        %v4730 = vmul.f32 %v4060, %v4713
        %v4731 = vmul.f32 %v4061, %v4713
        %v4732 = vmul.f32 %v4062, %v4713
        %v4733 = vmul.f32 %v4063, %v4713
        %v4734 = vmul.f32 %v4064, %v4713
        %v4735 = vmul.f32 %v4065, %v4713
        %v4736 = vmul.f32 %v4066, %v4713
        %v4737 = vmul.f32 %v4067, %v4713
        %v4762 = vrot.slane %v4714, 6
        %v4763 = vrot.slane %v4715, 6
        %v4764 = vsel %vm589, %v4762, %v4763
        %v4765 = vrot.slane %v4716, 6
        %v4766 = vsel %vm589, %v4763, %v4765
        %v4767 = vrot.slane %v4717, 6
        %v4768 = vrot.slane %v4718, 6
        %v4769 = vsel %vm589, %v4767, %v4768
        %v4770 = vrot.slane %v4719, 6
        %v4771 = vsel %vm589, %v4768, %v4770
        %v4772 = vrot.slane %v4720, 6
        %v4773 = vrot.slane %v4721, 6
        %v4774 = vsel %vm589, %v4772, %v4773
        %v4775 = vrot.slane %v4722, 6
        %v4776 = vsel %vm589, %v4773, %v4775
        %v4777 = vrot.slane %v4723, 6
        %v4778 = vrot.slane %v4724, 6
        %v4779 = vsel %vm589, %v4777, %v4778
        %v4780 = vrot.slane %v4725, 6
        %v4781 = vsel %vm589, %v4778, %v4780
        %v4782 = vrot.slane %v4726, 6
        %v4783 = vrot.slane %v4727, 6
        %v4784 = vsel %vm589, %v4782, %v4783
        %v4785 = vrot.slane %v4728, 6
        %v4786 = vsel %vm589, %v4783, %v4785
        %v4787 = vrot.slane %v4729, 6
        %v4788 = vrot.slane %v4730, 6
        %v4789 = vsel %vm589, %v4787, %v4788
        %v4790 = vrot.slane %v4731, 6
        %v4791 = vsel %vm589, %v4788, %v4790
        %v4792 = vrot.slane %v4732, 6
        %v4793 = vrot.slane %v4733, 6
        %v4794 = vsel %vm589, %v4792, %v4793
        %v4795 = vrot.slane %v4734, 6
        %v4796 = vsel %vm589, %v4793, %v4795
        %v4797 = vrot.slane %v4735, 6
        %v4798 = vrot.slane %v4736, 6
        %v4799 = vsel %vm589, %v4797, %v4798
        %v4800 = vrot.slane %v4737, 6
        %v4801 = vsel %vm589, %v4798, %v4800
        %v4818 = vadd.f32 %v4696, %v4764
        %v4819 = vadd.f32 %v4697, %v4766
        %v4820 = vadd.f32 %v4698, %v4769
        %v4821 = vadd.f32 %v4699, %v4771
        %v4822 = vadd.f32 %v4700, %v4774
        %v4823 = vadd.f32 %v4701, %v4776
        %v4824 = vadd.f32 %v4702, %v4779
        %v4825 = vadd.f32 %v4703, %v4781
        %v4826 = vadd.f32 %v4704, %v4784
        %v4827 = vadd.f32 %v4705, %v4786
        %v4828 = vadd.f32 %v4706, %v4789
        %v4829 = vadd.f32 %v4707, %v4791
        %v4830 = vadd.f32 %v4708, %v4794
        %v4831 = vadd.f32 %v4709, %v4796
        %v4832 = vadd.f32 %v4710, %v4799
        %v4833 = vadd.f32 %v4711, %v4801
        %s4834 = scalar_lea.vmem [#allocation2], 120
        %v4835 = vld [vmem:[%s4834] sm:$0xff]
        %v4836 = vld [vmem:[%s4834 + $0x8] sm:$0xff]
        %v4837 = vld [vmem:[%s4834 + $0x10] sm:$0x3f]
        %v4838 = vld [vmem:[%s4834 + $0x18] sm:$0xff]
        %v4839 = vld [vmem:[%s4834 + $0x20] sm:$0xff]
        %v4840 = vld [vmem:[%s4834 + $0x28] sm:$0x3f]
        %v4841 = vld [vmem:[%s4834 + $0x30] sm:$0xff]
        %v4842 = vld [vmem:[%s4834 + $0x38] sm:$0xff]
        %v4843 = vld [vmem:[%s4834 + $0x40] sm:$0x3f]
        %v4844 = vld [vmem:[%s4834 + $0x48] sm:$0xff]
        %v4845 = vld [vmem:[%s4834 + $0x50] sm:$0xff]
        %v4846 = vld [vmem:[%s4834 + $0x58] sm:$0x3f]
        %v4847 = vld [vmem:[%s4834 + $0x60] sm:$0xff]
        %v4848 = vld [vmem:[%s4834 + $0x68] sm:$0xff]
        %v4849 = vld [vmem:[%s4834 + $0x70] sm:$0x3f]
        %v4850 = vld [vmem:[%s4834 + $0x78] sm:$0xff]
        %v4851 = vld [vmem:[%s4834 + $0x80] sm:$0xff]
        %v4852 = vld [vmem:[%s4834 + $0x88] sm:$0x3f]
        %v4853 = vld [vmem:[%s4834 + $0x90] sm:$0xff]
        %v4854 = vld [vmem:[%s4834 + $0x98] sm:$0xff]
        %v4855 = vld [vmem:[%s4834 + $0xa0] sm:$0x3f]
        %v4856 = vld [vmem:[%s4834 + $0xa8] sm:$0xff]
        %v4857 = vld [vmem:[%s4834 + $0xb0] sm:$0xff]
        %v4858 = vld [vmem:[%s4834 + $0xb8] sm:$0x3f]
        %v4859 = vld [vmem:[%s5 + $0x23] sm:$0x1]
        %v4860 = vperm.slane %v4859, 0
        %v4861 = vmul.f32 %v4835, %v4860
        %v4862 = vmul.f32 %v4836, %v4860
        %v4863 = vmul.f32 %v4838, %v4860
        %v4864 = vmul.f32 %v4839, %v4860
        %v4865 = vmul.f32 %v4841, %v4860
        %v4866 = vmul.f32 %v4842, %v4860
        %v4867 = vmul.f32 %v4844, %v4860
        %v4868 = vmul.f32 %v4845, %v4860
        %v4869 = vmul.f32 %v4847, %v4860
        %v4870 = vmul.f32 %v4848, %v4860
        %v4871 = vmul.f32 %v4850, %v4860
        %v4872 = vmul.f32 %v4851, %v4860
        %v4873 = vmul.f32 %v4853, %v4860
        %v4874 = vmul.f32 %v4854, %v4860
        %v4875 = vmul.f32 %v4856, %v4860
        %v4876 = vmul.f32 %v4857, %v4860
        %v4877 = vadd.f32 %v4818, %v4861
        %v4878 = vadd.f32 %v4819, %v4862
        %v4879 = vadd.f32 %v4820, %v4863
        %v4880 = vadd.f32 %v4821, %v4864
        %v4881 = vadd.f32 %v4822, %v4865
        %v4882 = vadd.f32 %v4823, %v4866
        %v4883 = vadd.f32 %v4824, %v4867
        %v4884 = vadd.f32 %v4825, %v4868
        %v4885 = vadd.f32 %v4826, %v4869
        %v4886 = vadd.f32 %v4827, %v4870
        %v4887 = vadd.f32 %v4828, %v4871
        %v4888 = vadd.f32 %v4829, %v4872
        %v4889 = vadd.f32 %v4830, %v4873
        %v4890 = vadd.f32 %v4831, %v4874
        %v4891 = vadd.f32 %v4832, %v4875
        %v4892 = vadd.f32 %v4833, %v4876
        %v4893 = vld [vmem:[%s5 + $0x24] sm:$0x1]
        %v4894 = vperm.slane %v4893, 0
        %v4895 = vmul.f32 %v4835, %v4894
        %v4896 = vmul.f32 %v4836, %v4894
        %v4897 = vmul.f32 %v4837, %v4894
        %v4898 = vmul.f32 %v4838, %v4894
        %v4899 = vmul.f32 %v4839, %v4894
        %v4900 = vmul.f32 %v4840, %v4894
        %v4901 = vmul.f32 %v4841, %v4894
        %v4902 = vmul.f32 %v4842, %v4894
        %v4903 = vmul.f32 %v4843, %v4894
        %v4904 = vmul.f32 %v4844, %v4894
        %v4905 = vmul.f32 %v4845, %v4894
        %v4906 = vmul.f32 %v4846, %v4894
        %v4907 = vmul.f32 %v4847, %v4894
        %v4908 = vmul.f32 %v4848, %v4894
        %v4909 = vmul.f32 %v4849, %v4894
        %v4910 = vmul.f32 %v4850, %v4894
        %v4911 = vmul.f32 %v4851, %v4894
        %v4912 = vmul.f32 %v4852, %v4894
        %v4913 = vmul.f32 %v4853, %v4894
        %v4914 = vmul.f32 %v4854, %v4894
        %v4915 = vmul.f32 %v4855, %v4894
        %v4916 = vmul.f32 %v4856, %v4894
        %v4917 = vmul.f32 %v4857, %v4894
        %v4918 = vmul.f32 %v4858, %v4894
        %v4943 = vrot.slane %v4895, 1
        %v4944 = vrot.slane %v4896, 1
        %v4945 = vsel %vm983, %v4943, %v4944
        %v4946 = vrot.slane %v4897, 1
        %v4947 = vsel %vm983, %v4944, %v4946
        %v4948 = vrot.slane %v4898, 1
        %v4949 = vrot.slane %v4899, 1
        %v4950 = vsel %vm983, %v4948, %v4949
        %v4951 = vrot.slane %v4900, 1
        %v4952 = vsel %vm983, %v4949, %v4951
        %v4953 = vrot.slane %v4901, 1
        %v4954 = vrot.slane %v4902, 1
        %v4955 = vsel %vm983, %v4953, %v4954
        %v4956 = vrot.slane %v4903, 1
        %v4957 = vsel %vm983, %v4954, %v4956
        %v4958 = vrot.slane %v4904, 1
        %v4959 = vrot.slane %v4905, 1
        %v4960 = vsel %vm983, %v4958, %v4959
        %v4961 = vrot.slane %v4906, 1
        %v4962 = vsel %vm983, %v4959, %v4961
        %v4963 = vrot.slane %v4907, 1
        %v4964 = vrot.slane %v4908, 1
        %v4965 = vsel %vm983, %v4963, %v4964
        %v4966 = vrot.slane %v4909, 1
        %v4967 = vsel %vm983, %v4964, %v4966
        %v4968 = vrot.slane %v4910, 1
        %v4969 = vrot.slane %v4911, 1
        %v4970 = vsel %vm983, %v4968, %v4969
        %v4971 = vrot.slane %v4912, 1
        %v4972 = vsel %vm983, %v4969, %v4971
        %v4973 = vrot.slane %v4913, 1
        %v4974 = vrot.slane %v4914, 1
        %v4975 = vsel %vm983, %v4973, %v4974
        %v4976 = vrot.slane %v4915, 1
        %v4977 = vsel %vm983, %v4974, %v4976
        %v4978 = vrot.slane %v4916, 1
        %v4979 = vrot.slane %v4917, 1
        %v4980 = vsel %vm983, %v4978, %v4979
        %v4981 = vrot.slane %v4918, 1
        %v4982 = vsel %vm983, %v4979, %v4981
        %v4999 = vadd.f32 %v4877, %v4945
        %v5000 = vadd.f32 %v4878, %v4947
        %v5001 = vadd.f32 %v4879, %v4950
        %v5002 = vadd.f32 %v4880, %v4952
        %v5003 = vadd.f32 %v4881, %v4955
        %v5004 = vadd.f32 %v4882, %v4957
        %v5005 = vadd.f32 %v4883, %v4960
        %v5006 = vadd.f32 %v4884, %v4962
        %v5007 = vadd.f32 %v4885, %v4965
        %v5008 = vadd.f32 %v4886, %v4967
        %v5009 = vadd.f32 %v4887, %v4970
        %v5010 = vadd.f32 %v4888, %v4972
        %v5011 = vadd.f32 %v4889, %v4975
        %v5012 = vadd.f32 %v4890, %v4977
        %v5013 = vadd.f32 %v4891, %v4980
        %v5014 = vadd.f32 %v4892, %v4982
        %v5015 = vld [vmem:[%s5 + $0x25] sm:$0x1]
        %v5016 = vperm.slane %v5015, 0
        %v5017 = vmul.f32 %v4835, %v5016
        %v5018 = vmul.f32 %v4836, %v5016
        %v5019 = vmul.f32 %v4837, %v5016
        %v5020 = vmul.f32 %v4838, %v5016
        %v5021 = vmul.f32 %v4839, %v5016
        %v5022 = vmul.f32 %v4840, %v5016
        %v5023 = vmul.f32 %v4841, %v5016
        %v5024 = vmul.f32 %v4842, %v5016
        %v5025 = vmul.f32 %v4843, %v5016
        %v5026 = vmul.f32 %v4844, %v5016
        %v5027 = vmul.f32 %v4845, %v5016
        %v5028 = vmul.f32 %v4846, %v5016
        %v5029 = vmul.f32 %v4847, %v5016
        %v5030 = vmul.f32 %v4848, %v5016
        %v5031 = vmul.f32 %v4849, %v5016
        %v5032 = vmul.f32 %v4850, %v5016
        %v5033 = vmul.f32 %v4851, %v5016
        %v5034 = vmul.f32 %v4852, %v5016
        %v5035 = vmul.f32 %v4853, %v5016
        %v5036 = vmul.f32 %v4854, %v5016
        %v5037 = vmul.f32 %v4855, %v5016
        %v5038 = vmul.f32 %v4856, %v5016
        %v5039 = vmul.f32 %v4857, %v5016
        %v5040 = vmul.f32 %v4858, %v5016
        %v5065 = vrot.slane %v5017, 2
        %v5066 = vrot.slane %v5018, 2
        %v5067 = vsel %vm1106, %v5065, %v5066
        %v5068 = vrot.slane %v5019, 2
        %v5069 = vsel %vm1106, %v5066, %v5068
        %v5070 = vrot.slane %v5020, 2
        %v5071 = vrot.slane %v5021, 2
        %v5072 = vsel %vm1106, %v5070, %v5071
        %v5073 = vrot.slane %v5022, 2
        %v5074 = vsel %vm1106, %v5071, %v5073
        %v5075 = vrot.slane %v5023, 2
        %v5076 = vrot.slane %v5024, 2
        %v5077 = vsel %vm1106, %v5075, %v5076
        %v5078 = vrot.slane %v5025, 2
        %v5079 = vsel %vm1106, %v5076, %v5078
        %v5080 = vrot.slane %v5026, 2
        %v5081 = vrot.slane %v5027, 2
        %v5082 = vsel %vm1106, %v5080, %v5081
        %v5083 = vrot.slane %v5028, 2
        %v5084 = vsel %vm1106, %v5081, %v5083
        %v5085 = vrot.slane %v5029, 2
        %v5086 = vrot.slane %v5030, 2
        %v5087 = vsel %vm1106, %v5085, %v5086
        %v5088 = vrot.slane %v5031, 2
        %v5089 = vsel %vm1106, %v5086, %v5088
        %v5090 = vrot.slane %v5032, 2
        %v5091 = vrot.slane %v5033, 2
        %v5092 = vsel %vm1106, %v5090, %v5091
        %v5093 = vrot.slane %v5034, 2
        %v5094 = vsel %vm1106, %v5091, %v5093
        %v5095 = vrot.slane %v5035, 2
        %v5096 = vrot.slane %v5036, 2
        %v5097 = vsel %vm1106, %v5095, %v5096
        %v5098 = vrot.slane %v5037, 2
        %v5099 = vsel %vm1106, %v5096, %v5098
        %v5100 = vrot.slane %v5038, 2
        %v5101 = vrot.slane %v5039, 2
        %v5102 = vsel %vm1106, %v5100, %v5101
        %v5103 = vrot.slane %v5040, 2
        %v5104 = vsel %vm1106, %v5101, %v5103
        %v5121 = vadd.f32 %v4999, %v5067
        %v5122 = vadd.f32 %v5000, %v5069
        %v5123 = vadd.f32 %v5001, %v5072
        %v5124 = vadd.f32 %v5002, %v5074
        %v5125 = vadd.f32 %v5003, %v5077
        %v5126 = vadd.f32 %v5004, %v5079
        %v5127 = vadd.f32 %v5005, %v5082
        %v5128 = vadd.f32 %v5006, %v5084
        %v5129 = vadd.f32 %v5007, %v5087
        %v5130 = vadd.f32 %v5008, %v5089
        %v5131 = vadd.f32 %v5009, %v5092
        %v5132 = vadd.f32 %v5010, %v5094
        %v5133 = vadd.f32 %v5011, %v5097
        %v5134 = vadd.f32 %v5012, %v5099
        %v5135 = vadd.f32 %v5013, %v5102
        %v5136 = vadd.f32 %v5014, %v5104
        %v5137 = vld [vmem:[%s5 + $0x26] sm:$0x1]
        %v5138 = vperm.slane %v5137, 0
        %v5139 = vmul.f32 %v4835, %v5138
        %v5140 = vmul.f32 %v4836, %v5138
        %v5141 = vmul.f32 %v4837, %v5138
        %v5142 = vmul.f32 %v4838, %v5138
        %v5143 = vmul.f32 %v4839, %v5138
        %v5144 = vmul.f32 %v4840, %v5138
        %v5145 = vmul.f32 %v4841, %v5138
        %v5146 = vmul.f32 %v4842, %v5138
        %v5147 = vmul.f32 %v4843, %v5138
        %v5148 = vmul.f32 %v4844, %v5138
        %v5149 = vmul.f32 %v4845, %v5138
        %v5150 = vmul.f32 %v4846, %v5138
        %v5151 = vmul.f32 %v4847, %v5138
        %v5152 = vmul.f32 %v4848, %v5138
        %v5153 = vmul.f32 %v4849, %v5138
        %v5154 = vmul.f32 %v4850, %v5138
        %v5155 = vmul.f32 %v4851, %v5138
        %v5156 = vmul.f32 %v4852, %v5138
        %v5157 = vmul.f32 %v4853, %v5138
        %v5158 = vmul.f32 %v4854, %v5138
        %v5159 = vmul.f32 %v4855, %v5138
        %v5160 = vmul.f32 %v4856, %v5138
        %v5161 = vmul.f32 %v4857, %v5138
        %v5162 = vmul.f32 %v4858, %v5138
        %v5187 = vrot.slane %v5139, 3
        %v5188 = vrot.slane %v5140, 3
        %v5189 = vsel %vm1229, %v5187, %v5188
        %v5190 = vrot.slane %v5141, 3
        %v5191 = vsel %vm1229, %v5188, %v5190
        %v5192 = vrot.slane %v5142, 3
        %v5193 = vrot.slane %v5143, 3
        %v5194 = vsel %vm1229, %v5192, %v5193
        %v5195 = vrot.slane %v5144, 3
        %v5196 = vsel %vm1229, %v5193, %v5195
        %v5197 = vrot.slane %v5145, 3
        %v5198 = vrot.slane %v5146, 3
        %v5199 = vsel %vm1229, %v5197, %v5198
        %v5200 = vrot.slane %v5147, 3
        %v5201 = vsel %vm1229, %v5198, %v5200
        %v5202 = vrot.slane %v5148, 3
        %v5203 = vrot.slane %v5149, 3
        %v5204 = vsel %vm1229, %v5202, %v5203
        %v5205 = vrot.slane %v5150, 3
        %v5206 = vsel %vm1229, %v5203, %v5205
        %v5207 = vrot.slane %v5151, 3
        %v5208 = vrot.slane %v5152, 3
        %v5209 = vsel %vm1229, %v5207, %v5208
        %v5210 = vrot.slane %v5153, 3
        %v5211 = vsel %vm1229, %v5208, %v5210
        %v5212 = vrot.slane %v5154, 3
        %v5213 = vrot.slane %v5155, 3
        %v5214 = vsel %vm1229, %v5212, %v5213
        %v5215 = vrot.slane %v5156, 3
        %v5216 = vsel %vm1229, %v5213, %v5215
        %v5217 = vrot.slane %v5157, 3
        %v5218 = vrot.slane %v5158, 3
        %v5219 = vsel %vm1229, %v5217, %v5218
        %v5220 = vrot.slane %v5159, 3
        %v5221 = vsel %vm1229, %v5218, %v5220
        %v5222 = vrot.slane %v5160, 3
        %v5223 = vrot.slane %v5161, 3
        %v5224 = vsel %vm1229, %v5222, %v5223
        %v5225 = vrot.slane %v5162, 3
        %v5226 = vsel %vm1229, %v5223, %v5225
        %v5243 = vadd.f32 %v5121, %v5189
        %v5244 = vadd.f32 %v5122, %v5191
        %v5245 = vadd.f32 %v5123, %v5194
        %v5246 = vadd.f32 %v5124, %v5196
        %v5247 = vadd.f32 %v5125, %v5199
        %v5248 = vadd.f32 %v5126, %v5201
        %v5249 = vadd.f32 %v5127, %v5204
        %v5250 = vadd.f32 %v5128, %v5206
        %v5251 = vadd.f32 %v5129, %v5209
        %v5252 = vadd.f32 %v5130, %v5211
        %v5253 = vadd.f32 %v5131, %v5214
        %v5254 = vadd.f32 %v5132, %v5216
        %v5255 = vadd.f32 %v5133, %v5219
        %v5256 = vadd.f32 %v5134, %v5221
        %v5257 = vadd.f32 %v5135, %v5224
        %v5258 = vadd.f32 %v5136, %v5226
        %v5259 = vld [vmem:[%s5 + $0x27] sm:$0x1]
        %v5260 = vperm.slane %v5259, 0
        %v5261 = vmul.f32 %v4835, %v5260
        %v5262 = vmul.f32 %v4836, %v5260
        %v5263 = vmul.f32 %v4837, %v5260
        %v5264 = vmul.f32 %v4838, %v5260
        %v5265 = vmul.f32 %v4839, %v5260
        %v5266 = vmul.f32 %v4840, %v5260
        %v5267 = vmul.f32 %v4841, %v5260
        %v5268 = vmul.f32 %v4842, %v5260
        %v5269 = vmul.f32 %v4843, %v5260
        %v5270 = vmul.f32 %v4844, %v5260
        %v5271 = vmul.f32 %v4845, %v5260
        %v5272 = vmul.f32 %v4846, %v5260
        %v5273 = vmul.f32 %v4847, %v5260
        %v5274 = vmul.f32 %v4848, %v5260
        %v5275 = vmul.f32 %v4849, %v5260
        %v5276 = vmul.f32 %v4850, %v5260
        %v5277 = vmul.f32 %v4851, %v5260
        %v5278 = vmul.f32 %v4852, %v5260
        %v5279 = vmul.f32 %v4853, %v5260
        %v5280 = vmul.f32 %v4854, %v5260
        %v5281 = vmul.f32 %v4855, %v5260
        %v5282 = vmul.f32 %v4856, %v5260
        %v5283 = vmul.f32 %v4857, %v5260
        %v5284 = vmul.f32 %v4858, %v5260
        %v5309 = vrot.slane %v5261, 4
        %v5310 = vrot.slane %v5262, 4
        %v5311 = vsel %vm1352, %v5309, %v5310
        %v5312 = vrot.slane %v5263, 4
        %v5313 = vsel %vm1352, %v5310, %v5312
        %v5314 = vrot.slane %v5264, 4
        %v5315 = vrot.slane %v5265, 4
        %v5316 = vsel %vm1352, %v5314, %v5315
        %v5317 = vrot.slane %v5266, 4
        %v5318 = vsel %vm1352, %v5315, %v5317
        %v5319 = vrot.slane %v5267, 4
        %v5320 = vrot.slane %v5268, 4
        %v5321 = vsel %vm1352, %v5319, %v5320
        %v5322 = vrot.slane %v5269, 4
        %v5323 = vsel %vm1352, %v5320, %v5322
        %v5324 = vrot.slane %v5270, 4
        %v5325 = vrot.slane %v5271, 4
        %v5326 = vsel %vm1352, %v5324, %v5325
        %v5327 = vrot.slane %v5272, 4
        %v5328 = vsel %vm1352, %v5325, %v5327
        %v5329 = vrot.slane %v5273, 4
        %v5330 = vrot.slane %v5274, 4
        %v5331 = vsel %vm1352, %v5329, %v5330
        %v5332 = vrot.slane %v5275, 4
        %v5333 = vsel %vm1352, %v5330, %v5332
        %v5334 = vrot.slane %v5276, 4
        %v5335 = vrot.slane %v5277, 4
        %v5336 = vsel %vm1352, %v5334, %v5335
        %v5337 = vrot.slane %v5278, 4
        %v5338 = vsel %vm1352, %v5335, %v5337
        %v5339 = vrot.slane %v5279, 4
        %v5340 = vrot.slane %v5280, 4
        %v5341 = vsel %vm1352, %v5339, %v5340
        %v5342 = vrot.slane %v5281, 4
        %v5343 = vsel %vm1352, %v5340, %v5342
        %v5344 = vrot.slane %v5282, 4
        %v5345 = vrot.slane %v5283, 4
        %v5346 = vsel %vm1352, %v5344, %v5345
        %v5347 = vrot.slane %v5284, 4
        %v5348 = vsel %vm1352, %v5345, %v5347
        %v5365 = vadd.f32 %v5243, %v5311
        %v5366 = vadd.f32 %v5244, %v5313
        %v5367 = vadd.f32 %v5245, %v5316
        %v5368 = vadd.f32 %v5246, %v5318
        %v5369 = vadd.f32 %v5247, %v5321
        %v5370 = vadd.f32 %v5248, %v5323
        %v5371 = vadd.f32 %v5249, %v5326
        %v5372 = vadd.f32 %v5250, %v5328
        %v5373 = vadd.f32 %v5251, %v5331
        %v5374 = vadd.f32 %v5252, %v5333
        %v5375 = vadd.f32 %v5253, %v5336
        %v5376 = vadd.f32 %v5254, %v5338
        %v5377 = vadd.f32 %v5255, %v5341
        %v5378 = vadd.f32 %v5256, %v5343
        %v5379 = vadd.f32 %v5257, %v5346
        %v5380 = vadd.f32 %v5258, %v5348
        %v5381 = vld [vmem:[%s5 + $0x28] sm:$0x1]
        %v5382 = vperm.slane %v5381, 0
        %v5383 = vmul.f32 %v4835, %v5382
        %v5384 = vmul.f32 %v4836, %v5382
        %v5385 = vmul.f32 %v4837, %v5382
        %v5386 = vmul.f32 %v4838, %v5382
        %v5387 = vmul.f32 %v4839, %v5382
        %v5388 = vmul.f32 %v4840, %v5382
        %v5389 = vmul.f32 %v4841, %v5382
        %v5390 = vmul.f32 %v4842, %v5382
        %v5391 = vmul.f32 %v4843, %v5382
        %v5392 = vmul.f32 %v4844, %v5382
        %v5393 = vmul.f32 %v4845, %v5382
        %v5394 = vmul.f32 %v4846, %v5382
        %v5395 = vmul.f32 %v4847, %v5382
        %v5396 = vmul.f32 %v4848, %v5382
        %v5397 = vmul.f32 %v4849, %v5382
        %v5398 = vmul.f32 %v4850, %v5382
        %v5399 = vmul.f32 %v4851, %v5382
        %v5400 = vmul.f32 %v4852, %v5382
        %v5401 = vmul.f32 %v4853, %v5382
        %v5402 = vmul.f32 %v4854, %v5382
        %v5403 = vmul.f32 %v4855, %v5382
        %v5404 = vmul.f32 %v4856, %v5382
        %v5405 = vmul.f32 %v4857, %v5382
        %v5406 = vmul.f32 %v4858, %v5382
        %v5431 = vrot.slane %v5383, 5
        %v5432 = vrot.slane %v5384, 5
        %v5433 = vsel %vm1475, %v5431, %v5432
        %v5434 = vrot.slane %v5385, 5
        %v5435 = vsel %vm1475, %v5432, %v5434
        %v5436 = vrot.slane %v5386, 5
        %v5437 = vrot.slane %v5387, 5
        %v5438 = vsel %vm1475, %v5436, %v5437
        %v5439 = vrot.slane %v5388, 5
        %v5440 = vsel %vm1475, %v5437, %v5439
        %v5441 = vrot.slane %v5389, 5
        %v5442 = vrot.slane %v5390, 5
        %v5443 = vsel %vm1475, %v5441, %v5442
        %v5444 = vrot.slane %v5391, 5
        %v5445 = vsel %vm1475, %v5442, %v5444
        %v5446 = vrot.slane %v5392, 5
        %v5447 = vrot.slane %v5393, 5
        %v5448 = vsel %vm1475, %v5446, %v5447
        %v5449 = vrot.slane %v5394, 5
        %v5450 = vsel %vm1475, %v5447, %v5449
        %v5451 = vrot.slane %v5395, 5
        %v5452 = vrot.slane %v5396, 5
        %v5453 = vsel %vm1475, %v5451, %v5452
        %v5454 = vrot.slane %v5397, 5
        %v5455 = vsel %vm1475, %v5452, %v5454
        %v5456 = vrot.slane %v5398, 5
        %v5457 = vrot.slane %v5399, 5
        %v5458 = vsel %vm1475, %v5456, %v5457
        %v5459 = vrot.slane %v5400, 5
        %v5460 = vsel %vm1475, %v5457, %v5459
        %v5461 = vrot.slane %v5401, 5
        %v5462 = vrot.slane %v5402, 5
        %v5463 = vsel %vm1475, %v5461, %v5462
        %v5464 = vrot.slane %v5403, 5
        %v5465 = vsel %vm1475, %v5462, %v5464
        %v5466 = vrot.slane %v5404, 5
        %v5467 = vrot.slane %v5405, 5
        %v5468 = vsel %vm1475, %v5466, %v5467
        %v5469 = vrot.slane %v5406, 5
        %v5470 = vsel %vm1475, %v5467, %v5469
        %v5487 = vadd.f32 %v5365, %v5433
        %v5488 = vadd.f32 %v5366, %v5435
        %v5489 = vadd.f32 %v5367, %v5438
        %v5490 = vadd.f32 %v5368, %v5440
        %v5491 = vadd.f32 %v5369, %v5443
        %v5492 = vadd.f32 %v5370, %v5445
        %v5493 = vadd.f32 %v5371, %v5448
        %v5494 = vadd.f32 %v5372, %v5450
        %v5495 = vadd.f32 %v5373, %v5453
        %v5496 = vadd.f32 %v5374, %v5455
        %v5497 = vadd.f32 %v5375, %v5458
        %v5498 = vadd.f32 %v5376, %v5460
        %v5499 = vadd.f32 %v5377, %v5463
        %v5500 = vadd.f32 %v5378, %v5465
        %v5501 = vadd.f32 %v5379, %v5468
        %v5502 = vadd.f32 %v5380, %v5470
        %v5503 = vld [vmem:[%s5 + $0x29] sm:$0x1]
        %v5504 = vperm.slane %v5503, 0
        %v5505 = vmul.f32 %v4835, %v5504
        %v5506 = vmul.f32 %v4836, %v5504
        %v5507 = vmul.f32 %v4837, %v5504
        %v5508 = vmul.f32 %v4838, %v5504
        %v5509 = vmul.f32 %v4839, %v5504
        %v5510 = vmul.f32 %v4840, %v5504
        %v5511 = vmul.f32 %v4841, %v5504
        %v5512 = vmul.f32 %v4842, %v5504
        %v5513 = vmul.f32 %v4843, %v5504
        %v5514 = vmul.f32 %v4844, %v5504
        %v5515 = vmul.f32 %v4845, %v5504
        %v5516 = vmul.f32 %v4846, %v5504
        %v5517 = vmul.f32 %v4847, %v5504
        %v5518 = vmul.f32 %v4848, %v5504
        %v5519 = vmul.f32 %v4849, %v5504
        %v5520 = vmul.f32 %v4850, %v5504
        %v5521 = vmul.f32 %v4851, %v5504
        %v5522 = vmul.f32 %v4852, %v5504
        %v5523 = vmul.f32 %v4853, %v5504
        %v5524 = vmul.f32 %v4854, %v5504
        %v5525 = vmul.f32 %v4855, %v5504
        %v5526 = vmul.f32 %v4856, %v5504
        %v5527 = vmul.f32 %v4857, %v5504
        %v5528 = vmul.f32 %v4858, %v5504
        %v5553 = vrot.slane %v5505, 6
        %v5554 = vrot.slane %v5506, 6
        %v5555 = vsel %vm589, %v5553, %v5554
        %v5556 = vrot.slane %v5507, 6
        %v5557 = vsel %vm589, %v5554, %v5556
        %v5558 = vrot.slane %v5508, 6
        %v5559 = vrot.slane %v5509, 6
        %v5560 = vsel %vm589, %v5558, %v5559
        %v5561 = vrot.slane %v5510, 6
        %v5562 = vsel %vm589, %v5559, %v5561
        %v5563 = vrot.slane %v5511, 6
        %v5564 = vrot.slane %v5512, 6
        %v5565 = vsel %vm589, %v5563, %v5564
        %v5566 = vrot.slane %v5513, 6
        %v5567 = vsel %vm589, %v5564, %v5566
        %v5568 = vrot.slane %v5514, 6
        %v5569 = vrot.slane %v5515, 6
        %v5570 = vsel %vm589, %v5568, %v5569
        %v5571 = vrot.slane %v5516, 6
        %v5572 = vsel %vm589, %v5569, %v5571
        %v5573 = vrot.slane %v5517, 6
        %v5574 = vrot.slane %v5518, 6
        %v5575 = vsel %vm589, %v5573, %v5574
        %v5576 = vrot.slane %v5519, 6
        %v5577 = vsel %vm589, %v5574, %v5576
        %v5578 = vrot.slane %v5520, 6
        %v5579 = vrot.slane %v5521, 6
        %v5580 = vsel %vm589, %v5578, %v5579
        %v5581 = vrot.slane %v5522, 6
        %v5582 = vsel %vm589, %v5579, %v5581
        %v5583 = vrot.slane %v5523, 6
        %v5584 = vrot.slane %v5524, 6
        %v5585 = vsel %vm589, %v5583, %v5584
        %v5586 = vrot.slane %v5525, 6
        %v5587 = vsel %vm589, %v5584, %v5586
        %v5588 = vrot.slane %v5526, 6
        %v5589 = vrot.slane %v5527, 6
        %v5590 = vsel %vm589, %v5588, %v5589
        %v5591 = vrot.slane %v5528, 6
        %v5592 = vsel %vm589, %v5589, %v5591
        %v5609 = vadd.f32 %v5487, %v5555
        %v5610 = vadd.f32 %v5488, %v5557
        %v5611 = vadd.f32 %v5489, %v5560
        %v5612 = vadd.f32 %v5490, %v5562
        %v5613 = vadd.f32 %v5491, %v5565
        %v5614 = vadd.f32 %v5492, %v5567
        %v5615 = vadd.f32 %v5493, %v5570
        %v5616 = vadd.f32 %v5494, %v5572
        %v5617 = vadd.f32 %v5495, %v5575
        %v5618 = vadd.f32 %v5496, %v5577
        %v5619 = vadd.f32 %v5497, %v5580
        %v5620 = vadd.f32 %v5498, %v5582
        %v5621 = vadd.f32 %v5499, %v5585
        %v5622 = vadd.f32 %v5500, %v5587
        %v5623 = vadd.f32 %v5501, %v5590
        %v5624 = vadd.f32 %v5502, %v5592
        %s5625 = scalar_lea.vmem [#allocation2], 144
        %v5626 = vld [vmem:[%s5625] sm:$0xff]
        %v5627 = vld [vmem:[%s5625 + $0x8] sm:$0xff]
        %v5628 = vld [vmem:[%s5625 + $0x10] sm:$0x3f]
        %v5629 = vld [vmem:[%s5625 + $0x18] sm:$0xff]
        %v5630 = vld [vmem:[%s5625 + $0x20] sm:$0xff]
        %v5631 = vld [vmem:[%s5625 + $0x28] sm:$0x3f]
        %v5632 = vld [vmem:[%s5625 + $0x30] sm:$0xff]
        %v5633 = vld [vmem:[%s5625 + $0x38] sm:$0xff]
        %v5634 = vld [vmem:[%s5625 + $0x40] sm:$0x3f]
        %v5635 = vld [vmem:[%s5625 + $0x48] sm:$0xff]
        %v5636 = vld [vmem:[%s5625 + $0x50] sm:$0xff]
        %v5637 = vld [vmem:[%s5625 + $0x58] sm:$0x3f]
        %v5638 = vld [vmem:[%s5625 + $0x60] sm:$0xff]
        %v5639 = vld [vmem:[%s5625 + $0x68] sm:$0xff]
        %v5640 = vld [vmem:[%s5625 + $0x70] sm:$0x3f]
        %v5641 = vld [vmem:[%s5625 + $0x78] sm:$0xff]
        %v5642 = vld [vmem:[%s5625 + $0x80] sm:$0xff]
        %v5643 = vld [vmem:[%s5625 + $0x88] sm:$0x3f]
        %v5644 = vld [vmem:[%s5625 + $0x90] sm:$0xff]
        %v5645 = vld [vmem:[%s5625 + $0x98] sm:$0xff]
        %v5646 = vld [vmem:[%s5625 + $0xa0] sm:$0x3f]
        %v5647 = vld [vmem:[%s5625 + $0xa8] sm:$0xff]
        %v5648 = vld [vmem:[%s5625 + $0xb0] sm:$0xff]
        %v5649 = vld [vmem:[%s5625 + $0xb8] sm:$0x3f]
        %v5650 = vld [vmem:[%s5 + $0x2a] sm:$0x1]
        %v5651 = vperm.slane %v5650, 0
        %v5652 = vmul.f32 %v5626, %v5651
        %v5653 = vmul.f32 %v5627, %v5651
        %v5654 = vmul.f32 %v5629, %v5651
        %v5655 = vmul.f32 %v5630, %v5651
        %v5656 = vmul.f32 %v5632, %v5651
        %v5657 = vmul.f32 %v5633, %v5651
        %v5658 = vmul.f32 %v5635, %v5651
        %v5659 = vmul.f32 %v5636, %v5651
        %v5660 = vmul.f32 %v5638, %v5651
        %v5661 = vmul.f32 %v5639, %v5651
        %v5662 = vmul.f32 %v5641, %v5651
        %v5663 = vmul.f32 %v5642, %v5651
        %v5664 = vmul.f32 %v5644, %v5651
        %v5665 = vmul.f32 %v5645, %v5651
        %v5666 = vmul.f32 %v5647, %v5651
        %v5667 = vmul.f32 %v5648, %v5651
        %v5668 = vadd.f32 %v5609, %v5652
        %v5669 = vadd.f32 %v5610, %v5653
        %v5670 = vadd.f32 %v5611, %v5654
        %v5671 = vadd.f32 %v5612, %v5655
        %v5672 = vadd.f32 %v5613, %v5656
        %v5673 = vadd.f32 %v5614, %v5657
        %v5674 = vadd.f32 %v5615, %v5658
        %v5675 = vadd.f32 %v5616, %v5659
        %v5676 = vadd.f32 %v5617, %v5660
        %v5677 = vadd.f32 %v5618, %v5661
        %v5678 = vadd.f32 %v5619, %v5662
        %v5679 = vadd.f32 %v5620, %v5663
        %v5680 = vadd.f32 %v5621, %v5664
        %v5681 = vadd.f32 %v5622, %v5665
        %v5682 = vadd.f32 %v5623, %v5666
        %v5683 = vadd.f32 %v5624, %v5667
        %v5684 = vld [vmem:[%s5 + $0x2b] sm:$0x1]
        %v5685 = vperm.slane %v5684, 0
        %v5686 = vmul.f32 %v5626, %v5685
        %v5687 = vmul.f32 %v5627, %v5685
        %v5688 = vmul.f32 %v5628, %v5685
        %v5689 = vmul.f32 %v5629, %v5685
        %v5690 = vmul.f32 %v5630, %v5685
        %v5691 = vmul.f32 %v5631, %v5685
        %v5692 = vmul.f32 %v5632, %v5685
        %v5693 = vmul.f32 %v5633, %v5685
        %v5694 = vmul.f32 %v5634, %v5685
        %v5695 = vmul.f32 %v5635, %v5685
        %v5696 = vmul.f32 %v5636, %v5685
        %v5697 = vmul.f32 %v5637, %v5685
        %v5698 = vmul.f32 %v5638, %v5685
        %v5699 = vmul.f32 %v5639, %v5685
        %v5700 = vmul.f32 %v5640, %v5685
        %v5701 = vmul.f32 %v5641, %v5685
        %v5702 = vmul.f32 %v5642, %v5685
        %v5703 = vmul.f32 %v5643, %v5685
        %v5704 = vmul.f32 %v5644, %v5685
        %v5705 = vmul.f32 %v5645, %v5685
        %v5706 = vmul.f32 %v5646, %v5685
        %v5707 = vmul.f32 %v5647, %v5685
        %v5708 = vmul.f32 %v5648, %v5685
        %v5709 = vmul.f32 %v5649, %v5685
        %v5734 = vrot.slane %v5686, 1
        %v5735 = vrot.slane %v5687, 1
        %v5736 = vsel %vm983, %v5734, %v5735
        %v5737 = vrot.slane %v5688, 1
        %v5738 = vsel %vm983, %v5735, %v5737
        %v5739 = vrot.slane %v5689, 1
        %v5740 = vrot.slane %v5690, 1
        %v5741 = vsel %vm983, %v5739, %v5740
        %v5742 = vrot.slane %v5691, 1
        %v5743 = vsel %vm983, %v5740, %v5742
        %v5744 = vrot.slane %v5692, 1
        %v5745 = vrot.slane %v5693, 1
        %v5746 = vsel %vm983, %v5744, %v5745
        %v5747 = vrot.slane %v5694, 1
        %v5748 = vsel %vm983, %v5745, %v5747
        %v5749 = vrot.slane %v5695, 1
        %v5750 = vrot.slane %v5696, 1
        %v5751 = vsel %vm983, %v5749, %v5750
        %v5752 = vrot.slane %v5697, 1
        %v5753 = vsel %vm983, %v5750, %v5752
        %v5754 = vrot.slane %v5698, 1
        %v5755 = vrot.slane %v5699, 1
        %v5756 = vsel %vm983, %v5754, %v5755
        %v5757 = vrot.slane %v5700, 1
        %v5758 = vsel %vm983, %v5755, %v5757
        %v5759 = vrot.slane %v5701, 1
        %v5760 = vrot.slane %v5702, 1
        %v5761 = vsel %vm983, %v5759, %v5760
        %v5762 = vrot.slane %v5703, 1
        %v5763 = vsel %vm983, %v5760, %v5762
        %v5764 = vrot.slane %v5704, 1
        %v5765 = vrot.slane %v5705, 1
        %v5766 = vsel %vm983, %v5764, %v5765
        %v5767 = vrot.slane %v5706, 1
        %v5768 = vsel %vm983, %v5765, %v5767
        %v5769 = vrot.slane %v5707, 1
        %v5770 = vrot.slane %v5708, 1
        %v5771 = vsel %vm983, %v5769, %v5770
        %v5772 = vrot.slane %v5709, 1
        %v5773 = vsel %vm983, %v5770, %v5772
        %v5790 = vadd.f32 %v5668, %v5736
        %v5791 = vadd.f32 %v5669, %v5738
        %v5792 = vadd.f32 %v5670, %v5741
        %v5793 = vadd.f32 %v5671, %v5743
        %v5794 = vadd.f32 %v5672, %v5746
        %v5795 = vadd.f32 %v5673, %v5748
        %v5796 = vadd.f32 %v5674, %v5751
        %v5797 = vadd.f32 %v5675, %v5753
        %v5798 = vadd.f32 %v5676, %v5756
        %v5799 = vadd.f32 %v5677, %v5758
        %v5800 = vadd.f32 %v5678, %v5761
        %v5801 = vadd.f32 %v5679, %v5763
        %v5802 = vadd.f32 %v5680, %v5766
        %v5803 = vadd.f32 %v5681, %v5768
        %v5804 = vadd.f32 %v5682, %v5771
        %v5805 = vadd.f32 %v5683, %v5773
        %v5806 = vld [vmem:[%s5 + $0x2c] sm:$0x1]
        %v5807 = vperm.slane %v5806, 0
        %v5808 = vmul.f32 %v5626, %v5807
        %v5809 = vmul.f32 %v5627, %v5807
        %v5810 = vmul.f32 %v5628, %v5807
        %v5811 = vmul.f32 %v5629, %v5807
        %v5812 = vmul.f32 %v5630, %v5807
        %v5813 = vmul.f32 %v5631, %v5807
        %v5814 = vmul.f32 %v5632, %v5807
        %v5815 = vmul.f32 %v5633, %v5807
        %v5816 = vmul.f32 %v5634, %v5807
        %v5817 = vmul.f32 %v5635, %v5807
        %v5818 = vmul.f32 %v5636, %v5807
        %v5819 = vmul.f32 %v5637, %v5807
        %v5820 = vmul.f32 %v5638, %v5807
        %v5821 = vmul.f32 %v5639, %v5807
        %v5822 = vmul.f32 %v5640, %v5807
        %v5823 = vmul.f32 %v5641, %v5807
        %v5824 = vmul.f32 %v5642, %v5807
        %v5825 = vmul.f32 %v5643, %v5807
        %v5826 = vmul.f32 %v5644, %v5807
        %v5827 = vmul.f32 %v5645, %v5807
        %v5828 = vmul.f32 %v5646, %v5807
        %v5829 = vmul.f32 %v5647, %v5807
        %v5830 = vmul.f32 %v5648, %v5807
        %v5831 = vmul.f32 %v5649, %v5807
        %v5856 = vrot.slane %v5808, 2
        %v5857 = vrot.slane %v5809, 2
        %v5858 = vsel %vm1106, %v5856, %v5857
        %v5859 = vrot.slane %v5810, 2
        %v5860 = vsel %vm1106, %v5857, %v5859
        %v5861 = vrot.slane %v5811, 2
        %v5862 = vrot.slane %v5812, 2
        %v5863 = vsel %vm1106, %v5861, %v5862
        %v5864 = vrot.slane %v5813, 2
        %v5865 = vsel %vm1106, %v5862, %v5864
        %v5866 = vrot.slane %v5814, 2
        %v5867 = vrot.slane %v5815, 2
        %v5868 = vsel %vm1106, %v5866, %v5867
        %v5869 = vrot.slane %v5816, 2
        %v5870 = vsel %vm1106, %v5867, %v5869
        %v5871 = vrot.slane %v5817, 2
        %v5872 = vrot.slane %v5818, 2
        %v5873 = vsel %vm1106, %v5871, %v5872
        %v5874 = vrot.slane %v5819, 2
        %v5875 = vsel %vm1106, %v5872, %v5874
        %v5876 = vrot.slane %v5820, 2
        %v5877 = vrot.slane %v5821, 2
        %v5878 = vsel %vm1106, %v5876, %v5877
        %v5879 = vrot.slane %v5822, 2
        %v5880 = vsel %vm1106, %v5877, %v5879
        %v5881 = vrot.slane %v5823, 2
        %v5882 = vrot.slane %v5824, 2
        %v5883 = vsel %vm1106, %v5881, %v5882
        %v5884 = vrot.slane %v5825, 2
        %v5885 = vsel %vm1106, %v5882, %v5884
        %v5886 = vrot.slane %v5826, 2
        %v5887 = vrot.slane %v5827, 2
        %v5888 = vsel %vm1106, %v5886, %v5887
        %v5889 = vrot.slane %v5828, 2
        %v5890 = vsel %vm1106, %v5887, %v5889
        %v5891 = vrot.slane %v5829, 2
        %v5892 = vrot.slane %v5830, 2
        %v5893 = vsel %vm1106, %v5891, %v5892
        %v5894 = vrot.slane %v5831, 2
        %v5895 = vsel %vm1106, %v5892, %v5894
        %v5912 = vadd.f32 %v5790, %v5858
        %v5913 = vadd.f32 %v5791, %v5860
        %v5914 = vadd.f32 %v5792, %v5863
        %v5915 = vadd.f32 %v5793, %v5865
        %v5916 = vadd.f32 %v5794, %v5868
        %v5917 = vadd.f32 %v5795, %v5870
        %v5918 = vadd.f32 %v5796, %v5873
        %v5919 = vadd.f32 %v5797, %v5875
        %v5920 = vadd.f32 %v5798, %v5878
        %v5921 = vadd.f32 %v5799, %v5880
        %v5922 = vadd.f32 %v5800, %v5883
        %v5923 = vadd.f32 %v5801, %v5885
        %v5924 = vadd.f32 %v5802, %v5888
        %v5925 = vadd.f32 %v5803, %v5890
        %v5926 = vadd.f32 %v5804, %v5893
        %v5927 = vadd.f32 %v5805, %v5895
        %v5928 = vld [vmem:[%s5 + $0x2d] sm:$0x1]
        %v5929 = vperm.slane %v5928, 0
        %v5930 = vmul.f32 %v5626, %v5929
        %v5931 = vmul.f32 %v5627, %v5929
        %v5932 = vmul.f32 %v5628, %v5929
        %v5933 = vmul.f32 %v5629, %v5929
        %v5934 = vmul.f32 %v5630, %v5929
        %v5935 = vmul.f32 %v5631, %v5929
        %v5936 = vmul.f32 %v5632, %v5929
        %v5937 = vmul.f32 %v5633, %v5929
        %v5938 = vmul.f32 %v5634, %v5929
        %v5939 = vmul.f32 %v5635, %v5929
        %v5940 = vmul.f32 %v5636, %v5929
        %v5941 = vmul.f32 %v5637, %v5929
        %v5942 = vmul.f32 %v5638, %v5929
        %v5943 = vmul.f32 %v5639, %v5929
        %v5944 = vmul.f32 %v5640, %v5929
        %v5945 = vmul.f32 %v5641, %v5929
        %v5946 = vmul.f32 %v5642, %v5929
        %v5947 = vmul.f32 %v5643, %v5929
        %v5948 = vmul.f32 %v5644, %v5929
        %v5949 = vmul.f32 %v5645, %v5929
        %v5950 = vmul.f32 %v5646, %v5929
        %v5951 = vmul.f32 %v5647, %v5929
        %v5952 = vmul.f32 %v5648, %v5929
        %v5953 = vmul.f32 %v5649, %v5929
        %v5978 = vrot.slane %v5930, 3
        %v5979 = vrot.slane %v5931, 3
        %v5980 = vsel %vm1229, %v5978, %v5979
        %v5981 = vrot.slane %v5932, 3
        %v5982 = vsel %vm1229, %v5979, %v5981
        %v5983 = vrot.slane %v5933, 3
        %v5984 = vrot.slane %v5934, 3
        %v5985 = vsel %vm1229, %v5983, %v5984
        %v5986 = vrot.slane %v5935, 3
        %v5987 = vsel %vm1229, %v5984, %v5986
        %v5988 = vrot.slane %v5936, 3
        %v5989 = vrot.slane %v5937, 3
        %v5990 = vsel %vm1229, %v5988, %v5989
        %v5991 = vrot.slane %v5938, 3
        %v5992 = vsel %vm1229, %v5989, %v5991
        %v5993 = vrot.slane %v5939, 3
        %v5994 = vrot.slane %v5940, 3
        %v5995 = vsel %vm1229, %v5993, %v5994
        %v5996 = vrot.slane %v5941, 3
        %v5997 = vsel %vm1229, %v5994, %v5996
        %v5998 = vrot.slane %v5942, 3
        %v5999 = vrot.slane %v5943, 3
        %v6000 = vsel %vm1229, %v5998, %v5999
        %v6001 = vrot.slane %v5944, 3
        %v6002 = vsel %vm1229, %v5999, %v6001
        %v6003 = vrot.slane %v5945, 3
        %v6004 = vrot.slane %v5946, 3
        %v6005 = vsel %vm1229, %v6003, %v6004
        %v6006 = vrot.slane %v5947, 3
        %v6007 = vsel %vm1229, %v6004, %v6006
        %v6008 = vrot.slane %v5948, 3
        %v6009 = vrot.slane %v5949, 3
        %v6010 = vsel %vm1229, %v6008, %v6009
        %v6011 = vrot.slane %v5950, 3
        %v6012 = vsel %vm1229, %v6009, %v6011
        %v6013 = vrot.slane %v5951, 3
        %v6014 = vrot.slane %v5952, 3
        %v6015 = vsel %vm1229, %v6013, %v6014
        %v6016 = vrot.slane %v5953, 3
        %v6017 = vsel %vm1229, %v6014, %v6016
        %v6034 = vadd.f32 %v5912, %v5980
        %v6035 = vadd.f32 %v5913, %v5982
        %v6036 = vadd.f32 %v5914, %v5985
        %v6037 = vadd.f32 %v5915, %v5987
        %v6038 = vadd.f32 %v5916, %v5990
        %v6039 = vadd.f32 %v5917, %v5992
        %v6040 = vadd.f32 %v5918, %v5995
        %v6041 = vadd.f32 %v5919, %v5997
        %v6042 = vadd.f32 %v5920, %v6000
        %v6043 = vadd.f32 %v5921, %v6002
        %v6044 = vadd.f32 %v5922, %v6005
        %v6045 = vadd.f32 %v5923, %v6007
        %v6046 = vadd.f32 %v5924, %v6010
        %v6047 = vadd.f32 %v5925, %v6012
        %v6048 = vadd.f32 %v5926, %v6015
        %v6049 = vadd.f32 %v5927, %v6017
        %v6050 = vld [vmem:[%s5 + $0x2e] sm:$0x1]
        %v6051 = vperm.slane %v6050, 0
        %v6052 = vmul.f32 %v5626, %v6051
        %v6053 = vmul.f32 %v5627, %v6051
        %v6054 = vmul.f32 %v5628, %v6051
        %v6055 = vmul.f32 %v5629, %v6051
        %v6056 = vmul.f32 %v5630, %v6051
        %v6057 = vmul.f32 %v5631, %v6051
        %v6058 = vmul.f32 %v5632, %v6051
        %v6059 = vmul.f32 %v5633, %v6051
        %v6060 = vmul.f32 %v5634, %v6051
        %v6061 = vmul.f32 %v5635, %v6051
        %v6062 = vmul.f32 %v5636, %v6051
        %v6063 = vmul.f32 %v5637, %v6051
        %v6064 = vmul.f32 %v5638, %v6051
        %v6065 = vmul.f32 %v5639, %v6051
        %v6066 = vmul.f32 %v5640, %v6051
        %v6067 = vmul.f32 %v5641, %v6051
        %v6068 = vmul.f32 %v5642, %v6051
        %v6069 = vmul.f32 %v5643, %v6051
        %v6070 = vmul.f32 %v5644, %v6051
        %v6071 = vmul.f32 %v5645, %v6051
        %v6072 = vmul.f32 %v5646, %v6051
        %v6073 = vmul.f32 %v5647, %v6051
        %v6074 = vmul.f32 %v5648, %v6051
        %v6075 = vmul.f32 %v5649, %v6051
        %v6100 = vrot.slane %v6052, 4
        %v6101 = vrot.slane %v6053, 4
        %v6102 = vsel %vm1352, %v6100, %v6101
        %v6103 = vrot.slane %v6054, 4
        %v6104 = vsel %vm1352, %v6101, %v6103
        %v6105 = vrot.slane %v6055, 4
        %v6106 = vrot.slane %v6056, 4
        %v6107 = vsel %vm1352, %v6105, %v6106
        %v6108 = vrot.slane %v6057, 4
        %v6109 = vsel %vm1352, %v6106, %v6108
        %v6110 = vrot.slane %v6058, 4
        %v6111 = vrot.slane %v6059, 4
        %v6112 = vsel %vm1352, %v6110, %v6111
        %v6113 = vrot.slane %v6060, 4
        %v6114 = vsel %vm1352, %v6111, %v6113
        %v6115 = vrot.slane %v6061, 4
        %v6116 = vrot.slane %v6062, 4
        %v6117 = vsel %vm1352, %v6115, %v6116
        %v6118 = vrot.slane %v6063, 4
        %v6119 = vsel %vm1352, %v6116, %v6118
        %v6120 = vrot.slane %v6064, 4
        %v6121 = vrot.slane %v6065, 4
        %v6122 = vsel %vm1352, %v6120, %v6121
        %v6123 = vrot.slane %v6066, 4
        %v6124 = vsel %vm1352, %v6121, %v6123
        %v6125 = vrot.slane %v6067, 4
        %v6126 = vrot.slane %v6068, 4
        %v6127 = vsel %vm1352, %v6125, %v6126
        %v6128 = vrot.slane %v6069, 4
        %v6129 = vsel %vm1352, %v6126, %v6128
        %v6130 = vrot.slane %v6070, 4
        %v6131 = vrot.slane %v6071, 4
        %v6132 = vsel %vm1352, %v6130, %v6131
        %v6133 = vrot.slane %v6072, 4
        %v6134 = vsel %vm1352, %v6131, %v6133
        %v6135 = vrot.slane %v6073, 4
        %v6136 = vrot.slane %v6074, 4
        %v6137 = vsel %vm1352, %v6135, %v6136
        %v6138 = vrot.slane %v6075, 4
        %v6139 = vsel %vm1352, %v6136, %v6138
        %v6156 = vadd.f32 %v6034, %v6102
        %v6157 = vadd.f32 %v6035, %v6104
        %v6158 = vadd.f32 %v6036, %v6107
        %v6159 = vadd.f32 %v6037, %v6109
        %v6160 = vadd.f32 %v6038, %v6112
        %v6161 = vadd.f32 %v6039, %v6114
        %v6162 = vadd.f32 %v6040, %v6117
        %v6163 = vadd.f32 %v6041, %v6119
        %v6164 = vadd.f32 %v6042, %v6122
        %v6165 = vadd.f32 %v6043, %v6124
        %v6166 = vadd.f32 %v6044, %v6127
        %v6167 = vadd.f32 %v6045, %v6129
        %v6168 = vadd.f32 %v6046, %v6132
        %v6169 = vadd.f32 %v6047, %v6134
        %v6170 = vadd.f32 %v6048, %v6137
        %v6171 = vadd.f32 %v6049, %v6139
        %v6172 = vld [vmem:[%s5 + $0x2f] sm:$0x1]
        %v6173 = vperm.slane %v6172, 0
        %v6174 = vmul.f32 %v5626, %v6173
        %v6175 = vmul.f32 %v5627, %v6173
        %v6176 = vmul.f32 %v5628, %v6173
        %v6177 = vmul.f32 %v5629, %v6173
        %v6178 = vmul.f32 %v5630, %v6173
        %v6179 = vmul.f32 %v5631, %v6173
        %v6180 = vmul.f32 %v5632, %v6173
        %v6181 = vmul.f32 %v5633, %v6173
        %v6182 = vmul.f32 %v5634, %v6173
        %v6183 = vmul.f32 %v5635, %v6173
        %v6184 = vmul.f32 %v5636, %v6173
        %v6185 = vmul.f32 %v5637, %v6173
        %v6186 = vmul.f32 %v5638, %v6173
        %v6187 = vmul.f32 %v5639, %v6173
        %v6188 = vmul.f32 %v5640, %v6173
        %v6189 = vmul.f32 %v5641, %v6173
        %v6190 = vmul.f32 %v5642, %v6173
        %v6191 = vmul.f32 %v5643, %v6173
        %v6192 = vmul.f32 %v5644, %v6173
        %v6193 = vmul.f32 %v5645, %v6173
        %v6194 = vmul.f32 %v5646, %v6173
        %v6195 = vmul.f32 %v5647, %v6173
        %v6196 = vmul.f32 %v5648, %v6173
        %v6197 = vmul.f32 %v5649, %v6173
        %v6222 = vrot.slane %v6174, 5
        %v6223 = vrot.slane %v6175, 5
        %v6224 = vsel %vm1475, %v6222, %v6223
        %v6225 = vrot.slane %v6176, 5
        %v6226 = vsel %vm1475, %v6223, %v6225
        %v6227 = vrot.slane %v6177, 5
        %v6228 = vrot.slane %v6178, 5
        %v6229 = vsel %vm1475, %v6227, %v6228
        %v6230 = vrot.slane %v6179, 5
        %v6231 = vsel %vm1475, %v6228, %v6230
        %v6232 = vrot.slane %v6180, 5
        %v6233 = vrot.slane %v6181, 5
        %v6234 = vsel %vm1475, %v6232, %v6233
        %v6235 = vrot.slane %v6182, 5
        %v6236 = vsel %vm1475, %v6233, %v6235
        %v6237 = vrot.slane %v6183, 5
        %v6238 = vrot.slane %v6184, 5
        %v6239 = vsel %vm1475, %v6237, %v6238
        %v6240 = vrot.slane %v6185, 5
        %v6241 = vsel %vm1475, %v6238, %v6240
        %v6242 = vrot.slane %v6186, 5
        %v6243 = vrot.slane %v6187, 5
        %v6244 = vsel %vm1475, %v6242, %v6243
        %v6245 = vrot.slane %v6188, 5
        %v6246 = vsel %vm1475, %v6243, %v6245
        %v6247 = vrot.slane %v6189, 5
        %v6248 = vrot.slane %v6190, 5
        %v6249 = vsel %vm1475, %v6247, %v6248
        %v6250 = vrot.slane %v6191, 5
        %v6251 = vsel %vm1475, %v6248, %v6250
        %v6252 = vrot.slane %v6192, 5
        %v6253 = vrot.slane %v6193, 5
        %v6254 = vsel %vm1475, %v6252, %v6253
        %v6255 = vrot.slane %v6194, 5
        %v6256 = vsel %vm1475, %v6253, %v6255
        %v6257 = vrot.slane %v6195, 5
        %v6258 = vrot.slane %v6196, 5
        %v6259 = vsel %vm1475, %v6257, %v6258
        %v6260 = vrot.slane %v6197, 5
        %v6261 = vsel %vm1475, %v6258, %v6260
        %v6278 = vadd.f32 %v6156, %v6224
        %v6279 = vadd.f32 %v6157, %v6226
        %v6280 = vadd.f32 %v6158, %v6229
        %v6281 = vadd.f32 %v6159, %v6231
        %v6282 = vadd.f32 %v6160, %v6234
        %v6283 = vadd.f32 %v6161, %v6236
        %v6284 = vadd.f32 %v6162, %v6239
        %v6285 = vadd.f32 %v6163, %v6241
        %v6286 = vadd.f32 %v6164, %v6244
        %v6287 = vadd.f32 %v6165, %v6246
        %v6288 = vadd.f32 %v6166, %v6249
        %v6289 = vadd.f32 %v6167, %v6251
        %v6290 = vadd.f32 %v6168, %v6254
        %v6291 = vadd.f32 %v6169, %v6256
        %v6292 = vadd.f32 %v6170, %v6259
        %v6293 = vadd.f32 %v6171, %v6261
        %v6294 = vld [vmem:[%s5 + $0x30] sm:$0x1]
        %v6295 = vperm.slane %v6294, 0
        %v6296 = vmul.f32 %v5626, %v6295
        %v6297 = vmul.f32 %v5627, %v6295
        %v6298 = vmul.f32 %v5628, %v6295
        %v6299 = vmul.f32 %v5629, %v6295
        %v6300 = vmul.f32 %v5630, %v6295
        %v6301 = vmul.f32 %v5631, %v6295
        %v6302 = vmul.f32 %v5632, %v6295
        %v6303 = vmul.f32 %v5633, %v6295
        %v6304 = vmul.f32 %v5634, %v6295
        %v6305 = vmul.f32 %v5635, %v6295
        %v6306 = vmul.f32 %v5636, %v6295
        %v6307 = vmul.f32 %v5637, %v6295
        %v6308 = vmul.f32 %v5638, %v6295
        %v6309 = vmul.f32 %v5639, %v6295
        %v6310 = vmul.f32 %v5640, %v6295
        %v6311 = vmul.f32 %v5641, %v6295
        %v6312 = vmul.f32 %v5642, %v6295
        %v6313 = vmul.f32 %v5643, %v6295
        %v6314 = vmul.f32 %v5644, %v6295
        %v6315 = vmul.f32 %v5645, %v6295
        %v6316 = vmul.f32 %v5646, %v6295
        %v6317 = vmul.f32 %v5647, %v6295
        %v6318 = vmul.f32 %v5648, %v6295
        %v6319 = vmul.f32 %v5649, %v6295
        %v6344 = vrot.slane %v6296, 6
        %v6345 = vrot.slane %v6297, 6
        %v6346 = vsel %vm589, %v6344, %v6345
        %v6347 = vrot.slane %v6298, 6
        %v6348 = vsel %vm589, %v6345, %v6347
        %v6349 = vrot.slane %v6299, 6
        %v6350 = vrot.slane %v6300, 6
        %v6351 = vsel %vm589, %v6349, %v6350
        %v6352 = vrot.slane %v6301, 6
        %v6353 = vsel %vm589, %v6350, %v6352
        %v6354 = vrot.slane %v6302, 6
        %v6355 = vrot.slane %v6303, 6
        %v6356 = vsel %vm589, %v6354, %v6355
        %v6357 = vrot.slane %v6304, 6
        %v6358 = vsel %vm589, %v6355, %v6357
        %v6359 = vrot.slane %v6305, 6
        %v6360 = vrot.slane %v6306, 6
        %v6361 = vsel %vm589, %v6359, %v6360
        %v6362 = vrot.slane %v6307, 6
        %v6363 = vsel %vm589, %v6360, %v6362
        %v6364 = vrot.slane %v6308, 6
        %v6365 = vrot.slane %v6309, 6
        %v6366 = vsel %vm589, %v6364, %v6365
        %v6367 = vrot.slane %v6310, 6
        %v6368 = vsel %vm589, %v6365, %v6367
        %v6369 = vrot.slane %v6311, 6
        %v6370 = vrot.slane %v6312, 6
        %v6371 = vsel %vm589, %v6369, %v6370
        %v6372 = vrot.slane %v6313, 6
        %v6373 = vsel %vm589, %v6370, %v6372
        %v6374 = vrot.slane %v6314, 6
        %v6375 = vrot.slane %v6315, 6
        %v6376 = vsel %vm589, %v6374, %v6375
        %v6377 = vrot.slane %v6316, 6
        %v6378 = vsel %vm589, %v6375, %v6377
        %v6379 = vrot.slane %v6317, 6
        %v6380 = vrot.slane %v6318, 6
        %v6381 = vsel %vm589, %v6379, %v6380
        %v6382 = vrot.slane %v6319, 6
        %v6383 = vsel %vm589, %v6380, %v6382
        %v6400 = vadd.f32 %v6278, %v6346
        %v6401 = vadd.f32 %v6279, %v6348
        %v6402 = vadd.f32 %v6280, %v6351
        %v6403 = vadd.f32 %v6281, %v6353
        %v6404 = vadd.f32 %v6282, %v6356
        %v6405 = vadd.f32 %v6283, %v6358
        %v6406 = vadd.f32 %v6284, %v6361
        %v6407 = vadd.f32 %v6285, %v6363
        %v6408 = vadd.f32 %v6286, %v6366
        %v6409 = vadd.f32 %v6287, %v6368
        %v6410 = vadd.f32 %v6288, %v6371
        %v6411 = vadd.f32 %v6289, %v6373
        %v6412 = vadd.f32 %v6290, %v6376
        %v6413 = vadd.f32 %v6291, %v6378
        %v6414 = vadd.f32 %v6292, %v6381
        %v6415 = vadd.f32 %v6293, %v6383
        %v6416 = vpack.c.bf16 %v6401, %v6400
        %v6417 = vpack.c.bf16 %v6403, %v6402
        %v6418 = vpack.c.bf16 %v6405, %v6404
        %v6419 = vpack.c.bf16 %v6407, %v6406
        %v6420 = vpack.c.bf16 %v6409, %v6408
        %v6421 = vpack.c.bf16 %v6411, %v6410
        %v6422 = vpack.c.bf16 %v6413, %v6412
        %v6423 = vpack.c.bf16 %v6415, %v6414
        %v6424 = vld [vmem:[%s6] sm:$0xf]
        %v6426 = vsel %vm817, %v6416, 0
        %v6429 = vsel %vm817, %v6417, 0
        %v6432 = vsel %vm817, %v6418, 0
        %v6435 = vsel %vm817, %v6419, 0
        %v6438 = vsel %vm817, %v6420, 0
        %v6441 = vsel %vm817, %v6421, 0
        %v6444 = vsel %vm817, %v6422, 0
        %v6447 = vsel %vm817, %v6423, 0
        %v6450 = vsel %vm1352, %v6424, 0
        %6452 = vmatpush.bf16.msra.mxu0 0
        %6453 = vmatpush.bf16.msra.mxu0 0
        %6454 = vmatpush.bf16.msra.mxu0 0
        %6455 = vmatpush.bf16.msra.mxu0 0
        %6456 = vmatpush.bf16.msra.mxu0 0
        %6457 = vmatpush.bf16.msra.mxu0 0
        %6458 = vmatpush.bf16.msra.mxu0 0
        %6459 = vmatpush.bf16.msra.mxu0 %v6450
        %6460 = vmatmul.bf16.gmra.mxu0 %v6426
        %v6461 = vpop.f32.mrf.mxu0
        %v6462 = vadd.f32 0.0, %v6461
        %v6463 = vpop.f32.mrf.mxu0
        %v6464 = vadd.f32 0.0, %v6463
        %6465 = vmatmul.bf16.gmra.mxu0 %v6429
        %v6466 = vpop.f32.mrf.mxu0
        %v6467 = vadd.f32 0.0, %v6466
        %v6468 = vpop.f32.mrf.mxu0
        %v6469 = vadd.f32 0.0, %v6468
        %6470 = vmatmul.bf16.gmra.mxu0 %v6432
        %v6471 = vpop.f32.mrf.mxu0
        %v6472 = vadd.f32 0.0, %v6471
        %v6473 = vpop.f32.mrf.mxu0
        %v6474 = vadd.f32 0.0, %v6473
        %6475 = vmatmul.bf16.gmra.mxu0 %v6435
        %v6476 = vpop.f32.mrf.mxu0
        %v6477 = vadd.f32 0.0, %v6476
        %v6478 = vpop.f32.mrf.mxu0
        %v6479 = vadd.f32 0.0, %v6478
        %6480 = vmatmul.bf16.gmra.mxu0 %v6438
        %v6481 = vpop.f32.mrf.mxu0
        %v6482 = vadd.f32 0.0, %v6481
        %v6483 = vpop.f32.mrf.mxu0
        %v6484 = vadd.f32 0.0, %v6483
        %6485 = vmatmul.bf16.gmra.mxu0 %v6441
        %v6486 = vpop.f32.mrf.mxu0
        %v6487 = vadd.f32 0.0, %v6486
        %v6488 = vpop.f32.mrf.mxu0
        %v6489 = vadd.f32 0.0, %v6488
        %6490 = vmatmul.bf16.gmra.mxu0 %v6444
        %v6491 = vpop.f32.mrf.mxu0
        %v6492 = vadd.f32 0.0, %v6491
        %v6493 = vpop.f32.mrf.mxu0
        %v6494 = vadd.f32 0.0, %v6493
        %6495 = vmatmul.bf16.gmra.mxu0 %v6447
        %v6496 = vpop.f32.mrf.mxu0
        %v6497 = vadd.f32 0.0, %v6496
        %v6498 = vpop.f32.mrf.mxu0
        %v6499 = vadd.f32 0.0, %v6498
        %6500 = vdwg.mxu0
        %6501 = vst.msk [vmem:[%s444] sm:$0xff] %vm546, %v6462
        %6502 = vst.msk [vmem:[%s444 + $0x8] sm:$0xff] %vm546, %v6464
        %6503 = vst.msk [vmem:[%s444 + $0x10] sm:$0xff] %vm546, %v6467
        %6504 = vst.msk [vmem:[%s444 + $0x18] sm:$0xff] %vm546, %v6469
        %6505 = vst.msk [vmem:[%s444 + $0x20] sm:$0xff] %vm546, %v6472
        %6506 = vst.msk [vmem:[%s444 + $0x28] sm:$0xff] %vm546, %v6474
        %6507 = vst.msk [vmem:[%s444 + $0x30] sm:$0xff] %vm546, %v6477
        %6508 = vst.msk [vmem:[%s444 + $0x38] sm:$0xff] %vm546, %v6479
        %6509 = vst.msk [vmem:[%s444 + $0x40] sm:$0xff] %vm546, %v6482
        %6510 = vst.msk [vmem:[%s444 + $0x48] sm:$0xff] %vm546, %v6484
        %6511 = vst.msk [vmem:[%s444 + $0x50] sm:$0xff] %vm546, %v6487
        %6512 = vst.msk [vmem:[%s444 + $0x58] sm:$0xff] %vm546, %v6489
        %6513 = vst.msk [vmem:[%s444 + $0x60] sm:$0xff] %vm546, %v6492
        %6514 = vst.msk [vmem:[%s444 + $0x68] sm:$0xff] %vm546, %v6494
        %6515 = vst.msk [vmem:[%s444 + $0x70] sm:$0xff] %vm546, %v6497
        %6516 = vst.msk [vmem:[%s444 + $0x78] sm:$0xff] %vm546, %v6499
        %s6517 = smul.u32 16, %s24
        %p6518 = scmp.lt.s32.totalorder %s23, 1
        %s6519 = scalar_select %p6518, %s23, 1
        %p6520 = scmp.lt.s32.totalorder %s6517, 31
        %s6521 = scalar_select %p6520, %s6517, 31
        %s6522 = smul.addr %s6519, 32
        %s6523 = sadd.s32 %s6521, %s6522
        %s6524 = smul.addr %s6523, 8
        %s6525 = scalar_lea.vmem %s7, %s6524
        // Predicated region
        $region61: #{tpu_custom_call.1} parent=47 // pred_check
          %p6526 = pneg %p231
        $region62: #{tpu_custom_call.1} parent=47 // pred_check_branch
          %6528 = sbr.rel (%p6526) target = $region64
        $region63: #{tpu_custom_call.1} parent=47 // pred_region
          %s6529 = smul.u32 16, %s24
        $region64: #{tpu_custom_call.1} parent=47 // pred_fallthru
          _
      $region48: #{tpu_custom_call.1} parent=5 // pred_fallthru
        _
      %p6530 = scmp.le.s32.totalorder 2, %s14
      // Predicated region
      $region65: #{tpu_custom_call.1} parent=5 // pred_check
        %p6531 = pneg %p6530
      $region66: #{tpu_custom_call.1} parent=5 // pred_check_branch
        %6533 = sbr.rel (%p6531) target = $region68
      $region67: #{tpu_custom_call.1} parent=5 // pred_region
        %s6534 = ssub.s32 %s14, 2
        // Predicated region
        $region69: #{tpu_custom_call.1} parent=67 // pred_check
          %p6535 = pneg %p237
        $region70: #{tpu_custom_call.1} parent=67 // pred_check_branch
          %6537 = sbr.rel (%p6535) target = $region72
        $region71: #{tpu_custom_call.1} parent=67 // pred_region
          %s6538 = smul.u32 16, %s26
          %p6539 = scmp.lt.s32.totalorder %s25, 1
          %s6540 = scalar_select %p6539, %s25, 1
          %p6541 = scmp.lt.s32.totalorder %s6538, 31
          %s6542 = scalar_select %p6541, %s6538, 31
          %s6543 = smul.addr %s6540, 32
          %s6544 = sadd.s32 %s6542, %s6543
          %s6545 = smul.addr %s6544, 8
          %s6546 = scalar_lea.vmem %s7, %s6545
        $region72: #{tpu_custom_call.1} parent=67 // pred_fallthru
          _
      $region68: #{tpu_custom_call.1} parent=5 // pred_fallthru
        _
    $region6: #{tpu_custom_call.1} parent=1 // loop_footer
      %s18 = sadd.s32 1, %s14
    $region7: #{tpu_custom_call.1} parent=1 // loop_footer_branch
      %13 = sbr.rel target = $region3
    $region8: #{tpu_custom_call.1} parent=1 // loop_exit
      _
    %6547 = vsyncpa [#allocation4], 1
    %s6548 = scalar_lea.sflag [#allocation4], 1
    %6549 = vsyncpa %s6548, 1

</llo_original>
